<compile_context>
chip_gen: v7x
topology: tpu7x:2x2x1
jax: 0.10.0
libtpu: 0.0.40
codegen_flags: <defaults>
</compile_context>

<pallas_src>
import functools

import jax
import jax.numpy as jnp
from jax.experimental import pallas as pl
from jax.experimental.pallas import tpu as pltpu

EPS = 1e-5
# Well above this kernel's per-tile budget; re-derive if tiles grow
# (v7x physical VMEM is 64 MiB, scoped default 32 MiB; v5e default 16 MiB).
_VMEM_LIMIT_BYTES = 48 * 1024 * 1024


def _compiler_params():
    return pltpu.CompilerParams(
        dimension_semantics=("parallel",),
        vmem_limit_bytes=_VMEM_LIMIT_BYTES,
    )


def _zero_border(pad_ref):
    """Zero only the 1-pixel halo of a (H+2, W+2, C) VMEM scratch.

    Done every grid step (cost O(H+W), not O(H*W)) and without a first-step
    guard so it is correct even when the "parallel" batch axis is sharded
    across TensorCores (each core owns its own scratch)."""
    Hp, Wp, C = pad_ref.shape
    dt = pad_ref.dtype
    pad_ref[0:1, :, :] = jnp.zeros((1, Wp, C), dt)
    pad_ref[Hp - 1:Hp, :, :] = jnp.zeros((1, Wp, C), dt)
    pad_ref[:, 0:1, :] = jnp.zeros((Hp, 1, C), dt)
    pad_ref[:, Wp - 1:Wp, :] = jnp.zeros((Hp, 1, C), dt)


def _im2col_3x3(pad_ref, pat_ref, H, W, C):
    """Write the 9 shifted 3x3 taps of a padded (H+2, W+2, C) tile into a
    (H*W, 9*C) patch matrix so the conv becomes a single MXU contraction."""
    k = 0
    for kh in range(3):
        for kw in range(3):
            pat_ref[:, k * C:(k + 1) * C] = (
                pad_ref[kh:kh + H, kw:kw + W, :].reshape(H * W, C))
            k += 1


def _sum_and_sumsq(y):
    return (jnp.sum(y, axis=0, keepdims=True),
            jnp.sum(y * y, axis=0, keepdims=True))


# ---------------------------------------------------------------------------
# stage 1: conv1 (3x3) + projection shortcut conv (1x1) + BN stat partials
# ---------------------------------------------------------------------------
def _stage1_kernel(proj, x_ref, w1_ref, *rest):
    if proj:
        ws_ref, y1_ref, ys_ref, st_ref, xpad, pat = rest
    else:
        ws_ref = ys_ref = None
        y1_ref, st_ref, xpad, pat = rest

    _, H, W, Cin = x_ref.shape
    Cout = w1_ref.shape[1]

    x = x_ref[0]                                   # (H, W, Cin), compute dtype
    _zero_border(xpad)
    xpad[1:H + 1, 1:W + 1, :] = x

    # conv1: single (H*W, 9*Cin) @ (9*Cin, Cout) matmul, f32 accumulation.
    _im2col_3x3(xpad, pat, H, W, Cin)
    y1 = jnp.dot(pat[...], w1_ref[...], preferred_element_type=jnp.float32)
    s1, q1 = _sum_and_sumsq(y1)                    # per-channel partial BN stats
    y1_ref[...] = y1.reshape(1, H, W, Cout).astype(y1_ref.dtype)
    st_ref[:, 0:1, :] = s1[None]
    st_ref[:, 1:2, :] = q1[None]

    if proj:
        # projection shortcut: 1x1 conv.
        ys = jnp.dot(x.reshape(H * W, Cin), ws_ref[...],
                     preferred_element_type=jnp.float32)
        ss, qs = _sum_and_sumsq(ys)
        ys_ref[...] = ys.reshape(1, H, W, Cout).astype(ys_ref.dtype)
        st_ref[:, 2:3, :] = ss[None]
        st_ref[:, 3:4, :] = qs[None]


# ---------------------------------------------------------------------------
# stage 2: folded bn1 (scale/shift) + relu, conv2 (3x3), bn2 stat partials
# ---------------------------------------------------------------------------
def _stage2_kernel(y1_ref, a1_ref, c1_ref, w2_ref, y2_ref, st_ref, mpad, pat):
    _, H, W, Cout = y1_ref.shape

    # bn1 folded to per-channel scale/shift -> one FMA pass, then relu (f32).
    z = y1_ref[0].astype(jnp.float32) * a1_ref[...] + c1_ref[...]
    z = jnp.maximum(z, 0.0)

    _zero_border(mpad)
    mpad[1:H + 1, 1:W + 1, :] = z.astype(mpad.dtype)

    _im2col_3x3(mpad, pat, H, W, Cout)
    y2 = jnp.dot(pat[...], w2_ref[...], preferred_element_type=jnp.float32)
    s2, q2 = _sum_and_sumsq(y2)
    y2_ref[...] = y2.reshape(1, H, W, Cout).astype(y2_ref.dtype)
    st_ref[:, 0:1, :] = s2[None]
    st_ref[:, 1:2, :] = q2[None]


# ---------------------------------------------------------------------------
# stage 3: fused bn2 + bn_shortcut + residual add + relu (lane-dense layout)
# ---------------------------------------------------------------------------
def _epilogue_kernel(y2_ref, ys_ref, a2_ref, as_ref, c_ref, out_ref):
    z = (y2_ref[0].astype(jnp.float32) * a2_ref[...]
         + ys_ref[0].astype(jnp.float32) * as_ref[...]
         + c_ref[...])
    out_ref[...] = jnp.maximum(z, 0.0)[None].astype(out_ref.dtype)


def _fold_bn(sum_, sumsq, count, gamma, beta):
    mean = sum_ / count
    var = sumsq / count - mean * mean          # biased variance, f32 accum
    scale = gamma * jax.lax.rsqrt(var + EPS)
    shift = beta - mean * scale
    return scale, shift


def basic_block_pallas(x_nchw, params, *, stride=1, compute_dtype=jnp.bfloat16):
    """BasicBlock forward (training-mode BatchNorm). x_nchw: (N, Cin, H, W)."""
    if stride != 1:
        # TODO(synk): stride>1 variant (strided im2col + downsampled shortcut).
        raise NotImplementedError("stride != 1 not implemented")

    N, Cin, H, W = x_nchw.shape
    Cout = params["w1"].shape[0]
    proj = (Cin != Cout) or (stride != 1)
    cd = compute_dtype
    f32 = jnp.float32
    cparams = _compiler_params()

    # ---- layout plumbing (plain JAX, outside the hot kernels) ----
    x_nhwc = jnp.transpose(x_nchw, (0, 2, 3, 1)).astype(cd)          # (N,H,W,Cin)
    w1 = jnp.transpose(params["w1"], (2, 3, 1, 0)).reshape(9 * Cin, Cout).astype(cd)
    w2 = jnp.transpose(params["w2"], (2, 3, 1, 0)).reshape(9 * Cout, Cout).astype(cd)

    n_stat1 = 4 if proj else 2

    # ------------------------- stage 1 -------------------------
    s1_in_specs = [
        pl.BlockSpec((1, H, W, Cin), lambda n: (n, 0, 0, 0)),
        pl.BlockSpec((9 * Cin, Cout), lambda n: (0, 0)),
    ]
    s1_inputs = [x_nhwc, w1]
    s1_out_specs = [pl.BlockSpec((1, H, W, Cout), lambda n: (n, 0, 0, 0))]
    s1_out_shapes = [jax.ShapeDtypeStruct((N, H, W, Cout), cd)]
    if proj:
        ws = jnp.transpose(params["ws"][:, :, 0, 0], (1, 0)).astype(cd)  # (Cin,Cout)
        s1_in_specs.append(pl.BlockSpec((Cin, Cout), lambda n: (0, 0)))
        s1_inputs.append(ws)
        s1_out_specs.append(pl.BlockSpec((1, H, W, Cout), lambda n: (n, 0, 0, 0)))
        s1_out_shapes.append(jax.ShapeDtypeStruct((N, H, W, Cout), cd))
    s1_out_specs.append(pl.BlockSpec((1, n_stat1, Cout), lambda n: (n, 0, 0)))
    s1_out_shapes.append(jax.ShapeDtypeStruct((N, n_stat1, Cout), f32))

    res1 = pl.pallas_call(
        functools.partial(_stage1_kernel, proj),
        out_shape=tuple(s1_out_shapes),
        grid_spec=pltpu.PrefetchScalarGridSpec(
            num_scalar_prefetch=0, grid=(N,),
            in_specs=s1_in_specs, out_specs=s1_out_specs,
            scratch_shapes=[pltpu.VMEM((H + 2, W + 2, Cin), cd),
                            pltpu.VMEM((H * W, 9 * Cin), cd)]),
        compiler_params=cparams,
    )(*s1_inputs)
    if proj:
        y1_raw, ys_raw, st1 = res1
    else:
        y1_raw, st1 = res1
        ys_raw = None

    # per-channel BN stats: reduce the per-image partials (tiny) in plain JAX.
    st1 = jnp.sum(st1, axis=0)
    count = jnp.float32(N * H * W)
    sc1, sh1 = _fold_bn(st1[0], st1[1], count, params["g1"], params["b1"])
    if proj:
        scs, shs = _fold_bn(st1[2], st1[3], count, params["gs"], params["bs"])
    else:
        scs = jnp.ones((Cout,), f32)
        shs = jnp.zeros((Cout,), f32)

    # ------------------------- stage 2 -------------------------
    y2_raw, st2 = pl.pallas_call(
        _stage2_kernel,
        out_shape=(jax.ShapeDtypeStruct((N, H, W, Cout), cd),
                   jax.ShapeDtypeStruct((N, 2, Cout), f32)),
        grid_spec=pltpu.PrefetchScalarGridSpec(
            num_scalar_prefetch=0, grid=(N,),
            in_specs=[pl.BlockSpec((1, H, W, Cout), lambda n: (n, 0, 0, 0)),
                      pl.BlockSpec((1, 1, Cout), lambda n: (0, 0, 0)),
                      pl.BlockSpec((1, 1, Cout), lambda n: (0, 0, 0)),
                      pl.BlockSpec((9 * Cout, Cout), lambda n: (0, 0))],
            out_specs=[pl.BlockSpec((1, H, W, Cout), lambda n: (n, 0, 0, 0)),
                       pl.BlockSpec((1, 2, Cout), lambda n: (n, 0, 0))],
            scratch_shapes=[pltpu.VMEM((H + 2, W + 2, Cout), cd),
                            pltpu.VMEM((H * W, 9 * Cout), cd)]),
        compiler_params=cparams,
    )(y1_raw, sc1.reshape(1, 1, Cout), sh1.reshape(1, 1, Cout), w2)

    st2 = jnp.sum(st2, axis=0)
    sc2, sh2 = _fold_bn(st2[0], st2[1], count, params["g2"], params["b2"])

    # ------------------------- stage 3 -------------------------
    WC = W * Cout
    y2_d = y2_raw.reshape(N, H, WC)                       # free HBM-level reshape
    ys_d = ys_raw.reshape(N, H, WC) if proj else x_nhwc.reshape(N, H, WC)
    a2 = jnp.tile(sc2, W).reshape(1, WC)                  # channel-minor tiling
    a_s = jnp.tile(scs, W).reshape(1, WC)
    c_sum = jnp.tile(sh2 + shs, W).reshape(1, WC)

    out_d = pl.pallas_call(
        _epilogue_kernel,
        out_shape=jax.ShapeDtypeStruct((N, H, WC), x_nchw.dtype),
        grid_spec=pltpu.PrefetchScalarGridSpec(
            num_scalar_prefetch=0, grid=(N,),
            in_specs=[pl.BlockSpec((1, H, WC), lambda n: (n, 0, 0)),
                      pl.BlockSpec((1, H, WC), lambda n: (n, 0, 0)),
                      pl.BlockSpec((1, WC), lambda n: (0, 0)),
                      pl.BlockSpec((1, WC), lambda n: (0, 0)),
                      pl.BlockSpec((1, WC), lambda n: (0, 0))],
            out_specs=pl.BlockSpec((1, H, WC), lambda n: (n, 0, 0))),
        compiler_params=cparams,
    )(y2_d, ys_d, a2, a_s, c_sum)

    return jnp.transpose(out_d.reshape(N, H, W, Cout), (0, 3, 1, 2))


# ---------------------------------------------------------------------------
# pure-JAX f32 reference (NCHW), mirrors the PyTorch forward in train mode
# ---------------------------------------------------------------------------
def basic_block_reference(x, p):
    def conv(x, w, stride, pad):
        return jax.lax.conv_general_dilated(
            x, w, (stride, stride), [(pad, pad), (pad, pad)],
            dimension_numbers=("NCHW", "OIHW", "NCHW"))

    def bn(y, g, b):
        mean = jnp.mean(y, axis=(0, 2, 3), keepdims=True)
        var = jnp.mean((y - mean) ** 2, axis=(0, 2, 3), keepdims=True)
        return ((y - mean) / jnp.sqrt(var + EPS)) * g.reshape(1, -1, 1, 1) \
               + b.reshape(1, -1, 1, 1)

    out = jax.nn.relu(bn(conv(x, p["w1"], 1, 1), p["g1"], p["b1"]))
    out = bn(conv(out, p["w2"], 1, 1), p["g2"], p["b2"])
    if "ws" in p:
        out = out + bn(conv(x, p["ws"], 1, 0), p["gs"], p["bs"])
    else:
        out = out + x
    return jax.nn.relu(out)


def _make_params(key, Cin, Cout, proj):
    k = jax.random.split(key, 10)
    p = {
        "w1": jax.random.normal(k[0], (Cout, Cin, 3, 3), jnp.float32) * 0.2,
        "w2": jax.random.normal(k[1], (Cout, Cout, 3, 3), jnp.float32) * 0.2,
        "g1": 1.0 + 0.1 * jax.random.normal(k[3], (Cout,), jnp.float32),
        "b1": 0.1 * jax.random.normal(k[4], (Cout,), jnp.float32),
        "g2": 1.0 + 0.1 * jax.random.normal(k[5], (Cout,), jnp.float32),
        "b2": 0.1 * jax.random.normal(k[6], (Cout,), jnp.float32),
    }
    if proj:
        p["ws"] = jax.random.normal(k[2], (Cout, Cin, 1, 1), jnp.float32) * 0.2
        p["gs"] = 1.0 + 0.1 * jax.random.normal(k[7], (Cout,), jnp.float32)
        p["bs"] = 0.1 * jax.random.normal(k[8], (Cout,), jnp.float32)
    return p, k[9]


if __name__ == "__main__":
    key_proj, key_id = jax.random.split(jax.random.PRNGKey(0))

    # --- case 1: projection shortcut (Cin != Cout), stride = 1 ---
    N, Cin, Cout, H, W = 2, 4, 8, 16, 16
    params, kx = _make_params(key_proj, Cin, Cout, proj=True)
    x = jax.random.normal(kx, (N, Cin, H, W), jnp.float32)
    ref = basic_block_reference(x, params)

    out_f32 = jax.block_until_ready(
        basic_block_pallas(x, params, compute_dtype=jnp.float32))
    assert out_f32.shape == (N, Cout, H, W)
    err = jnp.max(jnp.abs(out_f32 - ref))
    assert jnp.allclose(out_f32, ref, atol=2e-3, rtol=2e-3), \
        f"f32 max abs err {err}"

    out_bf16 = jax.block_until_ready(
        basic_block_pallas(x, params, compute_dtype=jnp.bfloat16))
    err_bf = jnp.max(jnp.abs(out_bf16 - ref))
    assert jnp.allclose(out_bf16, ref, atol=5e-2, rtol=5e-2), \
        f"bf16 max abs err {err_bf}"

    # --- case 2: identity shortcut (Cin == Cout), stride = 1 ---
    N2, C2 = 2, 8
    params_id, kx2 = _make_params(key_id, C2, C2, proj=False)
    x2 = jax.random.normal(kx2, (N2, C2, H, W), jnp.float32)
    ref_id = basic_block_reference(x2, params_id)
    out_id = jax.block_until_ready(
        basic_block_pallas(x2, params_id, compute_dtype=jnp.float32))
    err_id = jnp.max(jnp.abs(out_id - ref_id))
    assert jnp.allclose(out_id, ref_id, atol=2e-3, rtol=2e-3), \
        f"identity max abs err {err_id}"

    print("KERNEL_OK")
</pallas_src>

<mosaic_0001>
module attributes {stable_mosaic.version = 11 : i64} {
  func.func @_stage1_kernel(%arg0: i32, %arg1: memref<1x16x16x4xf32, #tpu.memory_space<vmem>>, %arg2: memref<36x8xf32, #tpu.memory_space<vmem>>, %arg3: memref<4x8xf32, #tpu.memory_space<vmem>>, %arg4: memref<1x16x16x8xf32, #tpu.memory_space<vmem>>, %arg5: memref<1x16x16x8xf32, #tpu.memory_space<vmem>>, %arg6: memref<1x4x8xf32, #tpu.memory_space<vmem>>, %arg7: memref<18x18x4xf32, #tpu.memory_space<vmem>>, %arg8: memref<256x36xf32, #tpu.memory_space<vmem>>) attributes {dimension_semantics = [#tpu.dimension_semantics<parallel>], iteration_bounds = array<i64: 2>, scalar_prefetch = 0 : i64, scratch_operands = 2 : i64, tpu.core_type = #tpu.core_type<tc>, window_params = [{transform_indices = @transform_0, window_bounds = array<i64: 1, 16, 16, 4>}, {pipeline_mode = #tpu.pipeline_mode<synchronous>, transform_indices = @transform_1, window_bounds = array<i64: 36, 8>}, {pipeline_mode = #tpu.pipeline_mode<synchronous>, transform_indices = @transform_2, window_bounds = array<i64: 4, 8>}, {transform_indices = @transform_3, window_bounds = array<i64: 1, 16, 16, 8>}, {transform_indices = @transform_4, window_bounds = array<i64: 1, 16, 16, 8>}, {transform_indices = @transform_5, window_bounds = array<i64: 1, 4, 8>}]} {
    %c0 = arith.constant 0 : index
    %c0_0 = arith.constant 0 : index
    %c0_1 = arith.constant 0 : index
    %c0_2 = arith.constant 0 : index
    %0 = vector.load %arg1[%c0, %c0_0, %c0_1, %c0_2] : memref<1x16x16x4xf32, #tpu.memory_space<vmem>>, vector<1x16x16x4xf32>
    %1 = vector.shape_cast %0 : vector<1x16x16x4xf32> to vector<16x16x4xf32>
    %cst = arith.constant 0.000000e+00 : f32
    %2 = vector.broadcast %cst : f32 to vector<1x18x4xf32>
    %c0_3 = arith.constant 0 : index
    %c0_4 = arith.constant 0 : index
    %c0_5 = arith.constant 0 : index
    %3 = vector.load %arg7[%c0_3, %c0_4, %c0_5] : memref<18x18x4xf32, #tpu.memory_space<vmem>>, vector<1x18x4xf32>
    tpu.vector_store %arg7[%c0_3, %c0_4, %c0_5], %2 {strides = array<i32>} : memref<18x18x4xf32, #tpu.memory_space<vmem>>, vector<1x18x4xf32>,
    %cst_6 = arith.constant 0.000000e+00 : f32
    %4 = vector.broadcast %cst_6 : f32 to vector<1x18x4xf32>
    %c17 = arith.constant 17 : index
    %c0_7 = arith.constant 0 : index
    %c0_8 = arith.constant 0 : index
    %5 = vector.load %arg7[%c17, %c0_7, %c0_8] : memref<18x18x4xf32, #tpu.memory_space<vmem>>, vector<1x18x4xf32>
    tpu.vector_store %arg7[%c17, %c0_7, %c0_8], %4 {strides = array<i32>} : memref<18x18x4xf32, #tpu.memory_space<vmem>>, vector<1x18x4xf32>,
    %cst_9 = arith.constant 0.000000e+00 : f32
    %6 = vector.broadcast %cst_9 : f32 to vector<18x1x4xf32>
    %c0_10 = arith.constant 0 : index
    %c0_11 = arith.constant 0 : index
    %c0_12 = arith.constant 0 : index
    %7 = vector.load %arg7[%c0_10, %c0_11, %c0_12] : memref<18x18x4xf32, #tpu.memory_space<vmem>>, vector<18x1x4xf32>
    tpu.vector_store %arg7[%c0_10, %c0_11, %c0_12], %6 {strides = array<i32>} : memref<18x18x4xf32, #tpu.memory_space<vmem>>, vector<18x1x4xf32>,
    %cst_13 = arith.constant 0.000000e+00 : f32
    %8 = vector.broadcast %cst_13 : f32 to vector<18x1x4xf32>
    %c0_14 = arith.constant 0 : index
    %c17_15 = arith.constant 17 : index
    %c0_16 = arith.constant 0 : index
    %9 = vector.load %arg7[%c0_14, %c17_15, %c0_16] : memref<18x18x4xf32, #tpu.memory_space<vmem>>, vector<18x1x4xf32>
    tpu.vector_store %arg7[%c0_14, %c17_15, %c0_16], %8 {strides = array<i32>} : memref<18x18x4xf32, #tpu.memory_space<vmem>>, vector<18x1x4xf32>,
    %c1 = arith.constant 1 : index
    %c1_17 = arith.constant 1 : index
    %c0_18 = arith.constant 0 : index
    %10 = vector.load %arg7[%c1, %c1_17, %c0_18] : memref<18x18x4xf32, #tpu.memory_space<vmem>>, vector<16x16x4xf32>
    tpu.vector_store %arg7[%c1, %c1_17, %c0_18], %1 {strides = array<i32>} : memref<18x18x4xf32, #tpu.memory_space<vmem>>, vector<16x16x4xf32>,
    %c0_19 = arith.constant 0 : index
    %c0_20 = arith.constant 0 : index
    %c0_21 = arith.constant 0 : index
    %11 = vector.load %arg7[%c0_19, %c0_20, %c0_21] : memref<18x18x4xf32, #tpu.memory_space<vmem>>, vector<16x16x4xf32>
    %12 = vector.shape_cast %11 : vector<16x16x4xf32> to vector<256x4xf32>
    %c0_22 = arith.constant 0 : index
    %c0_23 = arith.constant 0 : index
    %13 = vector.load %arg8[%c0_22, %c0_23] : memref<256x36xf32, #tpu.memory_space<vmem>>, vector<256x4xf32>
    tpu.vector_store %arg8[%c0_22, %c0_23], %12 {strides = array<i32>} : memref<256x36xf32, #tpu.memory_space<vmem>>, vector<256x4xf32>,
    %c0_24 = arith.constant 0 : index
    %c1_25 = arith.constant 1 : index
    %c0_26 = arith.constant 0 : index
    %14 = vector.load %arg7[%c0_24, %c1_25, %c0_26] : memref<18x18x4xf32, #tpu.memory_space<vmem>>, vector<16x16x4xf32>
    %15 = vector.shape_cast %14 : vector<16x16x4xf32> to vector<256x4xf32>
    %c0_27 = arith.constant 0 : index
    %c4 = arith.constant 4 : index
    %16 = vector.load %arg8[%c0_27, %c4] : memref<256x36xf32, #tpu.memory_space<vmem>>, vector<256x4xf32>
    tpu.vector_store %arg8[%c0_27, %c4], %15 {strides = array<i32>} : memref<256x36xf32, #tpu.memory_space<vmem>>, vector<256x4xf32>,
    %c0_28 = arith.constant 0 : index
    %c2 = arith.constant 2 : index
    %c0_29 = arith.constant 0 : index
    %17 = vector.load %arg7[%c0_28, %c2, %c0_29] : memref<18x18x4xf32, #tpu.memory_space<vmem>>, vector<16x16x4xf32>
    %18 = vector.shape_cast %17 : vector<16x16x4xf32> to vector<256x4xf32>
    %c0_30 = arith.constant 0 : index
    %c8 = arith.constant 8 : index
    %19 = vector.load %arg8[%c0_30, %c8] : memref<256x36xf32, #tpu.memory_space<vmem>>, vector<256x4xf32>
    tpu.vector_store %arg8[%c0_30, %c8], %18 {strides = array<i32>} : memref<256x36xf32, #tpu.memory_space<vmem>>, vector<256x4xf32>,
    %c1_31 = arith.constant 1 : index
    %c0_32 = arith.constant 0 : index
    %c0_33 = arith.constant 0 : index
    %20 = vector.load %arg7[%c1_31, %c0_32, %c0_33] : memref<18x18x4xf32, #tpu.memory_space<vmem>>, vector<16x16x4xf32>
    %21 = vector.shape_cast %20 : vector<16x16x4xf32> to vector<256x4xf32>
    %c0_34 = arith.constant 0 : index
    %c12 = arith.constant 12 : index
    %22 = vector.load %arg8[%c0_34, %c12] : memref<256x36xf32, #tpu.memory_space<vmem>>, vector<256x4xf32>
    tpu.vector_store %arg8[%c0_34, %c12], %21 {strides = array<i32>} : memref<256x36xf32, #tpu.memory_space<vmem>>, vector<256x4xf32>,
    %c1_35 = arith.constant 1 : index
    %c1_36 = arith.constant 1 : index
    %c0_37 = arith.constant 0 : index
    %23 = vector.load %arg7[%c1_35, %c1_36, %c0_37] : memref<18x18x4xf32, #tpu.memory_space<vmem>>, vector<16x16x4xf32>
    %24 = vector.shape_cast %23 : vector<16x16x4xf32> to vector<256x4xf32>
    %c0_38 = arith.constant 0 : index
    %c16 = arith.constant 16 : index
    %25 = vector.load %arg8[%c0_38, %c16] : memref<256x36xf32, #tpu.memory_space<vmem>>, vector<256x4xf32>
    tpu.vector_store %arg8[%c0_38, %c16], %24 {strides = array<i32>} : memref<256x36xf32, #tpu.memory_space<vmem>>, vector<256x4xf32>,
    %c1_39 = arith.constant 1 : index
    %c2_40 = arith.constant 2 : index
    %c0_41 = arith.constant 0 : index
    %26 = vector.load %arg7[%c1_39, %c2_40, %c0_41] : memref<18x18x4xf32, #tpu.memory_space<vmem>>, vector<16x16x4xf32>
    %27 = vector.shape_cast %26 : vector<16x16x4xf32> to vector<256x4xf32>
    %c0_42 = arith.constant 0 : index
    %c20 = arith.constant 20 : index
    %28 = vector.load %arg8[%c0_42, %c20] : memref<256x36xf32, #tpu.memory_space<vmem>>, vector<256x4xf32>
    tpu.vector_store %arg8[%c0_42, %c20], %27 {strides = array<i32>} : memref<256x36xf32, #tpu.memory_space<vmem>>, vector<256x4xf32>,
    %c2_43 = arith.constant 2 : index
    %c0_44 = arith.constant 0 : index
    %c0_45 = arith.constant 0 : index
    %29 = vector.load %arg7[%c2_43, %c0_44, %c0_45] : memref<18x18x4xf32, #tpu.memory_space<vmem>>, vector<16x16x4xf32>
    %30 = vector.shape_cast %29 : vector<16x16x4xf32> to vector<256x4xf32>
    %c0_46 = arith.constant 0 : index
    %c24 = arith.constant 24 : index
    %31 = vector.load %arg8[%c0_46, %c24] : memref<256x36xf32, #tpu.memory_space<vmem>>, vector<256x4xf32>
    tpu.vector_store %arg8[%c0_46, %c24], %30 {strides = array<i32>} : memref<256x36xf32, #tpu.memory_space<vmem>>, vector<256x4xf32>,
    %c2_47 = arith.constant 2 : index
    %c1_48 = arith.constant 1 : index
    %c0_49 = arith.constant 0 : index
    %32 = vector.load %arg7[%c2_47, %c1_48, %c0_49] : memref<18x18x4xf32, #tpu.memory_space<vmem>>, vector<16x16x4xf32>
    %33 = vector.shape_cast %32 : vector<16x16x4xf32> to vector<256x4xf32>
    %c0_50 = arith.constant 0 : index
    %c28 = arith.constant 28 : index
    %34 = vector.load %arg8[%c0_50, %c28] : memref<256x36xf32, #tpu.memory_space<vmem>>, vector<256x4xf32>
    tpu.vector_store %arg8[%c0_50, %c28], %33 {strides = array<i32>} : memref<256x36xf32, #tpu.memory_space<vmem>>, vector<256x4xf32>,
    %c2_51 = arith.constant 2 : index
    %c2_52 = arith.constant 2 : index
    %c0_53 = arith.constant 0 : index
    %35 = vector.load %arg7[%c2_51, %c2_52, %c0_53] : memref<18x18x4xf32, #tpu.memory_space<vmem>>, vector<16x16x4xf32>
    %36 = vector.shape_cast %35 : vector<16x16x4xf32> to vector<256x4xf32>
    %c0_54 = arith.constant 0 : index
    %c32 = arith.constant 32 : index
    %37 = vector.load %arg8[%c0_54, %c32] : memref<256x36xf32, #tpu.memory_space<vmem>>, vector<256x4xf32>
    tpu.vector_store %arg8[%c0_54, %c32], %36 {strides = array<i32>} : memref<256x36xf32, #tpu.memory_space<vmem>>, vector<256x4xf32>,
    %c0_55 = arith.constant 0 : index
    %c0_56 = arith.constant 0 : index
    %38 = vector.load %arg8[%c0_55, %c0_56] : memref<256x36xf32, #tpu.memory_space<vmem>>, vector<256x36xf32>
    %c0_57 = arith.constant 0 : index
    %c0_58 = arith.constant 0 : index
    %39 = vector.load %arg2[%c0_57, %c0_58] : memref<36x8xf32, #tpu.memory_space<vmem>>, vector<36x8xf32>
    %cst_59 = arith.constant dense<0.000000e+00> : vector<256x8xf32>
    %40 = tpu.matmul %38, %39, %cst_59 {dimension_numbers = #tpu.dot_dimension_numbers<[1], [0], [0], [1], [0, 0, 1, 1], [], []>} : vector<256x36xf32>, vector<36x8xf32>, vector<256x8xf32> -> vector<256x8xf32>
    %cst_60 = arith.constant dense<0.000000e+00> : vector<8xf32>
    %41 = vector.multi_reduction <add>, %40, %cst_60 [0] : vector<256x8xf32> to vector<8xf32>
    %42 = vector.shape_cast %41 : vector<8xf32> to vector<1x8xf32>
    %43 = arith.mulf %40, %40 : vector<256x8xf32>
    %cst_61 = arith.constant dense<0.000000e+00> : vector<8xf32>
    %44 = vector.multi_reduction <add>, %43, %cst_61 [0] : vector<256x8xf32> to vector<8xf32>
    %45 = vector.shape_cast %44 : vector<8xf32> to vector<1x8xf32>
    %46 = vector.shape_cast %40 : vector<256x8xf32> to vector<1x16x16x8xf32>
    %c0_62 = arith.constant 0 : index
    %c0_63 = arith.constant 0 : index
    %c0_64 = arith.constant 0 : index
    %c0_65 = arith.constant 0 : index
    %47 = vector.load %arg4[%c0_62, %c0_63, %c0_64, %c0_65] : memref<1x16x16x8xf32, #tpu.memory_space<vmem>>, vector<1x16x16x8xf32>
    tpu.vector_store %arg4[%c0_62, %c0_63, %c0_64, %c0_65], %46 {strides = array<i32>} : memref<1x16x16x8xf32, #tpu.memory_space<vmem>>, vector<1x16x16x8xf32>,
    %48 = vector.shape_cast %42 : vector<1x8xf32> to vector<1x1x8xf32>
    %c0_66 = arith.constant 0 : index
    %c0_67 = arith.constant 0 : index
    %c0_68 = arith.constant 0 : index
    %49 = vector.load %arg6[%c0_66, %c0_67, %c0_68] : memref<1x4x8xf32, #tpu.memory_space<vmem>>, vector<1x1x8xf32>
    tpu.vector_store %arg6[%c0_66, %c0_67, %c0_68], %48 {strides = array<i32>} : memref<1x4x8xf32, #tpu.memory_space<vmem>>, vector<1x1x8xf32>,
    %50 = vector.shape_cast %45 : vector<1x8xf32> to vector<1x1x8xf32>
    %c0_69 = arith.constant 0 : index
    %c1_70 = arith.constant 1 : index
    %c0_71 = arith.constant 0 : index
    %51 = vector.load %arg6[%c0_69, %c1_70, %c0_71] : memref<1x4x8xf32, #tpu.memory_space<vmem>>, vector<1x1x8xf32>
    tpu.vector_store %arg6[%c0_69, %c1_70, %c0_71], %50 {strides = array<i32>} : memref<1x4x8xf32, #tpu.memory_space<vmem>>, vector<1x1x8xf32>,
    %52 = vector.shape_cast %1 : vector<16x16x4xf32> to vector<256x4xf32>
    %c0_72 = arith.constant 0 : index
    %c0_73 = arith.constant 0 : index
    %53 = vector.load %arg3[%c0_72, %c0_73] : memref<4x8xf32, #tpu.memory_space<vmem>>, vector<4x8xf32>
    %cst_74 = arith.constant dense<0.000000e+00> : vector<256x8xf32>
    %54 = tpu.matmul %52, %53, %cst_74 {dimension_numbers = #tpu.dot_dimension_numbers<[1], [0], [0], [1], [0, 0, 1, 1], [], []>} : vector<256x4xf32>, vector<4x8xf32>, vector<256x8xf32> -> vector<256x8xf32>
    %cst_75 = arith.constant dense<0.000000e+00> : vector<8xf32>
    %55 = vector.multi_reduction <add>, %54, %cst_75 [0] : vector<256x8xf32> to vector<8xf32>
    %56 = vector.shape_cast %55 : vector<8xf32> to vector<1x8xf32>
    %57 = arith.mulf %54, %54 : vector<256x8xf32>
    %cst_76 = arith.constant dense<0.000000e+00> : vector<8xf32>
    %58 = vector.multi_reduction <add>, %57, %cst_76 [0] : vector<256x8xf32> to vector<8xf32>
    %59 = vector.shape_cast %58 : vector<8xf32> to vector<1x8xf32>
    %60 = vector.shape_cast %54 : vector<256x8xf32> to vector<1x16x16x8xf32>
    %c0_77 = arith.constant 0 : index
    %c0_78 = arith.constant 0 : index
    %c0_79 = arith.constant 0 : index
    %c0_80 = arith.constant 0 : index
    %61 = vector.load %arg5[%c0_77, %c0_78, %c0_79, %c0_80] : memref<1x16x16x8xf32, #tpu.memory_space<vmem>>, vector<1x16x16x8xf32>
    tpu.vector_store %arg5[%c0_77, %c0_78, %c0_79, %c0_80], %60 {strides = array<i32>} : memref<1x16x16x8xf32, #tpu.memory_space<vmem>>, vector<1x16x16x8xf32>,
    %62 = vector.shape_cast %56 : vector<1x8xf32> to vector<1x1x8xf32>
    %c0_81 = arith.constant 0 : index
    %c2_82 = arith.constant 2 : index
    %c0_83 = arith.constant 0 : index
    %63 = vector.load %arg6[%c0_81, %c2_82, %c0_83] : memref<1x4x8xf32, #tpu.memory_space<vmem>>, vector<1x1x8xf32>
    tpu.vector_store %arg6[%c0_81, %c2_82, %c0_83], %62 {strides = array<i32>} : memref<1x4x8xf32, #tpu.memory_space<vmem>>, vector<1x1x8xf32>,
    %64 = vector.shape_cast %59 : vector<1x8xf32> to vector<1x1x8xf32>
    %c0_84 = arith.constant 0 : index
    %c3 = arith.constant 3 : index
    %c0_85 = arith.constant 0 : index
    %65 = vector.load %arg6[%c0_84, %c3, %c0_85] : memref<1x4x8xf32, #tpu.memory_space<vmem>>, vector<1x1x8xf32>
    tpu.vector_store %arg6[%c0_84, %c3, %c0_85], %64 {strides = array<i32>} : memref<1x4x8xf32, #tpu.memory_space<vmem>>, vector<1x1x8xf32>,
    return
  }
  func.func @transform_0(%arg0: i32) -> (i32, i32, i32, i32) {
    %c0_i32 = arith.constant 0 : i32
    %c0_i32_0 = arith.constant 0 : i32
    %c0_i32_1 = arith.constant 0 : i32
    %c0_i32_2 = arith.constant 0 : i32
    return %arg0, %c0_i32, %c0_i32_0, %c0_i32_1 : i32, i32, i32, i32
  }
  func.func @transform_1(%arg0: i32) -> (i32, i32) {
    %c0_i32 = arith.constant 0 : i32
    %c0_i32_0 = arith.constant 0 : i32
    %c0_i32_1 = arith.constant 0 : i32
    return %c0_i32, %c0_i32_0 : i32, i32
  }
  func.func @transform_2(%arg0: i32) -> (i32, i32) {
    %c0_i32 = arith.constant 0 : i32
    %c0_i32_0 = arith.constant 0 : i32
    %c0_i32_1 = arith.constant 0 : i32
    return %c0_i32, %c0_i32_0 : i32, i32
  }
  func.func @transform_3(%arg0: i32) -> (i32, i32, i32, i32) {
    %c0_i32 = arith.constant 0 : i32
    %c0_i32_0 = arith.constant 0 : i32
    %c0_i32_1 = arith.constant 0 : i32
    %c0_i32_2 = arith.constant 0 : i32
    return %arg0, %c0_i32, %c0_i32_0, %c0_i32_1 : i32, i32, i32, i32
  }
  func.func @transform_4(%arg0: i32) -> (i32, i32, i32, i32) {
    %c0_i32 = arith.constant 0 : i32
    %c0_i32_0 = arith.constant 0 : i32
    %c0_i32_1 = arith.constant 0 : i32
    %c0_i32_2 = arith.constant 0 : i32
    return %arg0, %c0_i32, %c0_i32_0, %c0_i32_1 : i32, i32, i32, i32
  }
  func.func @transform_5(%arg0: i32) -> (i32, i32, i32) {
    %c0_i32 = arith.constant 0 : i32
    %c0_i32_0 = arith.constant 0 : i32
    %c0_i32_1 = arith.constant 0 : i32
    return %arg0, %c0_i32, %c0_i32_0 : i32, i32, i32
  }
}

</mosaic_0001>

<llo_original>
// kernel: tpu_custom_call.1
$region0: #{tpu_custom_call.1}
  #allocation0 [shape = 'u32[]', space=smem, size = 0x4, offset = 0x4, fixed_abs, tag = 'smem constant byte address 0x4 - core index']
  #allocation1 [shape = 'u32[144,128]{1,0:T(1,128)}', space=vmem, size = 0x12000, scoped, tag = 'internal scratch']
  #allocation2 [shape = 'f32[18,18,4]{2,1,0:T(8,128)}', space=vmem, size = 0x36000, scoped, tag = 'scratch operand']
  #allocation3 [shape = 'f32[256,36]{1,0:T(8,128)}', space=vmem, size = 0x20000, scoped, tag = 'scratch operand']
  %s0 = inlined_call_operand.vmem [shape: f32[2,16,16,4], index: 0, kind: input, shape index: {}]
  %s1 = inlined_call_operand.vmem [shape: f32[36,8], index: 1, kind: input, shape index: {}]
  %s2 = inlined_call_operand.vmem [shape: f32[4,8], index: 2, kind: input, shape index: {}]
  %s3 = inlined_call_operand.vmem [shape: f32[2,16,16,8], index: 3, kind: output, shape index: {0}]
  %s4 = inlined_call_operand.vmem [shape: f32[2,16,16,8], index: 4, kind: output, shape index: {1}]
  %s5 = inlined_call_operand.hbm [shape: f32[2,4,8], index: 5, kind: output, shape index: {2}]
  %6 = xla_tuple %s3, %s4, %s5
  %s7 = sld [smem:[#allocation0]]
  $region61: #{tpu_custom_call.1} parent=0
    _
  %s9 = ssub.s32 1, %s7
  %s10 = scalar_select 0, %s9, %s7
  $region1: #{tpu_custom_call.1} parent=0
    #allocation4 [shape = 'u8[4096]{0}', space=vmem, size = 0x1000, scoped, tag = 'output window, operand 2']
    #allocation5 [shape = 's32[2]{0}', space=sflag, size = 0x8, scoped, tag = 'scoped memory for tpu_custom_call.1']
    %11 = vsyncpa [#allocation5], 0
    %s12 = scalar_lea.sflag [#allocation5], 1
    %13 = vsyncpa %s12, 0
    loop: start=0, step=1, limit=4
    $region2: #{tpu_custom_call.1} parent=1 // loop_pre_header
      _
    $region3: #{tpu_custom_call.1} parent=1 // loop_header
      %s15 = sphi 0, %s19
      %p16 = scmp.ge.s32.totalorder %s15, 4
      %s25 = sphi 0, %s27
      %s28 = sphi 0, %s25
      %s29 = sphi 0, %s28
      %s45 = sphi 0, %s29
      %s49 = sphi 0, %s49
      %s51 = sphi 0, %s49
      %s52 = sphi 0, %s51
      %s66 = sphi 0, %s52
      %s70 = sphi 0, %s70
      %s72 = sphi 0, %s70
      %s73 = sphi 0, %s72
      %s87 = sphi 0, %s73
      %s93 = sphi 0, %s95
      %s96 = sphi 0, %s93
      %s97 = sphi 0, %s96
      %s113 = sphi 0, %s97
      %s119 = sphi 0, %s121
      %s122 = sphi 0, %s119
      %s123 = sphi 0, %s122
      %s139 = sphi 0, %s123
      %s145 = sphi 0, %s147
      %s148 = sphi 0, %s145
      %s149 = sphi 0, %s148
      %s165 = sphi 0, %s149
    $region4: #{tpu_custom_call.1} parent=1 // loop_header_branch
      %18 = sbr.rel (%p16) target = $region8
    $region5: #{tpu_custom_call.1} parent=1 // loop_body
      %s20 = ssub.s32 %s15, 1
      %s21 = ssub.s32 %s15, 2
      %s22 = sadd.s32 %s15, 1
      %s23 = ssub.s32 %s15, %s22
      %p24 = scmp.eq.s32.totalorder %s23, 0
      %s26 = sadd.s32 %s25, 1
      %s27 = scalar_select %p24, %s25, %s26
      %p30 = pneg %p24
      %p31 = scmp.eq.s32.totalorder %s15, 1
      %p32 = por %p30, %p31
      %p33 = scmp.ne.s32.totalorder %s25, %s28
      %p34 = scmp.eq.s32.totalorder %s15, 0
      %p35 = por %p33, %p34
      %p36 = scmp.ne.s32.totalorder %s25, %s28
      %p37 = scmp.eq.s32.totalorder %s20, 1
      %p38 = por %p36, %p37
      %p39 = scmp.ne.s32.totalorder %s28, %s29
      %p40 = scmp.eq.s32.totalorder %s20, 0
      %p41 = por %p39, %p40
      %p42 = scmp.ne.s32.totalorder %s28, %s29
      %p43 = scmp.eq.s32.totalorder %s21, 1
      %p44 = por %p42, %p43
      %p46 = scmp.ne.s32.totalorder %s29, %s45
      %p47 = scmp.eq.s32.totalorder %s21, 0
      %p48 = por %p46, %p47
      %s50 = sadd.s32 %s49, 1
      %p53 = scmp.eq.s32.totalorder %s15, 1
      %p54 = scmp.ne.s32.totalorder %s49, %s51
      %p55 = scmp.eq.s32.totalorder %s15, 0
      %p56 = por %p54, %p55
      %p57 = scmp.ne.s32.totalorder %s49, %s51
      %p58 = scmp.eq.s32.totalorder %s20, 1
      %p59 = por %p57, %p58
      %p60 = scmp.ne.s32.totalorder %s51, %s52
      %p61 = scmp.eq.s32.totalorder %s20, 0
      %p62 = por %p60, %p61
      %p63 = scmp.ne.s32.totalorder %s51, %s52
      %p64 = scmp.eq.s32.totalorder %s21, 1
      %p65 = por %p63, %p64
      %p67 = scmp.ne.s32.totalorder %s52, %s66
      %p68 = scmp.eq.s32.totalorder %s21, 0
      %p69 = por %p67, %p68
      %s71 = sadd.s32 %s70, 1
      %p74 = scmp.eq.s32.totalorder %s15, 1
      %p75 = scmp.ne.s32.totalorder %s70, %s72
      %p76 = scmp.eq.s32.totalorder %s15, 0
      %p77 = por %p75, %p76
      %p78 = scmp.ne.s32.totalorder %s70, %s72
      %p79 = scmp.eq.s32.totalorder %s20, 1
      %p80 = por %p78, %p79
      %p81 = scmp.ne.s32.totalorder %s72, %s73
      %p82 = scmp.eq.s32.totalorder %s20, 0
      %p83 = por %p81, %p82
      %p84 = scmp.ne.s32.totalorder %s72, %s73
      %p85 = scmp.eq.s32.totalorder %s21, 1
      %p86 = por %p84, %p85
      %p88 = scmp.ne.s32.totalorder %s73, %s87
      %p89 = scmp.eq.s32.totalorder %s21, 0
      %p90 = por %p88, %p89
      %s91 = ssub.s32 %s15, %s22
      %p92 = scmp.eq.s32.totalorder %s91, 0
      %s94 = sadd.s32 %s93, 1
      %s95 = scalar_select %p92, %s93, %s94
      %p98 = pneg %p92
      %p99 = scmp.eq.s32.totalorder %s15, 1
      %p100 = por %p98, %p99
      %p101 = scmp.ne.s32.totalorder %s93, %s96
      %p102 = scmp.eq.s32.totalorder %s15, 0
      %p103 = por %p101, %p102
      %p104 = scmp.ne.s32.totalorder %s93, %s96
      %p105 = scmp.eq.s32.totalorder %s20, 1
      %p106 = por %p104, %p105
      %p107 = scmp.ne.s32.totalorder %s96, %s97
      %p108 = scmp.eq.s32.totalorder %s20, 0
      %p109 = por %p107, %p108
      %p110 = scmp.ne.s32.totalorder %s96, %s97
      %p111 = scmp.eq.s32.totalorder %s21, 1
      %p112 = por %p110, %p111
      %p114 = scmp.ne.s32.totalorder %s97, %s113
      %p115 = scmp.eq.s32.totalorder %s21, 0
      %p116 = por %p114, %p115
      %s117 = ssub.s32 %s15, %s22
      %p118 = scmp.eq.s32.totalorder %s117, 0
      %s120 = sadd.s32 %s119, 1
      %s121 = scalar_select %p118, %s119, %s120
      %p124 = pneg %p118
      %p125 = scmp.eq.s32.totalorder %s15, 1
      %p126 = por %p124, %p125
      %p127 = scmp.ne.s32.totalorder %s119, %s122
      %p128 = scmp.eq.s32.totalorder %s15, 0
      %p129 = por %p127, %p128
      %p130 = scmp.ne.s32.totalorder %s119, %s122
      %p131 = scmp.eq.s32.totalorder %s20, 1
      %p132 = por %p130, %p131
      %p133 = scmp.ne.s32.totalorder %s122, %s123
      %p134 = scmp.eq.s32.totalorder %s20, 0
      %p135 = por %p133, %p134
      %p136 = scmp.ne.s32.totalorder %s122, %s123
      %p137 = scmp.eq.s32.totalorder %s21, 1
      %p138 = por %p136, %p137
      %p140 = scmp.ne.s32.totalorder %s123, %s139
      %p141 = scmp.eq.s32.totalorder %s21, 0
      %p142 = por %p140, %p141
      %s143 = ssub.s32 %s15, %s22
      %p144 = scmp.eq.s32.totalorder %s143, 0
      %s146 = sadd.s32 %s145, 1
      %s147 = scalar_select %p144, %s145, %s146
      %p150 = pneg %p144
      %p151 = scmp.eq.s32.totalorder %s15, 1
      %p152 = por %p150, %p151
      %p153 = scmp.ne.s32.totalorder %s145, %s148
      %p154 = scmp.eq.s32.totalorder %s15, 0
      %p155 = por %p153, %p154
      %p156 = scmp.ne.s32.totalorder %s145, %s148
      %p157 = scmp.eq.s32.totalorder %s20, 1
      %p158 = por %p156, %p157
      %p159 = scmp.ne.s32.totalorder %s148, %s149
      %p160 = scmp.eq.s32.totalorder %s20, 0
      %p161 = por %p159, %p160
      %p162 = scmp.ne.s32.totalorder %s148, %s149
      %p163 = scmp.eq.s32.totalorder %s21, 1
      %p164 = por %p162, %p163
      %p166 = scmp.ne.s32.totalorder %s149, %s165
      %p167 = scmp.eq.s32.totalorder %s21, 0
      %p168 = por %p166, %p167
      %p169 = scmp.le.s32.totalorder 1, %s15
      %p170 = scmp.lt.s32.totalorder %s15, 3
      %p171 = pnand %p169, %p170
      %p172 = pneg %p171
      // Predicated region
      $region9: #{tpu_custom_call.1} parent=5 // pred_check
        _
      $region10: #{tpu_custom_call.1} parent=5 // pred_check_branch
        %174 = sbr.rel (%p171) target = $region12
      $region11: #{tpu_custom_call.1} parent=5 // pred_region
        %s175 = ssub.s32 %s15, 1
        // Predicated region
        $region13: #{tpu_custom_call.1} parent=11 // pred_check
          %p176 = pneg %p62
        $region14: #{tpu_custom_call.1} parent=11 // pred_check_branch
          %178 = sbr.rel (%p176) target = $region16
        $region15: #{tpu_custom_call.1} parent=11 // pred_region
          _
        $region16: #{tpu_custom_call.1} parent=11 // pred_fallthru
          _
        // Predicated region
        $region17: #{tpu_custom_call.1} parent=11 // pred_check
          %p179 = pneg %p83
        $region18: #{tpu_custom_call.1} parent=11 // pred_check_branch
          %181 = sbr.rel (%p179) target = $region20
        $region19: #{tpu_custom_call.1} parent=11 // pred_region
          _
        $region20: #{tpu_custom_call.1} parent=11 // pred_fallthru
          _
      $region12: #{tpu_custom_call.1} parent=5 // pred_fallthru
        _
      %p182 = scmp.lt.s32.totalorder %s15, 2
      // Predicated region
      $region21: #{tpu_custom_call.1} parent=5 // pred_check
        %p183 = pneg %p182
      $region22: #{tpu_custom_call.1} parent=5 // pred_check_branch
        %185 = sbr.rel (%p183) target = $region24
      $region23: #{tpu_custom_call.1} parent=5 // pred_region
        // Predicated region
        $region25: #{tpu_custom_call.1} parent=23 // pred_check
          %p186 = pneg %p35
        $region26: #{tpu_custom_call.1} parent=23 // pred_check_branch
          %188 = sbr.rel (%p186) target = $region28
        $region27: #{tpu_custom_call.1} parent=23 // pred_region
          %p189 = scmp.lt.s32.totalorder %s15, 1
          %s190 = scalar_select %p189, %s15, 1
          %s191 = smul.addr %s190, 32
          %s192 = smul.addr %s191, 8
          %s193 = scalar_lea.vmem %s0, %s192
        $region28: #{tpu_custom_call.1} parent=23 // pred_fallthru
          _
      $region24: #{tpu_custom_call.1} parent=5 // pred_fallthru
        _
      %p194 = scmp.le.s32.totalorder 1, %s15
      %p195 = scmp.lt.s32.totalorder %s15, 3
      %p196 = pnand %p194, %p195
      %p197 = pneg %p196
      // Predicated region
      $region29: #{tpu_custom_call.1} parent=5 // pred_check
        _
      $region30: #{tpu_custom_call.1} parent=5 // pred_check_branch
        %199 = sbr.rel (%p196) target = $region32
      $region31: #{tpu_custom_call.1} parent=5 // pred_region
        %s200 = ssub.s32 %s15, 1
        %p201 = scmp.lt.s32.totalorder %s20, 1
        %s202 = scalar_select %p201, %s20, 1
        %s203 = smul.addr %s202, 32
        %s204 = smul.addr %s203, 8
        %s205 = scalar_lea.vmem %s0, %s204
        %p206 = pneg %p41
        %p207 = pneg %p38
        %p208 = pneg %p62
        %p209 = pneg %p59
        %p210 = pneg %p83
        %p211 = pneg %p80
        %p212 = pneg %p109
        %p213 = pneg %p106
        %p214 = scmp.lt.s32.totalorder %s20, 1
        %s215 = scalar_select %p214, %s20, 1
        %s216 = smul.addr %s215, 32
        %s217 = smul.addr %s216, 8
        %s218 = scalar_lea.vmem %s3, %s217
        %p219 = pneg %p135
        %p220 = pneg %p132
        %p221 = scmp.lt.s32.totalorder %s20, 1
        %s222 = scalar_select %p221, %s20, 1
        %s223 = smul.addr %s222, 32
        %s224 = smul.addr %s223, 8
        %s225 = scalar_lea.vmem %s4, %s224
        %p226 = pneg %p161
        %p227 = pneg %p158
        %s228 = sand.u32 %s148, 1
        %s229 = scalar_lea.sflag [#allocation5], %s228
        %s230 = sand.u32 %s148, 1
        %s231 = smul.addr %s230, 4
        %s232 = scalar_lea.vmem [#allocation4], %s231
        %p233 = scmp.lt.s32.totalorder %s20, 1
        %s234 = scalar_select %p233, %s20, 1
        %s235 = smul.addr %s234, 32
        %s236 = smul.addr %s235, 8
        %s237 = scalar_lea.vmem %s0, %s236
        %p238 = scmp.lt.s32.totalorder %s20, 1
        %s239 = scalar_select %p238, %s20, 1
        %s240 = smul.addr %s239, 32
        %s241 = smul.addr %s240, 8
        %s242 = scalar_lea.vmem %s3, %s241
        %p243 = scmp.lt.s32.totalorder %s20, 1
        %s244 = scalar_select %p243, %s20, 1
        %s245 = smul.addr %s244, 32
        %s246 = smul.addr %s245, 8
        %s247 = scalar_lea.vmem %s4, %s246
        %v248 = vld [vmem:[%s237] sm:$0xff]
        %v249 = vld [vmem:[%s237 + $0x8] sm:$0xff]
        %v250 = vld [vmem:[%s237 + $0x10] sm:$0xff]
        %v251 = vld [vmem:[%s237 + $0x18] sm:$0xff]
        %v252 = vld [vmem:[%s237 + $0x20] sm:$0xff]
        %v253 = vld [vmem:[%s237 + $0x28] sm:$0xff]
        %v254 = vld [vmem:[%s237 + $0x30] sm:$0xff]
        %v255 = vld [vmem:[%s237 + $0x38] sm:$0xff]
        %v256 = vld [vmem:[%s237 + $0x40] sm:$0xff]
        %v257 = vld [vmem:[%s237 + $0x48] sm:$0xff]
        %v258 = vld [vmem:[%s237 + $0x50] sm:$0xff]
        %v259 = vld [vmem:[%s237 + $0x58] sm:$0xff]
        %v260 = vld [vmem:[%s237 + $0x60] sm:$0xff]
        %v261 = vld [vmem:[%s237 + $0x68] sm:$0xff]
        %v262 = vld [vmem:[%s237 + $0x70] sm:$0xff]
        %v263 = vld [vmem:[%s237 + $0x78] sm:$0xff]
        %v264 = vld [vmem:[%s237 + $0x80] sm:$0xff]
        %v265 = vld [vmem:[%s237 + $0x88] sm:$0xff]
        %v266 = vld [vmem:[%s237 + $0x90] sm:$0xff]
        %v267 = vld [vmem:[%s237 + $0x98] sm:$0xff]
        %v268 = vld [vmem:[%s237 + $0xa0] sm:$0xff]
        %v269 = vld [vmem:[%s237 + $0xa8] sm:$0xff]
        %v270 = vld [vmem:[%s237 + $0xb0] sm:$0xff]
        %v271 = vld [vmem:[%s237 + $0xb8] sm:$0xff]
        %v272 = vld [vmem:[%s237 + $0xc0] sm:$0xff]
        %v273 = vld [vmem:[%s237 + $0xc8] sm:$0xff]
        %v274 = vld [vmem:[%s237 + $0xd0] sm:$0xff]
        %v275 = vld [vmem:[%s237 + $0xd8] sm:$0xff]
        %v276 = vld [vmem:[%s237 + $0xe0] sm:$0xff]
        %v277 = vld [vmem:[%s237 + $0xe8] sm:$0xff]
        %v278 = vld [vmem:[%s237 + $0xf0] sm:$0xff]
        %v279 = vld [vmem:[%s237 + $0xf8] sm:$0xff]
        %vm280 = vcmask 31744
        %281 = vst.msk [vmem:[#allocation2] sm:$0xff] %vm280, 0.0
        %282 = vst.msk [vmem:[#allocation2 + $0x8] sm:$0xff] %vm280, 0.0
        %vm283 = vcmask 25600
        %284 = vst.msk [vmem:[#allocation2 + $0x10] sm:$0x3] %vm283, 0.0
        %s285 = scalar_lea.vmem [#allocation2], 408
        %286 = vst.msk [vmem:[%s285] sm:$0xff] %vm280, 0.0
        %287 = vst.msk [vmem:[%s285 + $0x8] sm:$0xff] %vm280, 0.0
        %288 = vst.msk [vmem:[%s285 + $0x10] sm:$0x3] %vm283, 0.0
        %vm289 = vcmask 24576
        %290 = vst.msk [vmem:[#allocation2] sm:$0x1] %vm289, 0.0
        %291 = vst.msk [vmem:[#allocation2 + $0x18] sm:$0x1] %vm289, 0.0
        %292 = vst.msk [vmem:[#allocation2 + $0x30] sm:$0x1] %vm289, 0.0
        %293 = vst.msk [vmem:[#allocation2 + $0x48] sm:$0x1] %vm289, 0.0
        %294 = vst.msk [vmem:[#allocation2 + $0x60] sm:$0x1] %vm289, 0.0
        %295 = vst.msk [vmem:[#allocation2 + $0x78] sm:$0x1] %vm289, 0.0
        %296 = vst.msk [vmem:[#allocation2 + $0x90] sm:$0x1] %vm289, 0.0
        %297 = vst.msk [vmem:[#allocation2 + $0xa8] sm:$0x1] %vm289, 0.0
        %298 = vst.msk [vmem:[#allocation2 + $0xc0] sm:$0x1] %vm289, 0.0
        %299 = vst.msk [vmem:[#allocation2 + $0xd8] sm:$0x1] %vm289, 0.0
        %300 = vst.msk [vmem:[#allocation2 + $0xf0] sm:$0x1] %vm289, 0.0
        %301 = vst.msk [vmem:[#allocation2 + $0x108] sm:$0x1] %vm289, 0.0
        %302 = vst.msk [vmem:[#allocation2 + $0x120] sm:$0x1] %vm289, 0.0
        %303 = vst.msk [vmem:[#allocation2 + $0x138] sm:$0x1] %vm289, 0.0
        %304 = vst.msk [vmem:[#allocation2 + $0x150] sm:$0x1] %vm289, 0.0
        %305 = vst.msk [vmem:[#allocation2 + $0x168] sm:$0x1] %vm289, 0.0
        %306 = vst.msk [vmem:[#allocation2 + $0x180] sm:$0x1] %vm289, 0.0
        %307 = vst.msk [vmem:[#allocation2 + $0x198] sm:$0x1] %vm289, 0.0
        %308 = vst.msk [vmem:[#allocation2 + $0x11] sm:$0x1] %vm289, 0.0
        %309 = vst.msk [vmem:[#allocation2 + $0x29] sm:$0x1] %vm289, 0.0
        %310 = vst.msk [vmem:[#allocation2 + $0x41] sm:$0x1] %vm289, 0.0
        %311 = vst.msk [vmem:[#allocation2 + $0x59] sm:$0x1] %vm289, 0.0
        %312 = vst.msk [vmem:[#allocation2 + $0x71] sm:$0x1] %vm289, 0.0
        %313 = vst.msk [vmem:[#allocation2 + $0x89] sm:$0x1] %vm289, 0.0
        %314 = vst.msk [vmem:[#allocation2 + $0xa1] sm:$0x1] %vm289, 0.0
        %315 = vst.msk [vmem:[#allocation2 + $0xb9] sm:$0x1] %vm289, 0.0
        %316 = vst.msk [vmem:[#allocation2 + $0xd1] sm:$0x1] %vm289, 0.0
        %317 = vst.msk [vmem:[#allocation2 + $0xe9] sm:$0x1] %vm289, 0.0
        %318 = vst.msk [vmem:[#allocation2 + $0x101] sm:$0x1] %vm289, 0.0
        %319 = vst.msk [vmem:[#allocation2 + $0x119] sm:$0x1] %vm289, 0.0
        %320 = vst.msk [vmem:[#allocation2 + $0x131] sm:$0x1] %vm289, 0.0
        %321 = vst.msk [vmem:[#allocation2 + $0x149] sm:$0x1] %vm289, 0.0
        %322 = vst.msk [vmem:[#allocation2 + $0x161] sm:$0x1] %vm289, 0.0
        %323 = vst.msk [vmem:[#allocation2 + $0x179] sm:$0x1] %vm289, 0.0
        %324 = vst.msk [vmem:[#allocation2 + $0x191] sm:$0x1] %vm289, 0.0
        %325 = vst.msk [vmem:[#allocation2 + $0x1a9] sm:$0x1] %vm289, 0.0
        %s326 = scalar_lea.vmem [#allocation2], 24
        %327 = vst.msk [vmem:[%s326 + $0x1] sm:$0xff] %vm280, %v248
        %328 = vst.msk [vmem:[%s326 + $0x9] sm:$0xff] %vm280, %v249
        %329 = vst.msk [vmem:[%s326 + $0x19] sm:$0xff] %vm280, %v250
        %330 = vst.msk [vmem:[%s326 + $0x21] sm:$0xff] %vm280, %v251
        %331 = vst.msk [vmem:[%s326 + $0x31] sm:$0xff] %vm280, %v252
        %332 = vst.msk [vmem:[%s326 + $0x39] sm:$0xff] %vm280, %v253
        %333 = vst.msk [vmem:[%s326 + $0x49] sm:$0xff] %vm280, %v254
        %334 = vst.msk [vmem:[%s326 + $0x51] sm:$0xff] %vm280, %v255
        %335 = vst.msk [vmem:[%s326 + $0x61] sm:$0xff] %vm280, %v256
        %336 = vst.msk [vmem:[%s326 + $0x69] sm:$0xff] %vm280, %v257
        %337 = vst.msk [vmem:[%s326 + $0x79] sm:$0xff] %vm280, %v258
        %338 = vst.msk [vmem:[%s326 + $0x81] sm:$0xff] %vm280, %v259
        %339 = vst.msk [vmem:[%s326 + $0x91] sm:$0xff] %vm280, %v260
        %340 = vst.msk [vmem:[%s326 + $0x99] sm:$0xff] %vm280, %v261
        %341 = vst.msk [vmem:[%s326 + $0xa9] sm:$0xff] %vm280, %v262
        %342 = vst.msk [vmem:[%s326 + $0xb1] sm:$0xff] %vm280, %v263
        %343 = vst.msk [vmem:[%s326 + $0xc1] sm:$0xff] %vm280, %v264
        %344 = vst.msk [vmem:[%s326 + $0xc9] sm:$0xff] %vm280, %v265
        %345 = vst.msk [vmem:[%s326 + $0xd9] sm:$0xff] %vm280, %v266
        %346 = vst.msk [vmem:[%s326 + $0xe1] sm:$0xff] %vm280, %v267
        %347 = vst.msk [vmem:[%s326 + $0xf1] sm:$0xff] %vm280, %v268
        %348 = vst.msk [vmem:[%s326 + $0xf9] sm:$0xff] %vm280, %v269
        %349 = vst.msk [vmem:[%s326 + $0x109] sm:$0xff] %vm280, %v270
        %350 = vst.msk [vmem:[%s326 + $0x111] sm:$0xff] %vm280, %v271
        %351 = vst.msk [vmem:[%s326 + $0x121] sm:$0xff] %vm280, %v272
        %352 = vst.msk [vmem:[%s326 + $0x129] sm:$0xff] %vm280, %v273
        %353 = vst.msk [vmem:[%s326 + $0x139] sm:$0xff] %vm280, %v274
        %354 = vst.msk [vmem:[%s326 + $0x141] sm:$0xff] %vm280, %v275
        %355 = vst.msk [vmem:[%s326 + $0x151] sm:$0xff] %vm280, %v276
        %356 = vst.msk [vmem:[%s326 + $0x159] sm:$0xff] %vm280, %v277
        %357 = vst.msk [vmem:[%s326 + $0x169] sm:$0xff] %vm280, %v278
        %358 = vst.msk [vmem:[%s326 + $0x171] sm:$0xff] %vm280, %v279
        %v359 = vld [vmem:[#allocation2] sm:$0xff]
        %v360 = vld [vmem:[#allocation2 + $0x8] sm:$0xff]
        %v361 = vld [vmem:[#allocation2 + $0x18] sm:$0xff]
        %v362 = vld [vmem:[#allocation2 + $0x20] sm:$0xff]
        %v363 = vld [vmem:[#allocation2 + $0x30] sm:$0xff]
        %v364 = vld [vmem:[#allocation2 + $0x38] sm:$0xff]
        %v365 = vld [vmem:[#allocation2 + $0x48] sm:$0xff]
        %v366 = vld [vmem:[#allocation2 + $0x50] sm:$0xff]
        %v367 = vld [vmem:[#allocation2 + $0x60] sm:$0xff]
        %v368 = vld [vmem:[#allocation2 + $0x68] sm:$0xff]
        %v369 = vld [vmem:[#allocation2 + $0x78] sm:$0xff]
        %v370 = vld [vmem:[#allocation2 + $0x80] sm:$0xff]
        %v371 = vld [vmem:[#allocation2 + $0x90] sm:$0xff]
        %v372 = vld [vmem:[#allocation2 + $0x98] sm:$0xff]
        %v373 = vld [vmem:[#allocation2 + $0xa8] sm:$0xff]
        %v374 = vld [vmem:[#allocation2 + $0xb0] sm:$0xff]
        %v375 = vld [vmem:[#allocation2 + $0xc0] sm:$0xff]
        %v376 = vld [vmem:[#allocation2 + $0xc8] sm:$0xff]
        %v377 = vld [vmem:[#allocation2 + $0xd8] sm:$0xff]
        %v378 = vld [vmem:[#allocation2 + $0xe0] sm:$0xff]
        %v379 = vld [vmem:[#allocation2 + $0xf0] sm:$0xff]
        %v380 = vld [vmem:[#allocation2 + $0xf8] sm:$0xff]
        %v381 = vld [vmem:[#allocation2 + $0x108] sm:$0xff]
        %v382 = vld [vmem:[#allocation2 + $0x110] sm:$0xff]
        %v383 = vld [vmem:[#allocation2 + $0x120] sm:$0xff]
        %v384 = vld [vmem:[#allocation2 + $0x128] sm:$0xff]
        %v385 = vld [vmem:[#allocation2 + $0x138] sm:$0xff]
        %v386 = vld [vmem:[#allocation2 + $0x140] sm:$0xff]
        %v387 = vld [vmem:[#allocation2 + $0x150] sm:$0xff]
        %v388 = vld [vmem:[#allocation2 + $0x158] sm:$0xff]
        %v389 = vld [vmem:[#allocation2 + $0x168] sm:$0xff]
        %v390 = vld [vmem:[#allocation2 + $0x170] sm:$0xff]
        %391 = vst.msk [vmem:[#allocation3] sm:$0xff] %vm280, %v359
        %392 = vst.msk [vmem:[#allocation3 + $0x8] sm:$0xff] %vm280, %v360
        %393 = vst.msk [vmem:[#allocation3 + $0x10] sm:$0xff] %vm280, %v361
        %394 = vst.msk [vmem:[#allocation3 + $0x18] sm:$0xff] %vm280, %v362
        %395 = vst.msk [vmem:[#allocation3 + $0x20] sm:$0xff] %vm280, %v363
        %396 = vst.msk [vmem:[#allocation3 + $0x28] sm:$0xff] %vm280, %v364
        %397 = vst.msk [vmem:[#allocation3 + $0x30] sm:$0xff] %vm280, %v365
        %398 = vst.msk [vmem:[#allocation3 + $0x38] sm:$0xff] %vm280, %v366
        %399 = vst.msk [vmem:[#allocation3 + $0x40] sm:$0xff] %vm280, %v367
        %400 = vst.msk [vmem:[#allocation3 + $0x48] sm:$0xff] %vm280, %v368
        %401 = vst.msk [vmem:[#allocation3 + $0x50] sm:$0xff] %vm280, %v369
        %402 = vst.msk [vmem:[#allocation3 + $0x58] sm:$0xff] %vm280, %v370
        %403 = vst.msk [vmem:[#allocation3 + $0x60] sm:$0xff] %vm280, %v371
        %404 = vst.msk [vmem:[#allocation3 + $0x68] sm:$0xff] %vm280, %v372
        %405 = vst.msk [vmem:[#allocation3 + $0x70] sm:$0xff] %vm280, %v373
        %406 = vst.msk [vmem:[#allocation3 + $0x78] sm:$0xff] %vm280, %v374
        %407 = vst.msk [vmem:[#allocation3 + $0x80] sm:$0xff] %vm280, %v375
        %408 = vst.msk [vmem:[#allocation3 + $0x88] sm:$0xff] %vm280, %v376
        %409 = vst.msk [vmem:[#allocation3 + $0x90] sm:$0xff] %vm280, %v377
        %410 = vst.msk [vmem:[#allocation3 + $0x98] sm:$0xff] %vm280, %v378
        %411 = vst.msk [vmem:[#allocation3 + $0xa0] sm:$0xff] %vm280, %v379
        %412 = vst.msk [vmem:[#allocation3 + $0xa8] sm:$0xff] %vm280, %v380
        %413 = vst.msk [vmem:[#allocation3 + $0xb0] sm:$0xff] %vm280, %v381
        %414 = vst.msk [vmem:[#allocation3 + $0xb8] sm:$0xff] %vm280, %v382
        %415 = vst.msk [vmem:[#allocation3 + $0xc0] sm:$0xff] %vm280, %v383
        %416 = vst.msk [vmem:[#allocation3 + $0xc8] sm:$0xff] %vm280, %v384
        %417 = vst.msk [vmem:[#allocation3 + $0xd0] sm:$0xff] %vm280, %v385
        %418 = vst.msk [vmem:[#allocation3 + $0xd8] sm:$0xff] %vm280, %v386
        %419 = vst.msk [vmem:[#allocation3 + $0xe0] sm:$0xff] %vm280, %v387
        %420 = vst.msk [vmem:[#allocation3 + $0xe8] sm:$0xff] %vm280, %v388
        %421 = vst.msk [vmem:[#allocation3 + $0xf0] sm:$0xff] %vm280, %v389
        %422 = vst.msk [vmem:[#allocation3 + $0xf8] sm:$0xff] %vm280, %v390
        %v423 = vld [vmem:[#allocation2 + $0x1] sm:$0xff]
        %v424 = vld [vmem:[#allocation2 + $0x9] sm:$0xff]
        %v425 = vld [vmem:[#allocation2 + $0x19] sm:$0xff]
        %v426 = vld [vmem:[#allocation2 + $0x21] sm:$0xff]
        %v427 = vld [vmem:[#allocation2 + $0x31] sm:$0xff]
        %v428 = vld [vmem:[#allocation2 + $0x39] sm:$0xff]
        %v429 = vld [vmem:[#allocation2 + $0x49] sm:$0xff]
        %v430 = vld [vmem:[#allocation2 + $0x51] sm:$0xff]
        %v431 = vld [vmem:[#allocation2 + $0x61] sm:$0xff]
        %v432 = vld [vmem:[#allocation2 + $0x69] sm:$0xff]
        %v433 = vld [vmem:[#allocation2 + $0x79] sm:$0xff]
        %v434 = vld [vmem:[#allocation2 + $0x81] sm:$0xff]
        %v435 = vld [vmem:[#allocation2 + $0x91] sm:$0xff]
        %v436 = vld [vmem:[#allocation2 + $0x99] sm:$0xff]
        %v437 = vld [vmem:[#allocation2 + $0xa9] sm:$0xff]
        %v438 = vld [vmem:[#allocation2 + $0xb1] sm:$0xff]
        %v439 = vld [vmem:[#allocation2 + $0xc1] sm:$0xff]
        %v440 = vld [vmem:[#allocation2 + $0xc9] sm:$0xff]
        %v441 = vld [vmem:[#allocation2 + $0xd9] sm:$0xff]
        %v442 = vld [vmem:[#allocation2 + $0xe1] sm:$0xff]
        %v443 = vld [vmem:[#allocation2 + $0xf1] sm:$0xff]
        %v444 = vld [vmem:[#allocation2 + $0xf9] sm:$0xff]
        %v445 = vld [vmem:[#allocation2 + $0x109] sm:$0xff]
        %v446 = vld [vmem:[#allocation2 + $0x111] sm:$0xff]
        %v447 = vld [vmem:[#allocation2 + $0x121] sm:$0xff]
        %v448 = vld [vmem:[#allocation2 + $0x129] sm:$0xff]
        %v449 = vld [vmem:[#allocation2 + $0x139] sm:$0xff]
        %v450 = vld [vmem:[#allocation2 + $0x141] sm:$0xff]
        %v451 = vld [vmem:[#allocation2 + $0x151] sm:$0xff]
        %v452 = vld [vmem:[#allocation2 + $0x159] sm:$0xff]
        %v453 = vld [vmem:[#allocation2 + $0x169] sm:$0xff]
        %v454 = vld [vmem:[#allocation2 + $0x171] sm:$0xff]
        %487 = vrot.lane.b32.xlu0 %v423, 4
        %v488 = vpop.permute.xlu0 %487
        %489 = vrot.lane.b32.xlu0 %v424, 4
        %v490 = vpop.permute.xlu0 %489
        %491 = vrot.lane.b32.xlu0 %v425, 4
        %v492 = vpop.permute.xlu0 %491
        %493 = vrot.lane.b32.xlu0 %v426, 4
        %v494 = vpop.permute.xlu0 %493
        %495 = vrot.lane.b32.xlu0 %v427, 4
        %v496 = vpop.permute.xlu0 %495
        %497 = vrot.lane.b32.xlu0 %v428, 4
        %v498 = vpop.permute.xlu0 %497
        %499 = vrot.lane.b32.xlu0 %v429, 4
        %v500 = vpop.permute.xlu0 %499
        %501 = vrot.lane.b32.xlu0 %v430, 4
        %v502 = vpop.permute.xlu0 %501
        %503 = vrot.lane.b32.xlu0 %v431, 4
        %v504 = vpop.permute.xlu0 %503
        %505 = vrot.lane.b32.xlu0 %v432, 4
        %v506 = vpop.permute.xlu0 %505
        %507 = vrot.lane.b32.xlu0 %v433, 4
        %v508 = vpop.permute.xlu0 %507
        %509 = vrot.lane.b32.xlu0 %v434, 4
        %v510 = vpop.permute.xlu0 %509
        %511 = vrot.lane.b32.xlu0 %v435, 4
        %v512 = vpop.permute.xlu0 %511
        %513 = vrot.lane.b32.xlu0 %v436, 4
        %v514 = vpop.permute.xlu0 %513
        %515 = vrot.lane.b32.xlu0 %v437, 4
        %v516 = vpop.permute.xlu0 %515
        %517 = vrot.lane.b32.xlu0 %v438, 4
        %v518 = vpop.permute.xlu0 %517
        %519 = vrot.lane.b32.xlu0 %v439, 4
        %v520 = vpop.permute.xlu0 %519
        %521 = vrot.lane.b32.xlu0 %v440, 4
        %v522 = vpop.permute.xlu0 %521
        %523 = vrot.lane.b32.xlu0 %v441, 4
        %v524 = vpop.permute.xlu0 %523
        %525 = vrot.lane.b32.xlu0 %v442, 4
        %v526 = vpop.permute.xlu0 %525
        %527 = vrot.lane.b32.xlu0 %v443, 4
        %v528 = vpop.permute.xlu0 %527
        %529 = vrot.lane.b32.xlu0 %v444, 4
        %v530 = vpop.permute.xlu0 %529
        %531 = vrot.lane.b32.xlu0 %v445, 4
        %v532 = vpop.permute.xlu0 %531
        %533 = vrot.lane.b32.xlu0 %v446, 4
        %v534 = vpop.permute.xlu0 %533
        %535 = vrot.lane.b32.xlu0 %v447, 4
        %v536 = vpop.permute.xlu0 %535
        %537 = vrot.lane.b32.xlu0 %v448, 4
        %v538 = vpop.permute.xlu0 %537
        %539 = vrot.lane.b32.xlu0 %v449, 4
        %v540 = vpop.permute.xlu0 %539
        %541 = vrot.lane.b32.xlu0 %v450, 4
        %v542 = vpop.permute.xlu0 %541
        %543 = vrot.lane.b32.xlu0 %v451, 4
        %v544 = vpop.permute.xlu0 %543
        %545 = vrot.lane.b32.xlu0 %v452, 4
        %v546 = vpop.permute.xlu0 %545
        %547 = vrot.lane.b32.xlu0 %v453, 4
        %v548 = vpop.permute.xlu0 %547
        %549 = vrot.lane.b32.xlu0 %v454, 4
        %v550 = vpop.permute.xlu0 %549
        %vm583 = vcmask 64544
        %584 = vst.msk [vmem:[#allocation3] sm:$0xff] %vm583, %v488
        %585 = vst.msk [vmem:[#allocation3 + $0x8] sm:$0xff] %vm583, %v490
        %586 = vst.msk [vmem:[#allocation3 + $0x10] sm:$0xff] %vm583, %v492
        %587 = vst.msk [vmem:[#allocation3 + $0x18] sm:$0xff] %vm583, %v494
        %588 = vst.msk [vmem:[#allocation3 + $0x20] sm:$0xff] %vm583, %v496
        %589 = vst.msk [vmem:[#allocation3 + $0x28] sm:$0xff] %vm583, %v498
        %590 = vst.msk [vmem:[#allocation3 + $0x30] sm:$0xff] %vm583, %v500
        %591 = vst.msk [vmem:[#allocation3 + $0x38] sm:$0xff] %vm583, %v502
        %592 = vst.msk [vmem:[#allocation3 + $0x40] sm:$0xff] %vm583, %v504
        %593 = vst.msk [vmem:[#allocation3 + $0x48] sm:$0xff] %vm583, %v506
        %594 = vst.msk [vmem:[#allocation3 + $0x50] sm:$0xff] %vm583, %v508
        %595 = vst.msk [vmem:[#allocation3 + $0x58] sm:$0xff] %vm583, %v510
        %596 = vst.msk [vmem:[#allocation3 + $0x60] sm:$0xff] %vm583, %v512
        %597 = vst.msk [vmem:[#allocation3 + $0x68] sm:$0xff] %vm583, %v514
        %598 = vst.msk [vmem:[#allocation3 + $0x70] sm:$0xff] %vm583, %v516
        %599 = vst.msk [vmem:[#allocation3 + $0x78] sm:$0xff] %vm583, %v518
        %600 = vst.msk [vmem:[#allocation3 + $0x80] sm:$0xff] %vm583, %v520
        %601 = vst.msk [vmem:[#allocation3 + $0x88] sm:$0xff] %vm583, %v522
        %602 = vst.msk [vmem:[#allocation3 + $0x90] sm:$0xff] %vm583, %v524
        %603 = vst.msk [vmem:[#allocation3 + $0x98] sm:$0xff] %vm583, %v526
        %604 = vst.msk [vmem:[#allocation3 + $0xa0] sm:$0xff] %vm583, %v528
        %605 = vst.msk [vmem:[#allocation3 + $0xa8] sm:$0xff] %vm583, %v530
        %606 = vst.msk [vmem:[#allocation3 + $0xb0] sm:$0xff] %vm583, %v532
        %607 = vst.msk [vmem:[#allocation3 + $0xb8] sm:$0xff] %vm583, %v534
        %608 = vst.msk [vmem:[#allocation3 + $0xc0] sm:$0xff] %vm583, %v536
        %609 = vst.msk [vmem:[#allocation3 + $0xc8] sm:$0xff] %vm583, %v538
        %610 = vst.msk [vmem:[#allocation3 + $0xd0] sm:$0xff] %vm583, %v540
        %611 = vst.msk [vmem:[#allocation3 + $0xd8] sm:$0xff] %vm583, %v542
        %612 = vst.msk [vmem:[#allocation3 + $0xe0] sm:$0xff] %vm583, %v544
        %613 = vst.msk [vmem:[#allocation3 + $0xe8] sm:$0xff] %vm583, %v546
        %614 = vst.msk [vmem:[#allocation3 + $0xf0] sm:$0xff] %vm583, %v548
        %615 = vst.msk [vmem:[#allocation3 + $0xf8] sm:$0xff] %vm583, %v550
        %v616 = vld [vmem:[#allocation2 + $0x2] sm:$0xff]
        %v617 = vld [vmem:[#allocation2 + $0xa] sm:$0xff]
        %v618 = vld [vmem:[#allocation2 + $0x1a] sm:$0xff]
        %v619 = vld [vmem:[#allocation2 + $0x22] sm:$0xff]
        %v620 = vld [vmem:[#allocation2 + $0x32] sm:$0xff]
        %v621 = vld [vmem:[#allocation2 + $0x3a] sm:$0xff]
        %v622 = vld [vmem:[#allocation2 + $0x4a] sm:$0xff]
        %v623 = vld [vmem:[#allocation2 + $0x52] sm:$0xff]
        %v624 = vld [vmem:[#allocation2 + $0x62] sm:$0xff]
        %v625 = vld [vmem:[#allocation2 + $0x6a] sm:$0xff]
        %v626 = vld [vmem:[#allocation2 + $0x7a] sm:$0xff]
        %v627 = vld [vmem:[#allocation2 + $0x82] sm:$0xff]
        %v628 = vld [vmem:[#allocation2 + $0x92] sm:$0xff]
        %v629 = vld [vmem:[#allocation2 + $0x9a] sm:$0xff]
        %v630 = vld [vmem:[#allocation2 + $0xaa] sm:$0xff]
        %v631 = vld [vmem:[#allocation2 + $0xb2] sm:$0xff]
        %v632 = vld [vmem:[#allocation2 + $0xc2] sm:$0xff]
        %v633 = vld [vmem:[#allocation2 + $0xca] sm:$0xff]
        %v634 = vld [vmem:[#allocation2 + $0xda] sm:$0xff]
        %v635 = vld [vmem:[#allocation2 + $0xe2] sm:$0xff]
        %v636 = vld [vmem:[#allocation2 + $0xf2] sm:$0xff]
        %v637 = vld [vmem:[#allocation2 + $0xfa] sm:$0xff]
        %v638 = vld [vmem:[#allocation2 + $0x10a] sm:$0xff]
        %v639 = vld [vmem:[#allocation2 + $0x112] sm:$0xff]
        %v640 = vld [vmem:[#allocation2 + $0x122] sm:$0xff]
        %v641 = vld [vmem:[#allocation2 + $0x12a] sm:$0xff]
        %v642 = vld [vmem:[#allocation2 + $0x13a] sm:$0xff]
        %v643 = vld [vmem:[#allocation2 + $0x142] sm:$0xff]
        %v644 = vld [vmem:[#allocation2 + $0x152] sm:$0xff]
        %v645 = vld [vmem:[#allocation2 + $0x15a] sm:$0xff]
        %v646 = vld [vmem:[#allocation2 + $0x16a] sm:$0xff]
        %v647 = vld [vmem:[#allocation2 + $0x172] sm:$0xff]
        %680 = vrot.lane.b32.xlu0 %v616, 8
        %v681 = vpop.permute.xlu0 %680
        %682 = vrot.lane.b32.xlu0 %v617, 8
        %v683 = vpop.permute.xlu0 %682
        %684 = vrot.lane.b32.xlu0 %v618, 8
        %v685 = vpop.permute.xlu0 %684
        %686 = vrot.lane.b32.xlu0 %v619, 8
        %v687 = vpop.permute.xlu0 %686
        %688 = vrot.lane.b32.xlu0 %v620, 8
        %v689 = vpop.permute.xlu0 %688
        %690 = vrot.lane.b32.xlu0 %v621, 8
        %v691 = vpop.permute.xlu0 %690
        %692 = vrot.lane.b32.xlu0 %v622, 8
        %v693 = vpop.permute.xlu0 %692
        %694 = vrot.lane.b32.xlu0 %v623, 8
        %v695 = vpop.permute.xlu0 %694
        %696 = vrot.lane.b32.xlu0 %v624, 8
        %v697 = vpop.permute.xlu0 %696
        %698 = vrot.lane.b32.xlu0 %v625, 8
        %v699 = vpop.permute.xlu0 %698
        %700 = vrot.lane.b32.xlu0 %v626, 8
        %v701 = vpop.permute.xlu0 %700
        %702 = vrot.lane.b32.xlu0 %v627, 8
        %v703 = vpop.permute.xlu0 %702
        %704 = vrot.lane.b32.xlu0 %v628, 8
        %v705 = vpop.permute.xlu0 %704
        %706 = vrot.lane.b32.xlu0 %v629, 8
        %v707 = vpop.permute.xlu0 %706
        %708 = vrot.lane.b32.xlu0 %v630, 8
        %v709 = vpop.permute.xlu0 %708
        %710 = vrot.lane.b32.xlu0 %v631, 8
        %v711 = vpop.permute.xlu0 %710
        %712 = vrot.lane.b32.xlu0 %v632, 8
        %v713 = vpop.permute.xlu0 %712
        %714 = vrot.lane.b32.xlu0 %v633, 8
        %v715 = vpop.permute.xlu0 %714
        %716 = vrot.lane.b32.xlu0 %v634, 8
        %v717 = vpop.permute.xlu0 %716
        %718 = vrot.lane.b32.xlu0 %v635, 8
        %v719 = vpop.permute.xlu0 %718
        %720 = vrot.lane.b32.xlu0 %v636, 8
        %v721 = vpop.permute.xlu0 %720
        %722 = vrot.lane.b32.xlu0 %v637, 8
        %v723 = vpop.permute.xlu0 %722
        %724 = vrot.lane.b32.xlu0 %v638, 8
        %v725 = vpop.permute.xlu0 %724
        %726 = vrot.lane.b32.xlu0 %v639, 8
        %v727 = vpop.permute.xlu0 %726
        %728 = vrot.lane.b32.xlu0 %v640, 8
        %v729 = vpop.permute.xlu0 %728
        %730 = vrot.lane.b32.xlu0 %v641, 8
        %v731 = vpop.permute.xlu0 %730
        %732 = vrot.lane.b32.xlu0 %v642, 8
        %v733 = vpop.permute.xlu0 %732
        %734 = vrot.lane.b32.xlu0 %v643, 8
        %v735 = vpop.permute.xlu0 %734
        %736 = vrot.lane.b32.xlu0 %v644, 8
        %v737 = vpop.permute.xlu0 %736
        %738 = vrot.lane.b32.xlu0 %v645, 8
        %v739 = vpop.permute.xlu0 %738
        %740 = vrot.lane.b32.xlu0 %v646, 8
        %v741 = vpop.permute.xlu0 %740
        %742 = vrot.lane.b32.xlu0 %v647, 8
        %v743 = vpop.permute.xlu0 %742
        %vm776 = vcmask 97344
        %777 = vst.msk [vmem:[#allocation3] sm:$0xff] %vm776, %v681
        %778 = vst.msk [vmem:[#allocation3 + $0x8] sm:$0xff] %vm776, %v683
        %779 = vst.msk [vmem:[#allocation3 + $0x10] sm:$0xff] %vm776, %v685
        %780 = vst.msk [vmem:[#allocation3 + $0x18] sm:$0xff] %vm776, %v687
        %781 = vst.msk [vmem:[#allocation3 + $0x20] sm:$0xff] %vm776, %v689
        %782 = vst.msk [vmem:[#allocation3 + $0x28] sm:$0xff] %vm776, %v691
        %783 = vst.msk [vmem:[#allocation3 + $0x30] sm:$0xff] %vm776, %v693
        %784 = vst.msk [vmem:[#allocation3 + $0x38] sm:$0xff] %vm776, %v695
        %785 = vst.msk [vmem:[#allocation3 + $0x40] sm:$0xff] %vm776, %v697
        %786 = vst.msk [vmem:[#allocation3 + $0x48] sm:$0xff] %vm776, %v699
        %787 = vst.msk [vmem:[#allocation3 + $0x50] sm:$0xff] %vm776, %v701
        %788 = vst.msk [vmem:[#allocation3 + $0x58] sm:$0xff] %vm776, %v703
        %789 = vst.msk [vmem:[#allocation3 + $0x60] sm:$0xff] %vm776, %v705
        %790 = vst.msk [vmem:[#allocation3 + $0x68] sm:$0xff] %vm776, %v707
        %791 = vst.msk [vmem:[#allocation3 + $0x70] sm:$0xff] %vm776, %v709
        %792 = vst.msk [vmem:[#allocation3 + $0x78] sm:$0xff] %vm776, %v711
        %793 = vst.msk [vmem:[#allocation3 + $0x80] sm:$0xff] %vm776, %v713
        %794 = vst.msk [vmem:[#allocation3 + $0x88] sm:$0xff] %vm776, %v715
        %795 = vst.msk [vmem:[#allocation3 + $0x90] sm:$0xff] %vm776, %v717
        %796 = vst.msk [vmem:[#allocation3 + $0x98] sm:$0xff] %vm776, %v719
        %797 = vst.msk [vmem:[#allocation3 + $0xa0] sm:$0xff] %vm776, %v721
        %798 = vst.msk [vmem:[#allocation3 + $0xa8] sm:$0xff] %vm776, %v723
        %799 = vst.msk [vmem:[#allocation3 + $0xb0] sm:$0xff] %vm776, %v725
        %800 = vst.msk [vmem:[#allocation3 + $0xb8] sm:$0xff] %vm776, %v727
        %801 = vst.msk [vmem:[#allocation3 + $0xc0] sm:$0xff] %vm776, %v729
        %802 = vst.msk [vmem:[#allocation3 + $0xc8] sm:$0xff] %vm776, %v731
        %803 = vst.msk [vmem:[#allocation3 + $0xd0] sm:$0xff] %vm776, %v733
        %804 = vst.msk [vmem:[#allocation3 + $0xd8] sm:$0xff] %vm776, %v735
        %805 = vst.msk [vmem:[#allocation3 + $0xe0] sm:$0xff] %vm776, %v737
        %806 = vst.msk [vmem:[#allocation3 + $0xe8] sm:$0xff] %vm776, %v739
        %807 = vst.msk [vmem:[#allocation3 + $0xf0] sm:$0xff] %vm776, %v741
        %808 = vst.msk [vmem:[#allocation3 + $0xf8] sm:$0xff] %vm776, %v743
        %v809 = vld [vmem:[%s326] sm:$0xff]
        %v810 = vld [vmem:[%s326 + $0x8] sm:$0xff]
        %v811 = vld [vmem:[%s326 + $0x18] sm:$0xff]
        %v812 = vld [vmem:[%s326 + $0x20] sm:$0xff]
        %v813 = vld [vmem:[%s326 + $0x30] sm:$0xff]
        %v814 = vld [vmem:[%s326 + $0x38] sm:$0xff]
        %v815 = vld [vmem:[%s326 + $0x48] sm:$0xff]
        %v816 = vld [vmem:[%s326 + $0x50] sm:$0xff]
        %v817 = vld [vmem:[%s326 + $0x60] sm:$0xff]
        %v818 = vld [vmem:[%s326 + $0x68] sm:$0xff]
        %v819 = vld [vmem:[%s326 + $0x78] sm:$0xff]
        %v820 = vld [vmem:[%s326 + $0x80] sm:$0xff]
        %v821 = vld [vmem:[%s326 + $0x90] sm:$0xff]
        %v822 = vld [vmem:[%s326 + $0x98] sm:$0xff]
        %v823 = vld [vmem:[%s326 + $0xa8] sm:$0xff]
        %v824 = vld [vmem:[%s326 + $0xb0] sm:$0xff]
        %v825 = vld [vmem:[%s326 + $0xc0] sm:$0xff]
        %v826 = vld [vmem:[%s326 + $0xc8] sm:$0xff]
        %v827 = vld [vmem:[%s326 + $0xd8] sm:$0xff]
        %v828 = vld [vmem:[%s326 + $0xe0] sm:$0xff]
        %v829 = vld [vmem:[%s326 + $0xf0] sm:$0xff]
        %v830 = vld [vmem:[%s326 + $0xf8] sm:$0xff]
        %v831 = vld [vmem:[%s326 + $0x108] sm:$0xff]
        %v832 = vld [vmem:[%s326 + $0x110] sm:$0xff]
        %v833 = vld [vmem:[%s326 + $0x120] sm:$0xff]
        %v834 = vld [vmem:[%s326 + $0x128] sm:$0xff]
        %v835 = vld [vmem:[%s326 + $0x138] sm:$0xff]
        %v836 = vld [vmem:[%s326 + $0x140] sm:$0xff]
        %v837 = vld [vmem:[%s326 + $0x150] sm:$0xff]
        %v838 = vld [vmem:[%s326 + $0x158] sm:$0xff]
        %v839 = vld [vmem:[%s326 + $0x168] sm:$0xff]
        %v840 = vld [vmem:[%s326 + $0x170] sm:$0xff]
        %873 = vrot.lane.b32.xlu0 %v809, 12
        %v874 = vpop.permute.xlu0 %873
        %875 = vrot.lane.b32.xlu0 %v810, 12
        %v876 = vpop.permute.xlu0 %875
        %877 = vrot.lane.b32.xlu0 %v811, 12
        %v878 = vpop.permute.xlu0 %877
        %879 = vrot.lane.b32.xlu0 %v812, 12
        %v880 = vpop.permute.xlu0 %879
        %881 = vrot.lane.b32.xlu0 %v813, 12
        %v882 = vpop.permute.xlu0 %881
        %883 = vrot.lane.b32.xlu0 %v814, 12
        %v884 = vpop.permute.xlu0 %883
        %885 = vrot.lane.b32.xlu0 %v815, 12
        %v886 = vpop.permute.xlu0 %885
        %887 = vrot.lane.b32.xlu0 %v816, 12
        %v888 = vpop.permute.xlu0 %887
        %889 = vrot.lane.b32.xlu0 %v817, 12
        %v890 = vpop.permute.xlu0 %889
        %891 = vrot.lane.b32.xlu0 %v818, 12
        %v892 = vpop.permute.xlu0 %891
        %893 = vrot.lane.b32.xlu0 %v819, 12
        %v894 = vpop.permute.xlu0 %893
        %895 = vrot.lane.b32.xlu0 %v820, 12
        %v896 = vpop.permute.xlu0 %895
        %897 = vrot.lane.b32.xlu0 %v821, 12
        %v898 = vpop.permute.xlu0 %897
        %899 = vrot.lane.b32.xlu0 %v822, 12
        %v900 = vpop.permute.xlu0 %899
        %901 = vrot.lane.b32.xlu0 %v823, 12
        %v902 = vpop.permute.xlu0 %901
        %903 = vrot.lane.b32.xlu0 %v824, 12
        %v904 = vpop.permute.xlu0 %903
        %905 = vrot.lane.b32.xlu0 %v825, 12
        %v906 = vpop.permute.xlu0 %905
        %907 = vrot.lane.b32.xlu0 %v826, 12
        %v908 = vpop.permute.xlu0 %907
        %909 = vrot.lane.b32.xlu0 %v827, 12
        %v910 = vpop.permute.xlu0 %909
        %911 = vrot.lane.b32.xlu0 %v828, 12
        %v912 = vpop.permute.xlu0 %911
        %913 = vrot.lane.b32.xlu0 %v829, 12
        %v914 = vpop.permute.xlu0 %913
        %915 = vrot.lane.b32.xlu0 %v830, 12
        %v916 = vpop.permute.xlu0 %915
        %917 = vrot.lane.b32.xlu0 %v831, 12
        %v918 = vpop.permute.xlu0 %917
        %919 = vrot.lane.b32.xlu0 %v832, 12
        %v920 = vpop.permute.xlu0 %919
        %921 = vrot.lane.b32.xlu0 %v833, 12
        %v922 = vpop.permute.xlu0 %921
        %923 = vrot.lane.b32.xlu0 %v834, 12
        %v924 = vpop.permute.xlu0 %923
        %925 = vrot.lane.b32.xlu0 %v835, 12
        %v926 = vpop.permute.xlu0 %925
        %927 = vrot.lane.b32.xlu0 %v836, 12
        %v928 = vpop.permute.xlu0 %927
        %929 = vrot.lane.b32.xlu0 %v837, 12
        %v930 = vpop.permute.xlu0 %929
        %931 = vrot.lane.b32.xlu0 %v838, 12
        %v932 = vpop.permute.xlu0 %931
        %933 = vrot.lane.b32.xlu0 %v839, 12
        %v934 = vpop.permute.xlu0 %933
        %935 = vrot.lane.b32.xlu0 %v840, 12
        %v936 = vpop.permute.xlu0 %935
        %vm969 = vcmask 130144
        %970 = vst.msk [vmem:[#allocation3] sm:$0xff] %vm969, %v874
        %971 = vst.msk [vmem:[#allocation3 + $0x8] sm:$0xff] %vm969, %v876
        %972 = vst.msk [vmem:[#allocation3 + $0x10] sm:$0xff] %vm969, %v878
        %973 = vst.msk [vmem:[#allocation3 + $0x18] sm:$0xff] %vm969, %v880
        %974 = vst.msk [vmem:[#allocation3 + $0x20] sm:$0xff] %vm969, %v882
        %975 = vst.msk [vmem:[#allocation3 + $0x28] sm:$0xff] %vm969, %v884
        %976 = vst.msk [vmem:[#allocation3 + $0x30] sm:$0xff] %vm969, %v886
        %977 = vst.msk [vmem:[#allocation3 + $0x38] sm:$0xff] %vm969, %v888
        %978 = vst.msk [vmem:[#allocation3 + $0x40] sm:$0xff] %vm969, %v890
        %979 = vst.msk [vmem:[#allocation3 + $0x48] sm:$0xff] %vm969, %v892
        %980 = vst.msk [vmem:[#allocation3 + $0x50] sm:$0xff] %vm969, %v894
        %981 = vst.msk [vmem:[#allocation3 + $0x58] sm:$0xff] %vm969, %v896
        %982 = vst.msk [vmem:[#allocation3 + $0x60] sm:$0xff] %vm969, %v898
        %983 = vst.msk [vmem:[#allocation3 + $0x68] sm:$0xff] %vm969, %v900
        %984 = vst.msk [vmem:[#allocation3 + $0x70] sm:$0xff] %vm969, %v902
        %985 = vst.msk [vmem:[#allocation3 + $0x78] sm:$0xff] %vm969, %v904
        %986 = vst.msk [vmem:[#allocation3 + $0x80] sm:$0xff] %vm969, %v906
        %987 = vst.msk [vmem:[#allocation3 + $0x88] sm:$0xff] %vm969, %v908
        %988 = vst.msk [vmem:[#allocation3 + $0x90] sm:$0xff] %vm969, %v910
        %989 = vst.msk [vmem:[#allocation3 + $0x98] sm:$0xff] %vm969, %v912
        %990 = vst.msk [vmem:[#allocation3 + $0xa0] sm:$0xff] %vm969, %v914
        %991 = vst.msk [vmem:[#allocation3 + $0xa8] sm:$0xff] %vm969, %v916
        %992 = vst.msk [vmem:[#allocation3 + $0xb0] sm:$0xff] %vm969, %v918
        %993 = vst.msk [vmem:[#allocation3 + $0xb8] sm:$0xff] %vm969, %v920
        %994 = vst.msk [vmem:[#allocation3 + $0xc0] sm:$0xff] %vm969, %v922
        %995 = vst.msk [vmem:[#allocation3 + $0xc8] sm:$0xff] %vm969, %v924
        %996 = vst.msk [vmem:[#allocation3 + $0xd0] sm:$0xff] %vm969, %v926
        %997 = vst.msk [vmem:[#allocation3 + $0xd8] sm:$0xff] %vm969, %v928
        %998 = vst.msk [vmem:[#allocation3 + $0xe0] sm:$0xff] %vm969, %v930
        %999 = vst.msk [vmem:[#allocation3 + $0xe8] sm:$0xff] %vm969, %v932
        %1000 = vst.msk [vmem:[#allocation3 + $0xf0] sm:$0xff] %vm969, %v934
        %1001 = vst.msk [vmem:[#allocation3 + $0xf8] sm:$0xff] %vm969, %v936
        %v1002 = vld [vmem:[%s326 + $0x1] sm:$0xff]
        %v1003 = vld [vmem:[%s326 + $0x9] sm:$0xff]
        %v1004 = vld [vmem:[%s326 + $0x19] sm:$0xff]
        %v1005 = vld [vmem:[%s326 + $0x21] sm:$0xff]
        %v1006 = vld [vmem:[%s326 + $0x31] sm:$0xff]
        %v1007 = vld [vmem:[%s326 + $0x39] sm:$0xff]
        %v1008 = vld [vmem:[%s326 + $0x49] sm:$0xff]
        %v1009 = vld [vmem:[%s326 + $0x51] sm:$0xff]
        %v1010 = vld [vmem:[%s326 + $0x61] sm:$0xff]
        %v1011 = vld [vmem:[%s326 + $0x69] sm:$0xff]
        %v1012 = vld [vmem:[%s326 + $0x79] sm:$0xff]
        %v1013 = vld [vmem:[%s326 + $0x81] sm:$0xff]
        %v1014 = vld [vmem:[%s326 + $0x91] sm:$0xff]
        %v1015 = vld [vmem:[%s326 + $0x99] sm:$0xff]
        %v1016 = vld [vmem:[%s326 + $0xa9] sm:$0xff]
        %v1017 = vld [vmem:[%s326 + $0xb1] sm:$0xff]
        %v1018 = vld [vmem:[%s326 + $0xc1] sm:$0xff]
        %v1019 = vld [vmem:[%s326 + $0xc9] sm:$0xff]
        %v1020 = vld [vmem:[%s326 + $0xd9] sm:$0xff]
        %v1021 = vld [vmem:[%s326 + $0xe1] sm:$0xff]
        %v1022 = vld [vmem:[%s326 + $0xf1] sm:$0xff]
        %v1023 = vld [vmem:[%s326 + $0xf9] sm:$0xff]
        %v1024 = vld [vmem:[%s326 + $0x109] sm:$0xff]
        %v1025 = vld [vmem:[%s326 + $0x111] sm:$0xff]
        %v1026 = vld [vmem:[%s326 + $0x121] sm:$0xff]
        %v1027 = vld [vmem:[%s326 + $0x129] sm:$0xff]
        %v1028 = vld [vmem:[%s326 + $0x139] sm:$0xff]
        %v1029 = vld [vmem:[%s326 + $0x141] sm:$0xff]
        %v1030 = vld [vmem:[%s326 + $0x151] sm:$0xff]
        %v1031 = vld [vmem:[%s326 + $0x159] sm:$0xff]
        %v1032 = vld [vmem:[%s326 + $0x169] sm:$0xff]
        %v1033 = vld [vmem:[%s326 + $0x171] sm:$0xff]
        %1066 = vrot.lane.b32.xlu0 %v1002, 16
        %v1067 = vpop.permute.xlu0 %1066
        %1068 = vrot.lane.b32.xlu0 %v1003, 16
        %v1069 = vpop.permute.xlu0 %1068
        %1070 = vrot.lane.b32.xlu0 %v1004, 16
        %v1071 = vpop.permute.xlu0 %1070
        %1072 = vrot.lane.b32.xlu0 %v1005, 16
        %v1073 = vpop.permute.xlu0 %1072
        %1074 = vrot.lane.b32.xlu0 %v1006, 16
        %v1075 = vpop.permute.xlu0 %1074
        %1076 = vrot.lane.b32.xlu0 %v1007, 16
        %v1077 = vpop.permute.xlu0 %1076
        %1078 = vrot.lane.b32.xlu0 %v1008, 16
        %v1079 = vpop.permute.xlu0 %1078
        %1080 = vrot.lane.b32.xlu0 %v1009, 16
        %v1081 = vpop.permute.xlu0 %1080
        %1082 = vrot.lane.b32.xlu0 %v1010, 16
        %v1083 = vpop.permute.xlu0 %1082
        %1084 = vrot.lane.b32.xlu0 %v1011, 16
        %v1085 = vpop.permute.xlu0 %1084
        %1086 = vrot.lane.b32.xlu0 %v1012, 16
        %v1087 = vpop.permute.xlu0 %1086
        %1088 = vrot.lane.b32.xlu0 %v1013, 16
        %v1089 = vpop.permute.xlu0 %1088
        %1090 = vrot.lane.b32.xlu0 %v1014, 16
        %v1091 = vpop.permute.xlu0 %1090
        %1092 = vrot.lane.b32.xlu0 %v1015, 16
        %v1093 = vpop.permute.xlu0 %1092
        %1094 = vrot.lane.b32.xlu0 %v1016, 16
        %v1095 = vpop.permute.xlu0 %1094
        %1096 = vrot.lane.b32.xlu0 %v1017, 16
        %v1097 = vpop.permute.xlu0 %1096
        %1098 = vrot.lane.b32.xlu0 %v1018, 16
        %v1099 = vpop.permute.xlu0 %1098
        %1100 = vrot.lane.b32.xlu0 %v1019, 16
        %v1101 = vpop.permute.xlu0 %1100
        %1102 = vrot.lane.b32.xlu0 %v1020, 16
        %v1103 = vpop.permute.xlu0 %1102
        %1104 = vrot.lane.b32.xlu0 %v1021, 16
        %v1105 = vpop.permute.xlu0 %1104
        %1106 = vrot.lane.b32.xlu0 %v1022, 16
        %v1107 = vpop.permute.xlu0 %1106
        %1108 = vrot.lane.b32.xlu0 %v1023, 16
        %v1109 = vpop.permute.xlu0 %1108
        %1110 = vrot.lane.b32.xlu0 %v1024, 16
        %v1111 = vpop.permute.xlu0 %1110
        %1112 = vrot.lane.b32.xlu0 %v1025, 16
        %v1113 = vpop.permute.xlu0 %1112
        %1114 = vrot.lane.b32.xlu0 %v1026, 16
        %v1115 = vpop.permute.xlu0 %1114
        %1116 = vrot.lane.b32.xlu0 %v1027, 16
        %v1117 = vpop.permute.xlu0 %1116
        %1118 = vrot.lane.b32.xlu0 %v1028, 16
        %v1119 = vpop.permute.xlu0 %1118
        %1120 = vrot.lane.b32.xlu0 %v1029, 16
        %v1121 = vpop.permute.xlu0 %1120
        %1122 = vrot.lane.b32.xlu0 %v1030, 16
        %v1123 = vpop.permute.xlu0 %1122
        %1124 = vrot.lane.b32.xlu0 %v1031, 16
        %v1125 = vpop.permute.xlu0 %1124
        %1126 = vrot.lane.b32.xlu0 %v1032, 16
        %v1127 = vpop.permute.xlu0 %1126
        %1128 = vrot.lane.b32.xlu0 %v1033, 16
        %v1129 = vpop.permute.xlu0 %1128
        %vm1162 = vcmask 162944
        %1163 = vst.msk [vmem:[#allocation3] sm:$0xff] %vm1162, %v1067
        %1164 = vst.msk [vmem:[#allocation3 + $0x8] sm:$0xff] %vm1162, %v1069
        %1165 = vst.msk [vmem:[#allocation3 + $0x10] sm:$0xff] %vm1162, %v1071
        %1166 = vst.msk [vmem:[#allocation3 + $0x18] sm:$0xff] %vm1162, %v1073
        %1167 = vst.msk [vmem:[#allocation3 + $0x20] sm:$0xff] %vm1162, %v1075
        %1168 = vst.msk [vmem:[#allocation3 + $0x28] sm:$0xff] %vm1162, %v1077
        %1169 = vst.msk [vmem:[#allocation3 + $0x30] sm:$0xff] %vm1162, %v1079
        %1170 = vst.msk [vmem:[#allocation3 + $0x38] sm:$0xff] %vm1162, %v1081
        %1171 = vst.msk [vmem:[#allocation3 + $0x40] sm:$0xff] %vm1162, %v1083
        %1172 = vst.msk [vmem:[#allocation3 + $0x48] sm:$0xff] %vm1162, %v1085
        %1173 = vst.msk [vmem:[#allocation3 + $0x50] sm:$0xff] %vm1162, %v1087
        %1174 = vst.msk [vmem:[#allocation3 + $0x58] sm:$0xff] %vm1162, %v1089
        %1175 = vst.msk [vmem:[#allocation3 + $0x60] sm:$0xff] %vm1162, %v1091
        %1176 = vst.msk [vmem:[#allocation3 + $0x68] sm:$0xff] %vm1162, %v1093
        %1177 = vst.msk [vmem:[#allocation3 + $0x70] sm:$0xff] %vm1162, %v1095
        %1178 = vst.msk [vmem:[#allocation3 + $0x78] sm:$0xff] %vm1162, %v1097
        %1179 = vst.msk [vmem:[#allocation3 + $0x80] sm:$0xff] %vm1162, %v1099
        %1180 = vst.msk [vmem:[#allocation3 + $0x88] sm:$0xff] %vm1162, %v1101
        %1181 = vst.msk [vmem:[#allocation3 + $0x90] sm:$0xff] %vm1162, %v1103
        %1182 = vst.msk [vmem:[#allocation3 + $0x98] sm:$0xff] %vm1162, %v1105
        %1183 = vst.msk [vmem:[#allocation3 + $0xa0] sm:$0xff] %vm1162, %v1107
        %1184 = vst.msk [vmem:[#allocation3 + $0xa8] sm:$0xff] %vm1162, %v1109
        %1185 = vst.msk [vmem:[#allocation3 + $0xb0] sm:$0xff] %vm1162, %v1111
        %1186 = vst.msk [vmem:[#allocation3 + $0xb8] sm:$0xff] %vm1162, %v1113
        %1187 = vst.msk [vmem:[#allocation3 + $0xc0] sm:$0xff] %vm1162, %v1115
        %1188 = vst.msk [vmem:[#allocation3 + $0xc8] sm:$0xff] %vm1162, %v1117
        %1189 = vst.msk [vmem:[#allocation3 + $0xd0] sm:$0xff] %vm1162, %v1119
        %1190 = vst.msk [vmem:[#allocation3 + $0xd8] sm:$0xff] %vm1162, %v1121
        %1191 = vst.msk [vmem:[#allocation3 + $0xe0] sm:$0xff] %vm1162, %v1123
        %1192 = vst.msk [vmem:[#allocation3 + $0xe8] sm:$0xff] %vm1162, %v1125
        %1193 = vst.msk [vmem:[#allocation3 + $0xf0] sm:$0xff] %vm1162, %v1127
        %1194 = vst.msk [vmem:[#allocation3 + $0xf8] sm:$0xff] %vm1162, %v1129
        %v1195 = vld [vmem:[%s326 + $0x2] sm:$0xff]
        %v1196 = vld [vmem:[%s326 + $0xa] sm:$0xff]
        %v1197 = vld [vmem:[%s326 + $0x1a] sm:$0xff]
        %v1198 = vld [vmem:[%s326 + $0x22] sm:$0xff]
        %v1199 = vld [vmem:[%s326 + $0x32] sm:$0xff]
        %v1200 = vld [vmem:[%s326 + $0x3a] sm:$0xff]
        %v1201 = vld [vmem:[%s326 + $0x4a] sm:$0xff]
        %v1202 = vld [vmem:[%s326 + $0x52] sm:$0xff]
        %v1203 = vld [vmem:[%s326 + $0x62] sm:$0xff]
        %v1204 = vld [vmem:[%s326 + $0x6a] sm:$0xff]
        %v1205 = vld [vmem:[%s326 + $0x7a] sm:$0xff]
        %v1206 = vld [vmem:[%s326 + $0x82] sm:$0xff]
        %v1207 = vld [vmem:[%s326 + $0x92] sm:$0xff]
        %v1208 = vld [vmem:[%s326 + $0x9a] sm:$0xff]
        %v1209 = vld [vmem:[%s326 + $0xaa] sm:$0xff]
        %v1210 = vld [vmem:[%s326 + $0xb2] sm:$0xff]
        %v1211 = vld [vmem:[%s326 + $0xc2] sm:$0xff]
        %v1212 = vld [vmem:[%s326 + $0xca] sm:$0xff]
        %v1213 = vld [vmem:[%s326 + $0xda] sm:$0xff]
        %v1214 = vld [vmem:[%s326 + $0xe2] sm:$0xff]
        %v1215 = vld [vmem:[%s326 + $0xf2] sm:$0xff]
        %v1216 = vld [vmem:[%s326 + $0xfa] sm:$0xff]
        %v1217 = vld [vmem:[%s326 + $0x10a] sm:$0xff]
        %v1218 = vld [vmem:[%s326 + $0x112] sm:$0xff]
        %v1219 = vld [vmem:[%s326 + $0x122] sm:$0xff]
        %v1220 = vld [vmem:[%s326 + $0x12a] sm:$0xff]
        %v1221 = vld [vmem:[%s326 + $0x13a] sm:$0xff]
        %v1222 = vld [vmem:[%s326 + $0x142] sm:$0xff]
        %v1223 = vld [vmem:[%s326 + $0x152] sm:$0xff]
        %v1224 = vld [vmem:[%s326 + $0x15a] sm:$0xff]
        %v1225 = vld [vmem:[%s326 + $0x16a] sm:$0xff]
        %v1226 = vld [vmem:[%s326 + $0x172] sm:$0xff]
        %1259 = vrot.lane.b32.xlu0 %v1195, 20
        %v1260 = vpop.permute.xlu0 %1259
        %1261 = vrot.lane.b32.xlu0 %v1196, 20
        %v1262 = vpop.permute.xlu0 %1261
        %1263 = vrot.lane.b32.xlu0 %v1197, 20
        %v1264 = vpop.permute.xlu0 %1263
        %1265 = vrot.lane.b32.xlu0 %v1198, 20
        %v1266 = vpop.permute.xlu0 %1265
        %1267 = vrot.lane.b32.xlu0 %v1199, 20
        %v1268 = vpop.permute.xlu0 %1267
        %1269 = vrot.lane.b32.xlu0 %v1200, 20
        %v1270 = vpop.permute.xlu0 %1269
        %1271 = vrot.lane.b32.xlu0 %v1201, 20
        %v1272 = vpop.permute.xlu0 %1271
        %1273 = vrot.lane.b32.xlu0 %v1202, 20
        %v1274 = vpop.permute.xlu0 %1273
        %1275 = vrot.lane.b32.xlu0 %v1203, 20
        %v1276 = vpop.permute.xlu0 %1275
        %1277 = vrot.lane.b32.xlu0 %v1204, 20
        %v1278 = vpop.permute.xlu0 %1277
        %1279 = vrot.lane.b32.xlu0 %v1205, 20
        %v1280 = vpop.permute.xlu0 %1279
        %1281 = vrot.lane.b32.xlu0 %v1206, 20
        %v1282 = vpop.permute.xlu0 %1281
        %1283 = vrot.lane.b32.xlu0 %v1207, 20
        %v1284 = vpop.permute.xlu0 %1283
        %1285 = vrot.lane.b32.xlu0 %v1208, 20
        %v1286 = vpop.permute.xlu0 %1285
        %1287 = vrot.lane.b32.xlu0 %v1209, 20
        %v1288 = vpop.permute.xlu0 %1287
        %1289 = vrot.lane.b32.xlu0 %v1210, 20
        %v1290 = vpop.permute.xlu0 %1289
        %1291 = vrot.lane.b32.xlu0 %v1211, 20
        %v1292 = vpop.permute.xlu0 %1291
        %1293 = vrot.lane.b32.xlu0 %v1212, 20
        %v1294 = vpop.permute.xlu0 %1293
        %1295 = vrot.lane.b32.xlu0 %v1213, 20
        %v1296 = vpop.permute.xlu0 %1295
        %1297 = vrot.lane.b32.xlu0 %v1214, 20
        %v1298 = vpop.permute.xlu0 %1297
        %1299 = vrot.lane.b32.xlu0 %v1215, 20
        %v1300 = vpop.permute.xlu0 %1299
        %1301 = vrot.lane.b32.xlu0 %v1216, 20
        %v1302 = vpop.permute.xlu0 %1301
        %1303 = vrot.lane.b32.xlu0 %v1217, 20
        %v1304 = vpop.permute.xlu0 %1303
        %1305 = vrot.lane.b32.xlu0 %v1218, 20
        %v1306 = vpop.permute.xlu0 %1305
        %1307 = vrot.lane.b32.xlu0 %v1219, 20
        %v1308 = vpop.permute.xlu0 %1307
        %1309 = vrot.lane.b32.xlu0 %v1220, 20
        %v1310 = vpop.permute.xlu0 %1309
        %1311 = vrot.lane.b32.xlu0 %v1221, 20
        %v1312 = vpop.permute.xlu0 %1311
        %1313 = vrot.lane.b32.xlu0 %v1222, 20
        %v1314 = vpop.permute.xlu0 %1313
        %1315 = vrot.lane.b32.xlu0 %v1223, 20
        %v1316 = vpop.permute.xlu0 %1315
        %1317 = vrot.lane.b32.xlu0 %v1224, 20
        %v1318 = vpop.permute.xlu0 %1317
        %1319 = vrot.lane.b32.xlu0 %v1225, 20
        %v1320 = vpop.permute.xlu0 %1319
        %1321 = vrot.lane.b32.xlu0 %v1226, 20
        %v1322 = vpop.permute.xlu0 %1321
        %vm1355 = vcmask 195744
        %1356 = vst.msk [vmem:[#allocation3] sm:$0xff] %vm1355, %v1260
        %1357 = vst.msk [vmem:[#allocation3 + $0x8] sm:$0xff] %vm1355, %v1262
        %1358 = vst.msk [vmem:[#allocation3 + $0x10] sm:$0xff] %vm1355, %v1264
        %1359 = vst.msk [vmem:[#allocation3 + $0x18] sm:$0xff] %vm1355, %v1266
        %1360 = vst.msk [vmem:[#allocation3 + $0x20] sm:$0xff] %vm1355, %v1268
        %1361 = vst.msk [vmem:[#allocation3 + $0x28] sm:$0xff] %vm1355, %v1270
        %1362 = vst.msk [vmem:[#allocation3 + $0x30] sm:$0xff] %vm1355, %v1272
        %1363 = vst.msk [vmem:[#allocation3 + $0x38] sm:$0xff] %vm1355, %v1274
        %1364 = vst.msk [vmem:[#allocation3 + $0x40] sm:$0xff] %vm1355, %v1276
        %1365 = vst.msk [vmem:[#allocation3 + $0x48] sm:$0xff] %vm1355, %v1278
        %1366 = vst.msk [vmem:[#allocation3 + $0x50] sm:$0xff] %vm1355, %v1280
        %1367 = vst.msk [vmem:[#allocation3 + $0x58] sm:$0xff] %vm1355, %v1282
        %1368 = vst.msk [vmem:[#allocation3 + $0x60] sm:$0xff] %vm1355, %v1284
        %1369 = vst.msk [vmem:[#allocation3 + $0x68] sm:$0xff] %vm1355, %v1286
        %1370 = vst.msk [vmem:[#allocation3 + $0x70] sm:$0xff] %vm1355, %v1288
        %1371 = vst.msk [vmem:[#allocation3 + $0x78] sm:$0xff] %vm1355, %v1290
        %1372 = vst.msk [vmem:[#allocation3 + $0x80] sm:$0xff] %vm1355, %v1292
        %1373 = vst.msk [vmem:[#allocation3 + $0x88] sm:$0xff] %vm1355, %v1294
        %1374 = vst.msk [vmem:[#allocation3 + $0x90] sm:$0xff] %vm1355, %v1296
        %1375 = vst.msk [vmem:[#allocation3 + $0x98] sm:$0xff] %vm1355, %v1298
        %1376 = vst.msk [vmem:[#allocation3 + $0xa0] sm:$0xff] %vm1355, %v1300
        %1377 = vst.msk [vmem:[#allocation3 + $0xa8] sm:$0xff] %vm1355, %v1302
        %1378 = vst.msk [vmem:[#allocation3 + $0xb0] sm:$0xff] %vm1355, %v1304
        %1379 = vst.msk [vmem:[#allocation3 + $0xb8] sm:$0xff] %vm1355, %v1306
        %1380 = vst.msk [vmem:[#allocation3 + $0xc0] sm:$0xff] %vm1355, %v1308
        %1381 = vst.msk [vmem:[#allocation3 + $0xc8] sm:$0xff] %vm1355, %v1310
        %1382 = vst.msk [vmem:[#allocation3 + $0xd0] sm:$0xff] %vm1355, %v1312
        %1383 = vst.msk [vmem:[#allocation3 + $0xd8] sm:$0xff] %vm1355, %v1314
        %1384 = vst.msk [vmem:[#allocation3 + $0xe0] sm:$0xff] %vm1355, %v1316
        %1385 = vst.msk [vmem:[#allocation3 + $0xe8] sm:$0xff] %vm1355, %v1318
        %1386 = vst.msk [vmem:[#allocation3 + $0xf0] sm:$0xff] %vm1355, %v1320
        %1387 = vst.msk [vmem:[#allocation3 + $0xf8] sm:$0xff] %vm1355, %v1322
        %s1388 = scalar_lea.vmem [#allocation2], 48
        %v1389 = vld [vmem:[%s1388] sm:$0xff]
        %v1390 = vld [vmem:[%s1388 + $0x8] sm:$0xff]
        %v1391 = vld [vmem:[%s1388 + $0x18] sm:$0xff]
        %v1392 = vld [vmem:[%s1388 + $0x20] sm:$0xff]
        %v1393 = vld [vmem:[%s1388 + $0x30] sm:$0xff]
        %v1394 = vld [vmem:[%s1388 + $0x38] sm:$0xff]
        %v1395 = vld [vmem:[%s1388 + $0x48] sm:$0xff]
        %v1396 = vld [vmem:[%s1388 + $0x50] sm:$0xff]
        %v1397 = vld [vmem:[%s1388 + $0x60] sm:$0xff]
        %v1398 = vld [vmem:[%s1388 + $0x68] sm:$0xff]
        %v1399 = vld [vmem:[%s1388 + $0x78] sm:$0xff]
        %v1400 = vld [vmem:[%s1388 + $0x80] sm:$0xff]
        %v1401 = vld [vmem:[%s1388 + $0x90] sm:$0xff]
        %v1402 = vld [vmem:[%s1388 + $0x98] sm:$0xff]
        %v1403 = vld [vmem:[%s1388 + $0xa8] sm:$0xff]
        %v1404 = vld [vmem:[%s1388 + $0xb0] sm:$0xff]
        %v1405 = vld [vmem:[%s1388 + $0xc0] sm:$0xff]
        %v1406 = vld [vmem:[%s1388 + $0xc8] sm:$0xff]
        %v1407 = vld [vmem:[%s1388 + $0xd8] sm:$0xff]
        %v1408 = vld [vmem:[%s1388 + $0xe0] sm:$0xff]
        %v1409 = vld [vmem:[%s1388 + $0xf0] sm:$0xff]
        %v1410 = vld [vmem:[%s1388 + $0xf8] sm:$0xff]
        %v1411 = vld [vmem:[%s1388 + $0x108] sm:$0xff]
        %v1412 = vld [vmem:[%s1388 + $0x110] sm:$0xff]
        %v1413 = vld [vmem:[%s1388 + $0x120] sm:$0xff]
        %v1414 = vld [vmem:[%s1388 + $0x128] sm:$0xff]
        %v1415 = vld [vmem:[%s1388 + $0x138] sm:$0xff]
        %v1416 = vld [vmem:[%s1388 + $0x140] sm:$0xff]
        %v1417 = vld [vmem:[%s1388 + $0x150] sm:$0xff]
        %v1418 = vld [vmem:[%s1388 + $0x158] sm:$0xff]
        %v1419 = vld [vmem:[%s1388 + $0x168] sm:$0xff]
        %v1420 = vld [vmem:[%s1388 + $0x170] sm:$0xff]
        %1453 = vrot.lane.b32.xlu0 %v1389, 24
        %v1454 = vpop.permute.xlu0 %1453
        %1455 = vrot.lane.b32.xlu0 %v1390, 24
        %v1456 = vpop.permute.xlu0 %1455
        %1457 = vrot.lane.b32.xlu0 %v1391, 24
        %v1458 = vpop.permute.xlu0 %1457
        %1459 = vrot.lane.b32.xlu0 %v1392, 24
        %v1460 = vpop.permute.xlu0 %1459
        %1461 = vrot.lane.b32.xlu0 %v1393, 24
        %v1462 = vpop.permute.xlu0 %1461
        %1463 = vrot.lane.b32.xlu0 %v1394, 24
        %v1464 = vpop.permute.xlu0 %1463
        %1465 = vrot.lane.b32.xlu0 %v1395, 24
        %v1466 = vpop.permute.xlu0 %1465
        %1467 = vrot.lane.b32.xlu0 %v1396, 24
        %v1468 = vpop.permute.xlu0 %1467
        %1469 = vrot.lane.b32.xlu0 %v1397, 24
        %v1470 = vpop.permute.xlu0 %1469
        %1471 = vrot.lane.b32.xlu0 %v1398, 24
        %v1472 = vpop.permute.xlu0 %1471
        %1473 = vrot.lane.b32.xlu0 %v1399, 24
        %v1474 = vpop.permute.xlu0 %1473
        %1475 = vrot.lane.b32.xlu0 %v1400, 24
        %v1476 = vpop.permute.xlu0 %1475
        %1477 = vrot.lane.b32.xlu0 %v1401, 24
        %v1478 = vpop.permute.xlu0 %1477
        %1479 = vrot.lane.b32.xlu0 %v1402, 24
        %v1480 = vpop.permute.xlu0 %1479
        %1481 = vrot.lane.b32.xlu0 %v1403, 24
        %v1482 = vpop.permute.xlu0 %1481
        %1483 = vrot.lane.b32.xlu0 %v1404, 24
        %v1484 = vpop.permute.xlu0 %1483
        %1485 = vrot.lane.b32.xlu0 %v1405, 24
        %v1486 = vpop.permute.xlu0 %1485
        %1487 = vrot.lane.b32.xlu0 %v1406, 24
        %v1488 = vpop.permute.xlu0 %1487
        %1489 = vrot.lane.b32.xlu0 %v1407, 24
        %v1490 = vpop.permute.xlu0 %1489
        %1491 = vrot.lane.b32.xlu0 %v1408, 24
        %v1492 = vpop.permute.xlu0 %1491
        %1493 = vrot.lane.b32.xlu0 %v1409, 24
        %v1494 = vpop.permute.xlu0 %1493
        %1495 = vrot.lane.b32.xlu0 %v1410, 24
        %v1496 = vpop.permute.xlu0 %1495
        %1497 = vrot.lane.b32.xlu0 %v1411, 24
        %v1498 = vpop.permute.xlu0 %1497
        %1499 = vrot.lane.b32.xlu0 %v1412, 24
        %v1500 = vpop.permute.xlu0 %1499
        %1501 = vrot.lane.b32.xlu0 %v1413, 24
        %v1502 = vpop.permute.xlu0 %1501
        %1503 = vrot.lane.b32.xlu0 %v1414, 24
        %v1504 = vpop.permute.xlu0 %1503
        %1505 = vrot.lane.b32.xlu0 %v1415, 24
        %v1506 = vpop.permute.xlu0 %1505
        %1507 = vrot.lane.b32.xlu0 %v1416, 24
        %v1508 = vpop.permute.xlu0 %1507
        %1509 = vrot.lane.b32.xlu0 %v1417, 24
        %v1510 = vpop.permute.xlu0 %1509
        %1511 = vrot.lane.b32.xlu0 %v1418, 24
        %v1512 = vpop.permute.xlu0 %1511
        %1513 = vrot.lane.b32.xlu0 %v1419, 24
        %v1514 = vpop.permute.xlu0 %1513
        %1515 = vrot.lane.b32.xlu0 %v1420, 24
        %v1516 = vpop.permute.xlu0 %1515
        %vm1549 = vcmask 228544
        %1550 = vst.msk [vmem:[#allocation3] sm:$0xff] %vm1549, %v1454
        %1551 = vst.msk [vmem:[#allocation3 + $0x8] sm:$0xff] %vm1549, %v1456
        %1552 = vst.msk [vmem:[#allocation3 + $0x10] sm:$0xff] %vm1549, %v1458
        %1553 = vst.msk [vmem:[#allocation3 + $0x18] sm:$0xff] %vm1549, %v1460
        %1554 = vst.msk [vmem:[#allocation3 + $0x20] sm:$0xff] %vm1549, %v1462
        %1555 = vst.msk [vmem:[#allocation3 + $0x28] sm:$0xff] %vm1549, %v1464
        %1556 = vst.msk [vmem:[#allocation3 + $0x30] sm:$0xff] %vm1549, %v1466
        %1557 = vst.msk [vmem:[#allocation3 + $0x38] sm:$0xff] %vm1549, %v1468
        %1558 = vst.msk [vmem:[#allocation3 + $0x40] sm:$0xff] %vm1549, %v1470
        %1559 = vst.msk [vmem:[#allocation3 + $0x48] sm:$0xff] %vm1549, %v1472
        %1560 = vst.msk [vmem:[#allocation3 + $0x50] sm:$0xff] %vm1549, %v1474
        %1561 = vst.msk [vmem:[#allocation3 + $0x58] sm:$0xff] %vm1549, %v1476
        %1562 = vst.msk [vmem:[#allocation3 + $0x60] sm:$0xff] %vm1549, %v1478
        %1563 = vst.msk [vmem:[#allocation3 + $0x68] sm:$0xff] %vm1549, %v1480
        %1564 = vst.msk [vmem:[#allocation3 + $0x70] sm:$0xff] %vm1549, %v1482
        %1565 = vst.msk [vmem:[#allocation3 + $0x78] sm:$0xff] %vm1549, %v1484
        %1566 = vst.msk [vmem:[#allocation3 + $0x80] sm:$0xff] %vm1549, %v1486
        %1567 = vst.msk [vmem:[#allocation3 + $0x88] sm:$0xff] %vm1549, %v1488
        %1568 = vst.msk [vmem:[#allocation3 + $0x90] sm:$0xff] %vm1549, %v1490
        %1569 = vst.msk [vmem:[#allocation3 + $0x98] sm:$0xff] %vm1549, %v1492
        %1570 = vst.msk [vmem:[#allocation3 + $0xa0] sm:$0xff] %vm1549, %v1494
        %1571 = vst.msk [vmem:[#allocation3 + $0xa8] sm:$0xff] %vm1549, %v1496
        %1572 = vst.msk [vmem:[#allocation3 + $0xb0] sm:$0xff] %vm1549, %v1498
        %1573 = vst.msk [vmem:[#allocation3 + $0xb8] sm:$0xff] %vm1549, %v1500
        %1574 = vst.msk [vmem:[#allocation3 + $0xc0] sm:$0xff] %vm1549, %v1502
        %1575 = vst.msk [vmem:[#allocation3 + $0xc8] sm:$0xff] %vm1549, %v1504
        %1576 = vst.msk [vmem:[#allocation3 + $0xd0] sm:$0xff] %vm1549, %v1506
        %1577 = vst.msk [vmem:[#allocation3 + $0xd8] sm:$0xff] %vm1549, %v1508
        %1578 = vst.msk [vmem:[#allocation3 + $0xe0] sm:$0xff] %vm1549, %v1510
        %1579 = vst.msk [vmem:[#allocation3 + $0xe8] sm:$0xff] %vm1549, %v1512
        %1580 = vst.msk [vmem:[#allocation3 + $0xf0] sm:$0xff] %vm1549, %v1514
        %1581 = vst.msk [vmem:[#allocation3 + $0xf8] sm:$0xff] %vm1549, %v1516
        %v1582 = vld [vmem:[%s1388 + $0x1] sm:$0xff]
        %v1583 = vld [vmem:[%s1388 + $0x9] sm:$0xff]
        %v1584 = vld [vmem:[%s1388 + $0x19] sm:$0xff]
        %v1585 = vld [vmem:[%s1388 + $0x21] sm:$0xff]
        %v1586 = vld [vmem:[%s1388 + $0x31] sm:$0xff]
        %v1587 = vld [vmem:[%s1388 + $0x39] sm:$0xff]
        %v1588 = vld [vmem:[%s1388 + $0x49] sm:$0xff]
        %v1589 = vld [vmem:[%s1388 + $0x51] sm:$0xff]
        %v1590 = vld [vmem:[%s1388 + $0x61] sm:$0xff]
        %v1591 = vld [vmem:[%s1388 + $0x69] sm:$0xff]
        %v1592 = vld [vmem:[%s1388 + $0x79] sm:$0xff]
        %v1593 = vld [vmem:[%s1388 + $0x81] sm:$0xff]
        %v1594 = vld [vmem:[%s1388 + $0x91] sm:$0xff]
        %v1595 = vld [vmem:[%s1388 + $0x99] sm:$0xff]
        %v1596 = vld [vmem:[%s1388 + $0xa9] sm:$0xff]
        %v1597 = vld [vmem:[%s1388 + $0xb1] sm:$0xff]
        %v1598 = vld [vmem:[%s1388 + $0xc1] sm:$0xff]
        %v1599 = vld [vmem:[%s1388 + $0xc9] sm:$0xff]
        %v1600 = vld [vmem:[%s1388 + $0xd9] sm:$0xff]
        %v1601 = vld [vmem:[%s1388 + $0xe1] sm:$0xff]
        %v1602 = vld [vmem:[%s1388 + $0xf1] sm:$0xff]
        %v1603 = vld [vmem:[%s1388 + $0xf9] sm:$0xff]
        %v1604 = vld [vmem:[%s1388 + $0x109] sm:$0xff]
        %v1605 = vld [vmem:[%s1388 + $0x111] sm:$0xff]
        %v1606 = vld [vmem:[%s1388 + $0x121] sm:$0xff]
        %v1607 = vld [vmem:[%s1388 + $0x129] sm:$0xff]
        %v1608 = vld [vmem:[%s1388 + $0x139] sm:$0xff]
        %v1609 = vld [vmem:[%s1388 + $0x141] sm:$0xff]
        %v1610 = vld [vmem:[%s1388 + $0x151] sm:$0xff]
        %v1611 = vld [vmem:[%s1388 + $0x159] sm:$0xff]
        %v1612 = vld [vmem:[%s1388 + $0x169] sm:$0xff]
        %v1613 = vld [vmem:[%s1388 + $0x171] sm:$0xff]
        %1646 = vrot.lane.b32.xlu0 %v1582, 28
        %v1647 = vpop.permute.xlu0 %1646
        %1648 = vrot.lane.b32.xlu0 %v1583, 28
        %v1649 = vpop.permute.xlu0 %1648
        %1650 = vrot.lane.b32.xlu0 %v1584, 28
        %v1651 = vpop.permute.xlu0 %1650
        %1652 = vrot.lane.b32.xlu0 %v1585, 28
        %v1653 = vpop.permute.xlu0 %1652
        %1654 = vrot.lane.b32.xlu0 %v1586, 28
        %v1655 = vpop.permute.xlu0 %1654
        %1656 = vrot.lane.b32.xlu0 %v1587, 28
        %v1657 = vpop.permute.xlu0 %1656
        %1658 = vrot.lane.b32.xlu0 %v1588, 28
        %v1659 = vpop.permute.xlu0 %1658
        %1660 = vrot.lane.b32.xlu0 %v1589, 28
        %v1661 = vpop.permute.xlu0 %1660
        %1662 = vrot.lane.b32.xlu0 %v1590, 28
        %v1663 = vpop.permute.xlu0 %1662
        %1664 = vrot.lane.b32.xlu0 %v1591, 28
        %v1665 = vpop.permute.xlu0 %1664
        %1666 = vrot.lane.b32.xlu0 %v1592, 28
        %v1667 = vpop.permute.xlu0 %1666
        %1668 = vrot.lane.b32.xlu0 %v1593, 28
        %v1669 = vpop.permute.xlu0 %1668
        %1670 = vrot.lane.b32.xlu0 %v1594, 28
        %v1671 = vpop.permute.xlu0 %1670
        %1672 = vrot.lane.b32.xlu0 %v1595, 28
        %v1673 = vpop.permute.xlu0 %1672
        %1674 = vrot.lane.b32.xlu0 %v1596, 28
        %v1675 = vpop.permute.xlu0 %1674
        %1676 = vrot.lane.b32.xlu0 %v1597, 28
        %v1677 = vpop.permute.xlu0 %1676
        %1678 = vrot.lane.b32.xlu0 %v1598, 28
        %v1679 = vpop.permute.xlu0 %1678
        %1680 = vrot.lane.b32.xlu0 %v1599, 28
        %v1681 = vpop.permute.xlu0 %1680
        %1682 = vrot.lane.b32.xlu0 %v1600, 28
        %v1683 = vpop.permute.xlu0 %1682
        %1684 = vrot.lane.b32.xlu0 %v1601, 28
        %v1685 = vpop.permute.xlu0 %1684
        %1686 = vrot.lane.b32.xlu0 %v1602, 28
        %v1687 = vpop.permute.xlu0 %1686
        %1688 = vrot.lane.b32.xlu0 %v1603, 28
        %v1689 = vpop.permute.xlu0 %1688
        %1690 = vrot.lane.b32.xlu0 %v1604, 28
        %v1691 = vpop.permute.xlu0 %1690
        %1692 = vrot.lane.b32.xlu0 %v1605, 28
        %v1693 = vpop.permute.xlu0 %1692
        %1694 = vrot.lane.b32.xlu0 %v1606, 28
        %v1695 = vpop.permute.xlu0 %1694
        %1696 = vrot.lane.b32.xlu0 %v1607, 28
        %v1697 = vpop.permute.xlu0 %1696
        %1698 = vrot.lane.b32.xlu0 %v1608, 28
        %v1699 = vpop.permute.xlu0 %1698
        %1700 = vrot.lane.b32.xlu0 %v1609, 28
        %v1701 = vpop.permute.xlu0 %1700
        %1702 = vrot.lane.b32.xlu0 %v1610, 28
        %v1703 = vpop.permute.xlu0 %1702
        %1704 = vrot.lane.b32.xlu0 %v1611, 28
        %v1705 = vpop.permute.xlu0 %1704
        %1706 = vrot.lane.b32.xlu0 %v1612, 28
        %v1707 = vpop.permute.xlu0 %1706
        %1708 = vrot.lane.b32.xlu0 %v1613, 28
        %v1709 = vpop.permute.xlu0 %1708
        %vm1742 = vcmask 261344
        %1743 = vst.msk [vmem:[#allocation3] sm:$0xff] %vm1742, %v1647
        %1744 = vst.msk [vmem:[#allocation3 + $0x8] sm:$0xff] %vm1742, %v1649
        %1745 = vst.msk [vmem:[#allocation3 + $0x10] sm:$0xff] %vm1742, %v1651
        %1746 = vst.msk [vmem:[#allocation3 + $0x18] sm:$0xff] %vm1742, %v1653
        %1747 = vst.msk [vmem:[#allocation3 + $0x20] sm:$0xff] %vm1742, %v1655
        %1748 = vst.msk [vmem:[#allocation3 + $0x28] sm:$0xff] %vm1742, %v1657
        %1749 = vst.msk [vmem:[#allocation3 + $0x30] sm:$0xff] %vm1742, %v1659
        %1750 = vst.msk [vmem:[#allocation3 + $0x38] sm:$0xff] %vm1742, %v1661
        %1751 = vst.msk [vmem:[#allocation3 + $0x40] sm:$0xff] %vm1742, %v1663
        %1752 = vst.msk [vmem:[#allocation3 + $0x48] sm:$0xff] %vm1742, %v1665
        %1753 = vst.msk [vmem:[#allocation3 + $0x50] sm:$0xff] %vm1742, %v1667
        %1754 = vst.msk [vmem:[#allocation3 + $0x58] sm:$0xff] %vm1742, %v1669
        %1755 = vst.msk [vmem:[#allocation3 + $0x60] sm:$0xff] %vm1742, %v1671
        %1756 = vst.msk [vmem:[#allocation3 + $0x68] sm:$0xff] %vm1742, %v1673
        %1757 = vst.msk [vmem:[#allocation3 + $0x70] sm:$0xff] %vm1742, %v1675
        %1758 = vst.msk [vmem:[#allocation3 + $0x78] sm:$0xff] %vm1742, %v1677
        %1759 = vst.msk [vmem:[#allocation3 + $0x80] sm:$0xff] %vm1742, %v1679
        %1760 = vst.msk [vmem:[#allocation3 + $0x88] sm:$0xff] %vm1742, %v1681
        %1761 = vst.msk [vmem:[#allocation3 + $0x90] sm:$0xff] %vm1742, %v1683
        %1762 = vst.msk [vmem:[#allocation3 + $0x98] sm:$0xff] %vm1742, %v1685
        %1763 = vst.msk [vmem:[#allocation3 + $0xa0] sm:$0xff] %vm1742, %v1687
        %1764 = vst.msk [vmem:[#allocation3 + $0xa8] sm:$0xff] %vm1742, %v1689
        %1765 = vst.msk [vmem:[#allocation3 + $0xb0] sm:$0xff] %vm1742, %v1691
        %1766 = vst.msk [vmem:[#allocation3 + $0xb8] sm:$0xff] %vm1742, %v1693
        %1767 = vst.msk [vmem:[#allocation3 + $0xc0] sm:$0xff] %vm1742, %v1695
        %1768 = vst.msk [vmem:[#allocation3 + $0xc8] sm:$0xff] %vm1742, %v1697
        %1769 = vst.msk [vmem:[#allocation3 + $0xd0] sm:$0xff] %vm1742, %v1699
        %1770 = vst.msk [vmem:[#allocation3 + $0xd8] sm:$0xff] %vm1742, %v1701
        %1771 = vst.msk [vmem:[#allocation3 + $0xe0] sm:$0xff] %vm1742, %v1703
        %1772 = vst.msk [vmem:[#allocation3 + $0xe8] sm:$0xff] %vm1742, %v1705
        %1773 = vst.msk [vmem:[#allocation3 + $0xf0] sm:$0xff] %vm1742, %v1707
        %1774 = vst.msk [vmem:[#allocation3 + $0xf8] sm:$0xff] %vm1742, %v1709
        %v1775 = vld [vmem:[%s1388 + $0x2] sm:$0xff]
        %v1776 = vld [vmem:[%s1388 + $0xa] sm:$0xff]
        %v1777 = vld [vmem:[%s1388 + $0x1a] sm:$0xff]
        %v1778 = vld [vmem:[%s1388 + $0x22] sm:$0xff]
        %v1779 = vld [vmem:[%s1388 + $0x32] sm:$0xff]
        %v1780 = vld [vmem:[%s1388 + $0x3a] sm:$0xff]
        %v1781 = vld [vmem:[%s1388 + $0x4a] sm:$0xff]
        %v1782 = vld [vmem:[%s1388 + $0x52] sm:$0xff]
        %v1783 = vld [vmem:[%s1388 + $0x62] sm:$0xff]
        %v1784 = vld [vmem:[%s1388 + $0x6a] sm:$0xff]
        %v1785 = vld [vmem:[%s1388 + $0x7a] sm:$0xff]
        %v1786 = vld [vmem:[%s1388 + $0x82] sm:$0xff]
        %v1787 = vld [vmem:[%s1388 + $0x92] sm:$0xff]
        %v1788 = vld [vmem:[%s1388 + $0x9a] sm:$0xff]
        %v1789 = vld [vmem:[%s1388 + $0xaa] sm:$0xff]
        %v1790 = vld [vmem:[%s1388 + $0xb2] sm:$0xff]
        %v1791 = vld [vmem:[%s1388 + $0xc2] sm:$0xff]
        %v1792 = vld [vmem:[%s1388 + $0xca] sm:$0xff]
        %v1793 = vld [vmem:[%s1388 + $0xda] sm:$0xff]
        %v1794 = vld [vmem:[%s1388 + $0xe2] sm:$0xff]
        %v1795 = vld [vmem:[%s1388 + $0xf2] sm:$0xff]
        %v1796 = vld [vmem:[%s1388 + $0xfa] sm:$0xff]
        %v1797 = vld [vmem:[%s1388 + $0x10a] sm:$0xff]
        %v1798 = vld [vmem:[%s1388 + $0x112] sm:$0xff]
        %v1799 = vld [vmem:[%s1388 + $0x122] sm:$0xff]
        %v1800 = vld [vmem:[%s1388 + $0x12a] sm:$0xff]
        %v1801 = vld [vmem:[%s1388 + $0x13a] sm:$0xff]
        %v1802 = vld [vmem:[%s1388 + $0x142] sm:$0xff]
        %v1803 = vld [vmem:[%s1388 + $0x152] sm:$0xff]
        %v1804 = vld [vmem:[%s1388 + $0x15a] sm:$0xff]
        %v1805 = vld [vmem:[%s1388 + $0x16a] sm:$0xff]
        %v1806 = vld [vmem:[%s1388 + $0x172] sm:$0xff]
        %1839 = vrot.lane.b32.xlu0 %v1775, 32
        %v1840 = vpop.permute.xlu0 %1839
        %1841 = vrot.lane.b32.xlu0 %v1776, 32
        %v1842 = vpop.permute.xlu0 %1841
        %1843 = vrot.lane.b32.xlu0 %v1777, 32
        %v1844 = vpop.permute.xlu0 %1843
        %1845 = vrot.lane.b32.xlu0 %v1778, 32
        %v1846 = vpop.permute.xlu0 %1845
        %1847 = vrot.lane.b32.xlu0 %v1779, 32
        %v1848 = vpop.permute.xlu0 %1847
        %1849 = vrot.lane.b32.xlu0 %v1780, 32
        %v1850 = vpop.permute.xlu0 %1849
        %1851 = vrot.lane.b32.xlu0 %v1781, 32
        %v1852 = vpop.permute.xlu0 %1851
        %1853 = vrot.lane.b32.xlu0 %v1782, 32
        %v1854 = vpop.permute.xlu0 %1853
        %1855 = vrot.lane.b32.xlu0 %v1783, 32
        %v1856 = vpop.permute.xlu0 %1855
        %1857 = vrot.lane.b32.xlu0 %v1784, 32
        %v1858 = vpop.permute.xlu0 %1857
        %1859 = vrot.lane.b32.xlu0 %v1785, 32
        %v1860 = vpop.permute.xlu0 %1859
        %1861 = vrot.lane.b32.xlu0 %v1786, 32
        %v1862 = vpop.permute.xlu0 %1861
        %1863 = vrot.lane.b32.xlu0 %v1787, 32
        %v1864 = vpop.permute.xlu0 %1863
        %1865 = vrot.lane.b32.xlu0 %v1788, 32
        %v1866 = vpop.permute.xlu0 %1865
        %1867 = vrot.lane.b32.xlu0 %v1789, 32
        %v1868 = vpop.permute.xlu0 %1867
        %1869 = vrot.lane.b32.xlu0 %v1790, 32
        %v1870 = vpop.permute.xlu0 %1869
        %1871 = vrot.lane.b32.xlu0 %v1791, 32
        %v1872 = vpop.permute.xlu0 %1871
        %1873 = vrot.lane.b32.xlu0 %v1792, 32
        %v1874 = vpop.permute.xlu0 %1873
        %1875 = vrot.lane.b32.xlu0 %v1793, 32
        %v1876 = vpop.permute.xlu0 %1875
        %1877 = vrot.lane.b32.xlu0 %v1794, 32
        %v1878 = vpop.permute.xlu0 %1877
        %1879 = vrot.lane.b32.xlu0 %v1795, 32
        %v1880 = vpop.permute.xlu0 %1879
        %1881 = vrot.lane.b32.xlu0 %v1796, 32
        %v1882 = vpop.permute.xlu0 %1881
        %1883 = vrot.lane.b32.xlu0 %v1797, 32
        %v1884 = vpop.permute.xlu0 %1883
        %1885 = vrot.lane.b32.xlu0 %v1798, 32
        %v1886 = vpop.permute.xlu0 %1885
        %1887 = vrot.lane.b32.xlu0 %v1799, 32
        %v1888 = vpop.permute.xlu0 %1887
        %1889 = vrot.lane.b32.xlu0 %v1800, 32
        %v1890 = vpop.permute.xlu0 %1889
        %1891 = vrot.lane.b32.xlu0 %v1801, 32
        %v1892 = vpop.permute.xlu0 %1891
        %1893 = vrot.lane.b32.xlu0 %v1802, 32
        %v1894 = vpop.permute.xlu0 %1893
        %1895 = vrot.lane.b32.xlu0 %v1803, 32
        %v1896 = vpop.permute.xlu0 %1895
        %1897 = vrot.lane.b32.xlu0 %v1804, 32
        %v1898 = vpop.permute.xlu0 %1897
        %1899 = vrot.lane.b32.xlu0 %v1805, 32
        %v1900 = vpop.permute.xlu0 %1899
        %1901 = vrot.lane.b32.xlu0 %v1806, 32
        %v1902 = vpop.permute.xlu0 %1901
        %vm1935 = vcmask 294144
        %1936 = vst.msk [vmem:[#allocation3] sm:$0xff] %vm1935, %v1840
        %1937 = vst.msk [vmem:[#allocation3 + $0x8] sm:$0xff] %vm1935, %v1842
        %1938 = vst.msk [vmem:[#allocation3 + $0x10] sm:$0xff] %vm1935, %v1844
        %1939 = vst.msk [vmem:[#allocation3 + $0x18] sm:$0xff] %vm1935, %v1846
        %1940 = vst.msk [vmem:[#allocation3 + $0x20] sm:$0xff] %vm1935, %v1848
        %1941 = vst.msk [vmem:[#allocation3 + $0x28] sm:$0xff] %vm1935, %v1850
        %1942 = vst.msk [vmem:[#allocation3 + $0x30] sm:$0xff] %vm1935, %v1852
        %1943 = vst.msk [vmem:[#allocation3 + $0x38] sm:$0xff] %vm1935, %v1854
        %1944 = vst.msk [vmem:[#allocation3 + $0x40] sm:$0xff] %vm1935, %v1856
        %1945 = vst.msk [vmem:[#allocation3 + $0x48] sm:$0xff] %vm1935, %v1858
        %1946 = vst.msk [vmem:[#allocation3 + $0x50] sm:$0xff] %vm1935, %v1860
        %1947 = vst.msk [vmem:[#allocation3 + $0x58] sm:$0xff] %vm1935, %v1862
        %1948 = vst.msk [vmem:[#allocation3 + $0x60] sm:$0xff] %vm1935, %v1864
        %1949 = vst.msk [vmem:[#allocation3 + $0x68] sm:$0xff] %vm1935, %v1866
        %1950 = vst.msk [vmem:[#allocation3 + $0x70] sm:$0xff] %vm1935, %v1868
        %1951 = vst.msk [vmem:[#allocation3 + $0x78] sm:$0xff] %vm1935, %v1870
        %1952 = vst.msk [vmem:[#allocation3 + $0x80] sm:$0xff] %vm1935, %v1872
        %1953 = vst.msk [vmem:[#allocation3 + $0x88] sm:$0xff] %vm1935, %v1874
        %1954 = vst.msk [vmem:[#allocation3 + $0x90] sm:$0xff] %vm1935, %v1876
        %1955 = vst.msk [vmem:[#allocation3 + $0x98] sm:$0xff] %vm1935, %v1878
        %1956 = vst.msk [vmem:[#allocation3 + $0xa0] sm:$0xff] %vm1935, %v1880
        %1957 = vst.msk [vmem:[#allocation3 + $0xa8] sm:$0xff] %vm1935, %v1882
        %1958 = vst.msk [vmem:[#allocation3 + $0xb0] sm:$0xff] %vm1935, %v1884
        %1959 = vst.msk [vmem:[#allocation3 + $0xb8] sm:$0xff] %vm1935, %v1886
        %1960 = vst.msk [vmem:[#allocation3 + $0xc0] sm:$0xff] %vm1935, %v1888
        %1961 = vst.msk [vmem:[#allocation3 + $0xc8] sm:$0xff] %vm1935, %v1890
        %1962 = vst.msk [vmem:[#allocation3 + $0xd0] sm:$0xff] %vm1935, %v1892
        %1963 = vst.msk [vmem:[#allocation3 + $0xd8] sm:$0xff] %vm1935, %v1894
        %1964 = vst.msk [vmem:[#allocation3 + $0xe0] sm:$0xff] %vm1935, %v1896
        %1965 = vst.msk [vmem:[#allocation3 + $0xe8] sm:$0xff] %vm1935, %v1898
        %1966 = vst.msk [vmem:[#allocation3 + $0xf0] sm:$0xff] %vm1935, %v1900
        %1967 = vst.msk [vmem:[#allocation3 + $0xf8] sm:$0xff] %vm1935, %v1902
        %v1968 = vld [vmem:[#allocation3] sm:$0xff]
        %v1969 = vld [vmem:[#allocation3 + $0x8] sm:$0xff]
        %v1970 = vld [vmem:[#allocation3 + $0x10] sm:$0xff]
        %v1971 = vld [vmem:[#allocation3 + $0x18] sm:$0xff]
        %v1972 = vld [vmem:[#allocation3 + $0x20] sm:$0xff]
        %v1973 = vld [vmem:[#allocation3 + $0x28] sm:$0xff]
        %v1974 = vld [vmem:[#allocation3 + $0x30] sm:$0xff]
        %v1975 = vld [vmem:[#allocation3 + $0x38] sm:$0xff]
        %v1976 = vld [vmem:[#allocation3 + $0x40] sm:$0xff]
        %v1977 = vld [vmem:[#allocation3 + $0x48] sm:$0xff]
        %v1978 = vld [vmem:[#allocation3 + $0x50] sm:$0xff]
        %v1979 = vld [vmem:[#allocation3 + $0x58] sm:$0xff]
        %v1980 = vld [vmem:[#allocation3 + $0x60] sm:$0xff]
        %v1981 = vld [vmem:[#allocation3 + $0x68] sm:$0xff]
        %v1982 = vld [vmem:[#allocation3 + $0x70] sm:$0xff]
        %v1983 = vld [vmem:[#allocation3 + $0x78] sm:$0xff]
        %v1984 = vld [vmem:[#allocation3 + $0x80] sm:$0xff]
        %v1985 = vld [vmem:[#allocation3 + $0x88] sm:$0xff]
        %v1986 = vld [vmem:[#allocation3 + $0x90] sm:$0xff]
        %v1987 = vld [vmem:[#allocation3 + $0x98] sm:$0xff]
        %v1988 = vld [vmem:[#allocation3 + $0xa0] sm:$0xff]
        %v1989 = vld [vmem:[#allocation3 + $0xa8] sm:$0xff]
        %v1990 = vld [vmem:[#allocation3 + $0xb0] sm:$0xff]
        %v1991 = vld [vmem:[#allocation3 + $0xb8] sm:$0xff]
        %v1992 = vld [vmem:[#allocation3 + $0xc0] sm:$0xff]
        %v1993 = vld [vmem:[#allocation3 + $0xc8] sm:$0xff]
        %v1994 = vld [vmem:[#allocation3 + $0xd0] sm:$0xff]
        %v1995 = vld [vmem:[#allocation3 + $0xd8] sm:$0xff]
        %v1996 = vld [vmem:[#allocation3 + $0xe0] sm:$0xff]
        %v1997 = vld [vmem:[#allocation3 + $0xe8] sm:$0xff]
        %v1998 = vld [vmem:[#allocation3 + $0xf0] sm:$0xff]
        %v1999 = vld [vmem:[#allocation3 + $0xf8] sm:$0xff]
        %v2000 = vld [vmem:[%s1] sm:$0xff]
        %v2001 = vld [vmem:[%s1 + $0x8] sm:$0xff]
        %v2002 = vld [vmem:[%s1 + $0x10] sm:$0xff]
        %v2003 = vld [vmem:[%s1 + $0x18] sm:$0xff]
        %v2004 = vld [vmem:[%s1 + $0x20] sm:$0xf]
        %vm2005 = vcmask 293888
        %v2007 = vsel %vm2005, %v1968, 0
        %v2010 = vsel %vm2005, %v1969, 0
        %v2013 = vsel %vm2005, %v1970, 0
        %v2016 = vsel %vm2005, %v1971, 0
        %v2019 = vsel %vm2005, %v1972, 0
        %v2022 = vsel %vm2005, %v1973, 0
        %v2025 = vsel %vm2005, %v1974, 0
        %v2028 = vsel %vm2005, %v1975, 0
        %v2031 = vsel %vm2005, %v1976, 0
        %v2034 = vsel %vm2005, %v1977, 0
        %v2037 = vsel %vm2005, %v1978, 0
        %v2040 = vsel %vm2005, %v1979, 0
        %v2043 = vsel %vm2005, %v1980, 0
        %v2046 = vsel %vm2005, %v1981, 0
        %v2049 = vsel %vm2005, %v1982, 0
        %v2052 = vsel %vm2005, %v1983, 0
        %v2055 = vsel %vm2005, %v1984, 0
        %v2058 = vsel %vm2005, %v1985, 0
        %v2061 = vsel %vm2005, %v1986, 0
        %v2064 = vsel %vm2005, %v1987, 0
        %v2067 = vsel %vm2005, %v1988, 0
        %v2070 = vsel %vm2005, %v1989, 0
        %v2073 = vsel %vm2005, %v1990, 0
        %v2076 = vsel %vm2005, %v1991, 0
        %v2079 = vsel %vm2005, %v1992, 0
        %v2082 = vsel %vm2005, %v1993, 0
        %v2085 = vsel %vm2005, %v1994, 0
        %v2088 = vsel %vm2005, %v1995, 0
        %v2091 = vsel %vm2005, %v1996, 0
        %v2094 = vsel %vm2005, %v1997, 0
        %v2097 = vsel %vm2005, %v1998, 0
        %v2100 = vsel %vm2005, %v1999, 0
        %vm2102 = vcmask 1043456
        %v2104 = vsel %vm2102, %v2004, 0
        %2106 = vmatprep.subr.mxu0 0.0
        %2107 = vmatpush1.msra.mxu0 %v2000
        %2108 = vmatprep.subr.mxu0 0.0
        %2109 = vmatpush1.msra.mxu0 %v2001
        %2110 = vmatprep.subr.mxu0 0.0
        %2111 = vmatpush1.msra.mxu0 %v2002
        %2112 = vmatprep.subr.mxu0 0.0
        %2113 = vmatpush1.msra.mxu0 %v2003
        %2114 = vmatprep.subr.mxu0 0.0
        %2115 = vmatpush1.msra.mxu0 %v2104
        %2116 = vmatprep.subr.mxu0 0.0
        %2117 = vmatpush1.msra.mxu0 0.0
        %2118 = vmatprep.subr.mxu0 0.0
        %2119 = vmatpush1.msra.mxu0 0.0
        %2120 = vmatprep.subr.mxu0 0.0
        %2121 = vmatpush1.msra.mxu0 0.0
        %2122 = vmatprep.subr.mxu0 0.0
        %2123 = vmatpush1.msra.mxu0 0.0
        %2124 = vmatprep.subr.mxu0 0.0
        %2125 = vmatpush1.msra.mxu0 0.0
        %2126 = vmatprep.subr.mxu0 0.0
        %2127 = vmatpush1.msra.mxu0 0.0
        %2128 = vmatprep.subr.mxu0 0.0
        %2129 = vmatpush1.msra.mxu0 0.0
        %2130 = vmatprep.subr.mxu0 0.0
        %2131 = vmatpush1.msra.mxu0 0.0
        %2132 = vmatprep.subr.mxu0 0.0
        %2133 = vmatpush1.msra.mxu0 0.0
        %2134 = vmatprep.subr.mxu0 0.0
        %2135 = vmatpush1.msra.mxu0 0.0
        %2136 = vmatprep.subr.mxu0 0.0
        %2137 = vmatpush1.msra.mxu0 0.0
        %2138 = vmatprep.subr.mxu0 0.0
        %2139 = vmatpush1.msra.mxu0 0.0
        %2140 = vmatprep.subr.mxu0 0.0
        %2141 = vmatpush1.msra.mxu0 0.0
        %2142 = vmatprep.subr.mxu0 0.0
        %2143 = vmatpush1.msra.mxu0 0.0
        %2144 = vmatprep.subr.mxu0 0.0
        %2145 = vmatpush1.msra.mxu0 0.0
        %2146 = vmatprep.subr.mxu0 0.0
        %2147 = vmatpush1.msra.mxu0 0.0
        %2148 = vmatprep.subr.mxu0 0.0
        %2149 = vmatpush1.msra.mxu0 0.0
        %2150 = vmatprep.subr.mxu0 0.0
        %2151 = vmatpush1.msra.mxu0 0.0
        %2152 = vmatprep.subr.mxu0 0.0
        %2153 = vmatpush1.msra.mxu0 0.0
        %2154 = vmatprep.subr.mxu0 0.0
        %2155 = vmatpush1.msra.mxu0 0.0
        %2156 = vmatprep.subr.mxu0 0.0
        %2157 = vmatpush1.msra.mxu0 0.0
        %2158 = vmatprep.subr.mxu0 0.0
        %2159 = vmatpush1.msra.mxu0 0.0
        %2160 = vmatprep.subr.mxu0 0.0
        %2161 = vmatpush1.msra.mxu0 0.0
        %2162 = vmatprep.subr.mxu0 0.0
        %2163 = vmatpush1.msra.mxu0 0.0
        %2164 = vmatprep.subr.mxu0 0.0
        %2165 = vmatpush1.msra.mxu0 0.0
        %2166 = vmatprep.subr.mxu0 0.0
        %2167 = vmatpush1.msra.mxu0 0.0
        %2168 = vmatprep.subr.mxu0 0.0
        %2169 = vmatpush1.msra.mxu0 0.0
        %2170 = vmatprep.mubr.f32.mxu0 0.0
        %2171 = vmatmul.mubr.f32.gmra.mrb[0].mxu0 %v2007
        %v2172 = vpop.f32.mrb[0].mxu0
        %v2173 = vadd.f32 0.0, %v2172
        %v2174 = vpop.f32.mrb[0].mxu0
        %2175 = vmatprep.mubr.f32.mxu0 0.0
        %2176 = vmatmul.mubr.f32.gmra.mrb[0].mxu0 %v2010
        %v2177 = vpop.f32.mrb[0].mxu0
        %v2178 = vadd.f32 0.0, %v2177
        %v2179 = vpop.f32.mrb[0].mxu0
        %2180 = vmatprep.mubr.f32.mxu0 0.0
        %2181 = vmatmul.mubr.f32.gmra.mrb[0].mxu0 %v2013
        %v2182 = vpop.f32.mrb[0].mxu0
        %v2183 = vadd.f32 0.0, %v2182
        %v2184 = vpop.f32.mrb[0].mxu0
        %2185 = vmatprep.mubr.f32.mxu0 0.0
        %2186 = vmatmul.mubr.f32.gmra.mrb[0].mxu0 %v2016
        %v2187 = vpop.f32.mrb[0].mxu0
        %v2188 = vadd.f32 0.0, %v2187
        %v2189 = vpop.f32.mrb[0].mxu0
        %2190 = vmatprep.mubr.f32.mxu0 0.0
        %2191 = vmatmul.mubr.f32.gmra.mrb[0].mxu0 %v2019
        %v2192 = vpop.f32.mrb[0].mxu0
        %v2193 = vadd.f32 0.0, %v2192
        %v2194 = vpop.f32.mrb[0].mxu0
        %2195 = vmatprep.mubr.f32.mxu0 0.0
        %2196 = vmatmul.mubr.f32.gmra.mrb[0].mxu0 %v2022
        %v2197 = vpop.f32.mrb[0].mxu0
        %v2198 = vadd.f32 0.0, %v2197
        %v2199 = vpop.f32.mrb[0].mxu0
        %2200 = vmatprep.mubr.f32.mxu0 0.0
        %2201 = vmatmul.mubr.f32.gmra.mrb[0].mxu0 %v2025
        %v2202 = vpop.f32.mrb[0].mxu0
        %v2203 = vadd.f32 0.0, %v2202
        %v2204 = vpop.f32.mrb[0].mxu0
        %2205 = vmatprep.mubr.f32.mxu0 0.0
        %2206 = vmatmul.mubr.f32.gmra.mrb[0].mxu0 %v2028
        %v2207 = vpop.f32.mrb[0].mxu0
        %v2208 = vadd.f32 0.0, %v2207
        %v2209 = vpop.f32.mrb[0].mxu0
        %2210 = vmatprep.mubr.f32.mxu0 0.0
        %2211 = vmatmul.mubr.f32.gmra.mrb[0].mxu0 %v2031
        %v2212 = vpop.f32.mrb[0].mxu0
        %v2213 = vadd.f32 0.0, %v2212
        %v2214 = vpop.f32.mrb[0].mxu0
        %2215 = vmatprep.mubr.f32.mxu0 0.0
        %2216 = vmatmul.mubr.f32.gmra.mrb[0].mxu0 %v2034
        %v2217 = vpop.f32.mrb[0].mxu0
        %v2218 = vadd.f32 0.0, %v2217
        %v2219 = vpop.f32.mrb[0].mxu0
        %2220 = vmatprep.mubr.f32.mxu0 0.0
        %2221 = vmatmul.mubr.f32.gmra.mrb[0].mxu0 %v2037
        %v2222 = vpop.f32.mrb[0].mxu0
        %v2223 = vadd.f32 0.0, %v2222
        %v2224 = vpop.f32.mrb[0].mxu0
        %2225 = vmatprep.mubr.f32.mxu0 0.0
        %2226 = vmatmul.mubr.f32.gmra.mrb[0].mxu0 %v2040
        %v2227 = vpop.f32.mrb[0].mxu0
        %v2228 = vadd.f32 0.0, %v2227
        %v2229 = vpop.f32.mrb[0].mxu0
        %2230 = vmatprep.mubr.f32.mxu0 0.0
        %2231 = vmatmul.mubr.f32.gmra.mrb[0].mxu0 %v2043
        %v2232 = vpop.f32.mrb[0].mxu0
        %v2233 = vadd.f32 0.0, %v2232
        %v2234 = vpop.f32.mrb[0].mxu0
        %2235 = vmatprep.mubr.f32.mxu0 0.0
        %2236 = vmatmul.mubr.f32.gmra.mrb[0].mxu0 %v2046
        %v2237 = vpop.f32.mrb[0].mxu0
        %v2238 = vadd.f32 0.0, %v2237
        %v2239 = vpop.f32.mrb[0].mxu0
        %2240 = vmatprep.mubr.f32.mxu0 0.0
        %2241 = vmatmul.mubr.f32.gmra.mrb[0].mxu0 %v2049
        %v2242 = vpop.f32.mrb[0].mxu0
        %v2243 = vadd.f32 0.0, %v2242
        %v2244 = vpop.f32.mrb[0].mxu0
        %2245 = vmatprep.mubr.f32.mxu0 0.0
        %2246 = vmatmul.mubr.f32.gmra.mrb[0].mxu0 %v2052
        %v2247 = vpop.f32.mrb[0].mxu0
        %v2248 = vadd.f32 0.0, %v2247
        %v2249 = vpop.f32.mrb[0].mxu0
        %2250 = vmatprep.mubr.f32.mxu0 0.0
        %2251 = vmatmul.mubr.f32.gmra.mrb[0].mxu0 %v2055
        %v2252 = vpop.f32.mrb[0].mxu0
        %v2253 = vadd.f32 0.0, %v2252
        %v2254 = vpop.f32.mrb[0].mxu0
        %2255 = vmatprep.mubr.f32.mxu0 0.0
        %2256 = vmatmul.mubr.f32.gmra.mrb[0].mxu0 %v2058
        %v2257 = vpop.f32.mrb[0].mxu0
        %v2258 = vadd.f32 0.0, %v2257
        %v2259 = vpop.f32.mrb[0].mxu0
        %2260 = vmatprep.mubr.f32.mxu0 0.0
        %2261 = vmatmul.mubr.f32.gmra.mrb[0].mxu0 %v2061
        %v2262 = vpop.f32.mrb[0].mxu0
        %v2263 = vadd.f32 0.0, %v2262
        %v2264 = vpop.f32.mrb[0].mxu0
        %2265 = vmatprep.mubr.f32.mxu0 0.0
        %2266 = vmatmul.mubr.f32.gmra.mrb[0].mxu0 %v2064
        %v2267 = vpop.f32.mrb[0].mxu0
        %v2268 = vadd.f32 0.0, %v2267
        %v2269 = vpop.f32.mrb[0].mxu0
        %2270 = vmatprep.mubr.f32.mxu0 0.0
        %2271 = vmatmul.mubr.f32.gmra.mrb[0].mxu0 %v2067
        %v2272 = vpop.f32.mrb[0].mxu0
        %v2273 = vadd.f32 0.0, %v2272
        %v2274 = vpop.f32.mrb[0].mxu0
        %2275 = vmatprep.mubr.f32.mxu0 0.0
        %2276 = vmatmul.mubr.f32.gmra.mrb[0].mxu0 %v2070
        %v2277 = vpop.f32.mrb[0].mxu0
        %v2278 = vadd.f32 0.0, %v2277
        %v2279 = vpop.f32.mrb[0].mxu0
        %2280 = vmatprep.mubr.f32.mxu0 0.0
        %2281 = vmatmul.mubr.f32.gmra.mrb[0].mxu0 %v2073
        %v2282 = vpop.f32.mrb[0].mxu0
        %v2283 = vadd.f32 0.0, %v2282
        %v2284 = vpop.f32.mrb[0].mxu0
        %2285 = vmatprep.mubr.f32.mxu0 0.0
        %2286 = vmatmul.mubr.f32.gmra.mrb[0].mxu0 %v2076
        %v2287 = vpop.f32.mrb[0].mxu0
        %v2288 = vadd.f32 0.0, %v2287
        %v2289 = vpop.f32.mrb[0].mxu0
        %2290 = vmatprep.mubr.f32.mxu0 0.0
        %2291 = vmatmul.mubr.f32.gmra.mrb[0].mxu0 %v2079
        %v2292 = vpop.f32.mrb[0].mxu0
        %v2293 = vadd.f32 0.0, %v2292
        %v2294 = vpop.f32.mrb[0].mxu0
        %2295 = vmatprep.mubr.f32.mxu0 0.0
        %2296 = vmatmul.mubr.f32.gmra.mrb[0].mxu0 %v2082
        %v2297 = vpop.f32.mrb[0].mxu0
        %v2298 = vadd.f32 0.0, %v2297
        %v2299 = vpop.f32.mrb[0].mxu0
        %2300 = vmatprep.mubr.f32.mxu0 0.0
        %2301 = vmatmul.mubr.f32.gmra.mrb[0].mxu0 %v2085
        %v2302 = vpop.f32.mrb[0].mxu0
        %v2303 = vadd.f32 0.0, %v2302
        %v2304 = vpop.f32.mrb[0].mxu0
        %2305 = vmatprep.mubr.f32.mxu0 0.0
        %2306 = vmatmul.mubr.f32.gmra.mrb[0].mxu0 %v2088
        %v2307 = vpop.f32.mrb[0].mxu0
        %v2308 = vadd.f32 0.0, %v2307
        %v2309 = vpop.f32.mrb[0].mxu0
        %2310 = vmatprep.mubr.f32.mxu0 0.0
        %2311 = vmatmul.mubr.f32.gmra.mrb[0].mxu0 %v2091
        %v2312 = vpop.f32.mrb[0].mxu0
        %v2313 = vadd.f32 0.0, %v2312
        %v2314 = vpop.f32.mrb[0].mxu0
        %2315 = vmatprep.mubr.f32.mxu0 0.0
        %2316 = vmatmul.mubr.f32.gmra.mrb[0].mxu0 %v2094
        %v2317 = vpop.f32.mrb[0].mxu0
        %v2318 = vadd.f32 0.0, %v2317
        %v2319 = vpop.f32.mrb[0].mxu0
        %2320 = vmatprep.mubr.f32.mxu0 0.0
        %2321 = vmatmul.mubr.f32.gmra.mrb[0].mxu0 %v2097
        %v2322 = vpop.f32.mrb[0].mxu0
        %v2323 = vadd.f32 0.0, %v2322
        %v2324 = vpop.f32.mrb[0].mxu0
        %2325 = vmatprep.mubr.f32.mxu0 0.0
        %2326 = vmatmul.mubr.f32.gmra.mrb[0].mxu0 %v2100
        %v2327 = vpop.f32.mrb[0].mxu0
        %v2328 = vadd.f32 0.0, %v2327
        %v2329 = vpop.f32.mrb[0].mxu0
        %2330 = vdwg.mxu0
        %vm2331 = vcmask 64512
        %v2332 = vsel %vm2331, %v2173, 0.0
        %v2333 = vsel %vm2331, %v2178, 0.0
        %v2334 = vadd.f32 %v2332, %v2333
        %v2335 = vsel %vm2331, %v2183, 0.0
        %v2336 = vadd.f32 %v2334, %v2335
        %v2337 = vsel %vm2331, %v2188, 0.0
        %v2338 = vadd.f32 %v2336, %v2337
        %v2339 = vsel %vm2331, %v2193, 0.0
        %v2340 = vadd.f32 %v2338, %v2339
        %v2341 = vsel %vm2331, %v2198, 0.0
        %v2342 = vadd.f32 %v2340, %v2341
        %v2343 = vsel %vm2331, %v2203, 0.0
        %v2344 = vadd.f32 %v2342, %v2343
        %v2345 = vsel %vm2331, %v2208, 0.0
        %v2346 = vadd.f32 %v2344, %v2345
        %v2347 = vsel %vm2331, %v2213, 0.0
        %v2348 = vadd.f32 %v2346, %v2347
        %v2349 = vsel %vm2331, %v2218, 0.0
        %v2350 = vadd.f32 %v2348, %v2349
        %v2351 = vsel %vm2331, %v2223, 0.0
        %v2352 = vadd.f32 %v2350, %v2351
        %v2353 = vsel %vm2331, %v2228, 0.0
        %v2354 = vadd.f32 %v2352, %v2353
        %v2355 = vsel %vm2331, %v2233, 0.0
        %v2356 = vadd.f32 %v2354, %v2355
        %v2357 = vsel %vm2331, %v2238, 0.0
        %v2358 = vadd.f32 %v2356, %v2357
        %v2359 = vsel %vm2331, %v2243, 0.0
        %v2360 = vadd.f32 %v2358, %v2359
        %v2361 = vsel %vm2331, %v2248, 0.0
        %v2362 = vadd.f32 %v2360, %v2361
        %v2363 = vsel %vm2331, %v2253, 0.0
        %v2364 = vadd.f32 %v2362, %v2363
        %v2365 = vsel %vm2331, %v2258, 0.0
        %v2366 = vadd.f32 %v2364, %v2365
        %v2367 = vsel %vm2331, %v2263, 0.0
        %v2368 = vadd.f32 %v2366, %v2367
        %v2369 = vsel %vm2331, %v2268, 0.0
        %v2370 = vadd.f32 %v2368, %v2369
        %v2371 = vsel %vm2331, %v2273, 0.0
        %v2372 = vadd.f32 %v2370, %v2371
        %v2373 = vsel %vm2331, %v2278, 0.0
        %v2374 = vadd.f32 %v2372, %v2373
        %v2375 = vsel %vm2331, %v2283, 0.0
        %v2376 = vadd.f32 %v2374, %v2375
        %v2377 = vsel %vm2331, %v2288, 0.0
        %v2378 = vadd.f32 %v2376, %v2377
        %v2379 = vsel %vm2331, %v2293, 0.0
        %v2380 = vadd.f32 %v2378, %v2379
        %v2381 = vsel %vm2331, %v2298, 0.0
        %v2382 = vadd.f32 %v2380, %v2381
        %v2383 = vsel %vm2331, %v2303, 0.0
        %v2384 = vadd.f32 %v2382, %v2383
        %v2385 = vsel %vm2331, %v2308, 0.0
        %v2386 = vadd.f32 %v2384, %v2385
        %v2387 = vsel %vm2331, %v2313, 0.0
        %v2388 = vadd.f32 %v2386, %v2387
        %v2389 = vsel %vm2331, %v2318, 0.0
        %v2390 = vadd.f32 %v2388, %v2389
        %v2391 = vsel %vm2331, %v2323, 0.0
        %v2392 = vadd.f32 %v2390, %v2391
        %v2393 = vsel %vm2331, %v2328, 0.0
        %v2394 = vadd.f32 %v2392, %v2393
        %v2395 = vrot.slane %v2394, 4
        %v2396 = vadd.f32 %v2394, %v2395
        %v2397 = vrot.slane %v2396, 2
        %v2398 = vadd.f32 %v2396, %v2397
        %v2399 = vrot.slane %v2398, 1
        %v2400 = vadd.f32 %v2398, %v2399
        %v2401 = vmul.f32 %v2173, %v2173
        %v2402 = vmul.f32 %v2178, %v2178
        %v2403 = vmul.f32 %v2183, %v2183
        %v2404 = vmul.f32 %v2188, %v2188
        %v2405 = vmul.f32 %v2193, %v2193
        %v2406 = vmul.f32 %v2198, %v2198
        %v2407 = vmul.f32 %v2203, %v2203
        %v2408 = vmul.f32 %v2208, %v2208
        %v2409 = vmul.f32 %v2213, %v2213
        %v2410 = vmul.f32 %v2218, %v2218
        %v2411 = vmul.f32 %v2223, %v2223
        %v2412 = vmul.f32 %v2228, %v2228
        %v2413 = vmul.f32 %v2233, %v2233
        %v2414 = vmul.f32 %v2238, %v2238
        %v2415 = vmul.f32 %v2243, %v2243
        %v2416 = vmul.f32 %v2248, %v2248
        %v2417 = vmul.f32 %v2253, %v2253
        %v2418 = vmul.f32 %v2258, %v2258
        %v2419 = vmul.f32 %v2263, %v2263
        %v2420 = vmul.f32 %v2268, %v2268
        %v2421 = vmul.f32 %v2273, %v2273
        %v2422 = vmul.f32 %v2278, %v2278
        %v2423 = vmul.f32 %v2283, %v2283
        %v2424 = vmul.f32 %v2288, %v2288
        %v2425 = vmul.f32 %v2293, %v2293
        %v2426 = vmul.f32 %v2298, %v2298
        %v2427 = vmul.f32 %v2303, %v2303
        %v2428 = vmul.f32 %v2308, %v2308
        %v2429 = vmul.f32 %v2313, %v2313
        %v2430 = vmul.f32 %v2318, %v2318
        %v2431 = vmul.f32 %v2323, %v2323
        %v2432 = vmul.f32 %v2328, %v2328
        %v2433 = vsel %vm2331, %v2401, 0.0
        %v2434 = vsel %vm2331, %v2402, 0.0
        %v2435 = vadd.f32 %v2433, %v2434
        %v2436 = vsel %vm2331, %v2403, 0.0
        %v2437 = vadd.f32 %v2435, %v2436
        %v2438 = vsel %vm2331, %v2404, 0.0
        %v2439 = vadd.f32 %v2437, %v2438
        %v2440 = vsel %vm2331, %v2405, 0.0
        %v2441 = vadd.f32 %v2439, %v2440
        %v2442 = vsel %vm2331, %v2406, 0.0
        %v2443 = vadd.f32 %v2441, %v2442
        %v2444 = vsel %vm2331, %v2407, 0.0
        %v2445 = vadd.f32 %v2443, %v2444
        %v2446 = vsel %vm2331, %v2408, 0.0
        %v2447 = vadd.f32 %v2445, %v2446
        %v2448 = vsel %vm2331, %v2409, 0.0
        %v2449 = vadd.f32 %v2447, %v2448
        %v2450 = vsel %vm2331, %v2410, 0.0
        %v2451 = vadd.f32 %v2449, %v2450
        %v2452 = vsel %vm2331, %v2411, 0.0
        %v2453 = vadd.f32 %v2451, %v2452
        %v2454 = vsel %vm2331, %v2412, 0.0
        %v2455 = vadd.f32 %v2453, %v2454
        %v2456 = vsel %vm2331, %v2413, 0.0
        %v2457 = vadd.f32 %v2455, %v2456
        %v2458 = vsel %vm2331, %v2414, 0.0
        %v2459 = vadd.f32 %v2457, %v2458
        %v2460 = vsel %vm2331, %v2415, 0.0
        %v2461 = vadd.f32 %v2459, %v2460
        %v2462 = vsel %vm2331, %v2416, 0.0
        %v2463 = vadd.f32 %v2461, %v2462
        %v2464 = vsel %vm2331, %v2417, 0.0
        %v2465 = vadd.f32 %v2463, %v2464
        %v2466 = vsel %vm2331, %v2418, 0.0
        %v2467 = vadd.f32 %v2465, %v2466
        %v2468 = vsel %vm2331, %v2419, 0.0
        %v2469 = vadd.f32 %v2467, %v2468
        %v2470 = vsel %vm2331, %v2420, 0.0
        %v2471 = vadd.f32 %v2469, %v2470
        %v2472 = vsel %vm2331, %v2421, 0.0
        %v2473 = vadd.f32 %v2471, %v2472
        %v2474 = vsel %vm2331, %v2422, 0.0
        %v2475 = vadd.f32 %v2473, %v2474
        %v2476 = vsel %vm2331, %v2423, 0.0
        %v2477 = vadd.f32 %v2475, %v2476
        %v2478 = vsel %vm2331, %v2424, 0.0
        %v2479 = vadd.f32 %v2477, %v2478
        %v2480 = vsel %vm2331, %v2425, 0.0
        %v2481 = vadd.f32 %v2479, %v2480
        %v2482 = vsel %vm2331, %v2426, 0.0
        %v2483 = vadd.f32 %v2481, %v2482
        %v2484 = vsel %vm2331, %v2427, 0.0
        %v2485 = vadd.f32 %v2483, %v2484
        %v2486 = vsel %vm2331, %v2428, 0.0
        %v2487 = vadd.f32 %v2485, %v2486
        %v2488 = vsel %vm2331, %v2429, 0.0
        %v2489 = vadd.f32 %v2487, %v2488
        %v2490 = vsel %vm2331, %v2430, 0.0
        %v2491 = vadd.f32 %v2489, %v2490
        %v2492 = vsel %vm2331, %v2431, 0.0
        %v2493 = vadd.f32 %v2491, %v2492
        %v2494 = vsel %vm2331, %v2432, 0.0
        %v2495 = vadd.f32 %v2493, %v2494
        %v2496 = vrot.slane %v2495, 4
        %v2497 = vadd.f32 %v2495, %v2496
        %v2498 = vrot.slane %v2497, 2
        %v2499 = vadd.f32 %v2497, %v2498
        %v2500 = vrot.slane %v2499, 1
        %v2501 = vadd.f32 %v2499, %v2500
        %2502 = vst.msk [vmem:[%s242] sm:$0xff] %vm2331, %v2173
        %2503 = vst.msk [vmem:[%s242 + $0x8] sm:$0xff] %vm2331, %v2178
        %2504 = vst.msk [vmem:[%s242 + $0x10] sm:$0xff] %vm2331, %v2183
        %2505 = vst.msk [vmem:[%s242 + $0x18] sm:$0xff] %vm2331, %v2188
        %2506 = vst.msk [vmem:[%s242 + $0x20] sm:$0xff] %vm2331, %v2193
        %2507 = vst.msk [vmem:[%s242 + $0x28] sm:$0xff] %vm2331, %v2198
        %2508 = vst.msk [vmem:[%s242 + $0x30] sm:$0xff] %vm2331, %v2203
        %2509 = vst.msk [vmem:[%s242 + $0x38] sm:$0xff] %vm2331, %v2208
        %2510 = vst.msk [vmem:[%s242 + $0x40] sm:$0xff] %vm2331, %v2213
        %2511 = vst.msk [vmem:[%s242 + $0x48] sm:$0xff] %vm2331, %v2218
        %2512 = vst.msk [vmem:[%s242 + $0x50] sm:$0xff] %vm2331, %v2223
        %2513 = vst.msk [vmem:[%s242 + $0x58] sm:$0xff] %vm2331, %v2228
        %2514 = vst.msk [vmem:[%s242 + $0x60] sm:$0xff] %vm2331, %v2233
        %2515 = vst.msk [vmem:[%s242 + $0x68] sm:$0xff] %vm2331, %v2238
        %2516 = vst.msk [vmem:[%s242 + $0x70] sm:$0xff] %vm2331, %v2243
        %2517 = vst.msk [vmem:[%s242 + $0x78] sm:$0xff] %vm2331, %v2248
        %2518 = vst.msk [vmem:[%s242 + $0x80] sm:$0xff] %vm2331, %v2253
        %2519 = vst.msk [vmem:[%s242 + $0x88] sm:$0xff] %vm2331, %v2258
        %2520 = vst.msk [vmem:[%s242 + $0x90] sm:$0xff] %vm2331, %v2263
        %2521 = vst.msk [vmem:[%s242 + $0x98] sm:$0xff] %vm2331, %v2268
        %2522 = vst.msk [vmem:[%s242 + $0xa0] sm:$0xff] %vm2331, %v2273
        %2523 = vst.msk [vmem:[%s242 + $0xa8] sm:$0xff] %vm2331, %v2278
        %2524 = vst.msk [vmem:[%s242 + $0xb0] sm:$0xff] %vm2331, %v2283
        %2525 = vst.msk [vmem:[%s242 + $0xb8] sm:$0xff] %vm2331, %v2288
        %2526 = vst.msk [vmem:[%s242 + $0xc0] sm:$0xff] %vm2331, %v2293
        %2527 = vst.msk [vmem:[%s242 + $0xc8] sm:$0xff] %vm2331, %v2298
        %2528 = vst.msk [vmem:[%s242 + $0xd0] sm:$0xff] %vm2331, %v2303
        %2529 = vst.msk [vmem:[%s242 + $0xd8] sm:$0xff] %vm2331, %v2308
        %2530 = vst.msk [vmem:[%s242 + $0xe0] sm:$0xff] %vm2331, %v2313
        %2531 = vst.msk [vmem:[%s242 + $0xe8] sm:$0xff] %vm2331, %v2318
        %2532 = vst.msk [vmem:[%s242 + $0xf0] sm:$0xff] %vm2331, %v2323
        %2533 = vst.msk [vmem:[%s242 + $0xf8] sm:$0xff] %vm2331, %v2328
        %vm2534 = vcmask 57344
        %2535 = vst.msk [vmem:[%s232] sm:$0x1] %vm2534, %v2400
        %2536 = vst.msk [vmem:[%s232 + $0x1] sm:$0x1] %vm2534, %v2501
        %v2537 = vld [vmem:[%s2] sm:$0xf]
        %v2539 = vsel %vm280, %v248, 0
        %v2542 = vsel %vm280, %v249, 0
        %v2545 = vsel %vm280, %v250, 0
        %v2548 = vsel %vm280, %v251, 0
        %v2551 = vsel %vm280, %v252, 0
        %v2554 = vsel %vm280, %v253, 0
        %v2557 = vsel %vm280, %v254, 0
        %v2560 = vsel %vm280, %v255, 0
        %v2563 = vsel %vm280, %v256, 0
        %v2566 = vsel %vm280, %v257, 0
        %v2569 = vsel %vm280, %v258, 0
        %v2572 = vsel %vm280, %v259, 0
        %v2575 = vsel %vm280, %v260, 0
        %v2578 = vsel %vm280, %v261, 0
        %v2581 = vsel %vm280, %v262, 0
        %v2584 = vsel %vm280, %v263, 0
        %v2587 = vsel %vm280, %v264, 0
        %v2590 = vsel %vm280, %v265, 0
        %v2593 = vsel %vm280, %v266, 0
        %v2596 = vsel %vm280, %v267, 0
        %v2599 = vsel %vm280, %v268, 0
        %v2602 = vsel %vm280, %v269, 0
        %v2605 = vsel %vm280, %v270, 0
        %v2608 = vsel %vm280, %v271, 0
        %v2611 = vsel %vm280, %v272, 0
        %v2614 = vsel %vm280, %v273, 0
        %v2617 = vsel %vm280, %v274, 0
        %v2620 = vsel %vm280, %v275, 0
        %v2623 = vsel %vm280, %v276, 0
        %v2626 = vsel %vm280, %v277, 0
        %v2629 = vsel %vm280, %v278, 0
        %v2632 = vsel %vm280, %v279, 0
        %v2635 = vsel %vm2102, %v2537, 0
        %2637 = vmatprep.subr.mxu0 0.0
        %2638 = vmatpush1.msra.mxu0 %v2635
        %2639 = vmatprep.subr.mxu0 0.0
        %2640 = vmatpush1.msra.mxu0 0.0
        %2641 = vmatprep.subr.mxu0 0.0
        %2642 = vmatpush1.msra.mxu0 0.0
        %2643 = vmatprep.subr.mxu0 0.0
        %2644 = vmatpush1.msra.mxu0 0.0
        %2645 = vmatprep.subr.mxu0 0.0
        %2646 = vmatpush1.msra.mxu0 0.0
        %2647 = vmatprep.subr.mxu0 0.0
        %2648 = vmatpush1.msra.mxu0 0.0
        %2649 = vmatprep.subr.mxu0 0.0
        %2650 = vmatpush1.msra.mxu0 0.0
        %2651 = vmatprep.subr.mxu0 0.0
        %2652 = vmatpush1.msra.mxu0 0.0
        %2653 = vmatprep.subr.mxu0 0.0
        %2654 = vmatpush1.msra.mxu0 0.0
        %2655 = vmatprep.subr.mxu0 0.0
        %2656 = vmatpush1.msra.mxu0 0.0
        %2657 = vmatprep.subr.mxu0 0.0
        %2658 = vmatpush1.msra.mxu0 0.0
        %2659 = vmatprep.subr.mxu0 0.0
        %2660 = vmatpush1.msra.mxu0 0.0
        %2661 = vmatprep.subr.mxu0 0.0
        %2662 = vmatpush1.msra.mxu0 0.0
        %2663 = vmatprep.subr.mxu0 0.0
        %2664 = vmatpush1.msra.mxu0 0.0
        %2665 = vmatprep.subr.mxu0 0.0
        %2666 = vmatpush1.msra.mxu0 0.0
        %2667 = vmatprep.subr.mxu0 0.0
        %2668 = vmatpush1.msra.mxu0 0.0
        %2669 = vmatprep.subr.mxu0 0.0
        %2670 = vmatpush1.msra.mxu0 0.0
        %2671 = vmatprep.subr.mxu0 0.0
        %2672 = vmatpush1.msra.mxu0 0.0
        %2673 = vmatprep.subr.mxu0 0.0
        %2674 = vmatpush1.msra.mxu0 0.0
        %2675 = vmatprep.subr.mxu0 0.0
        %2676 = vmatpush1.msra.mxu0 0.0
        %2677 = vmatprep.subr.mxu0 0.0
        %2678 = vmatpush1.msra.mxu0 0.0
        %2679 = vmatprep.subr.mxu0 0.0
        %2680 = vmatpush1.msra.mxu0 0.0
        %2681 = vmatprep.subr.mxu0 0.0
        %2682 = vmatpush1.msra.mxu0 0.0
        %2683 = vmatprep.subr.mxu0 0.0
        %2684 = vmatpush1.msra.mxu0 0.0
        %2685 = vmatprep.subr.mxu0 0.0
        %2686 = vmatpush1.msra.mxu0 0.0
        %2687 = vmatprep.subr.mxu0 0.0
        %2688 = vmatpush1.msra.mxu0 0.0
        %2689 = vmatprep.subr.mxu0 0.0
        %2690 = vmatpush1.msra.mxu0 0.0
        %2691 = vmatprep.subr.mxu0 0.0
        %2692 = vmatpush1.msra.mxu0 0.0
        %2693 = vmatprep.subr.mxu0 0.0
        %2694 = vmatpush1.msra.mxu0 0.0
        %2695 = vmatprep.subr.mxu0 0.0
        %2696 = vmatpush1.msra.mxu0 0.0
        %2697 = vmatprep.subr.mxu0 0.0
        %2698 = vmatpush1.msra.mxu0 0.0
        %2699 = vmatprep.subr.mxu0 0.0
        %2700 = vmatpush1.msra.mxu0 0.0
        %2701 = vmatprep.mubr.f32.mxu0 0.0
        %2702 = vmatmul.mubr.f32.gmra.mrb[0].mxu0 %v2539
        %v2703 = vpop.f32.mrb[0].mxu0
        %v2704 = vadd.f32 0.0, %v2703
        %v2705 = vpop.f32.mrb[0].mxu0
        %2706 = vmatprep.mubr.f32.mxu0 0.0
        %2707 = vmatmul.mubr.f32.gmra.mrb[0].mxu0 %v2542
        %v2708 = vpop.f32.mrb[0].mxu0
        %v2709 = vadd.f32 0.0, %v2708
        %v2710 = vpop.f32.mrb[0].mxu0
        %2711 = vmatprep.mubr.f32.mxu0 0.0
        %2712 = vmatmul.mubr.f32.gmra.mrb[0].mxu0 %v2545
        %v2713 = vpop.f32.mrb[0].mxu0
        %v2714 = vadd.f32 0.0, %v2713
        %v2715 = vpop.f32.mrb[0].mxu0
        %2716 = vmatprep.mubr.f32.mxu0 0.0
        %2717 = vmatmul.mubr.f32.gmra.mrb[0].mxu0 %v2548
        %v2718 = vpop.f32.mrb[0].mxu0
        %v2719 = vadd.f32 0.0, %v2718
        %v2720 = vpop.f32.mrb[0].mxu0
        %2721 = vmatprep.mubr.f32.mxu0 0.0
        %2722 = vmatmul.mubr.f32.gmra.mrb[0].mxu0 %v2551
        %v2723 = vpop.f32.mrb[0].mxu0
        %v2724 = vadd.f32 0.0, %v2723
        %v2725 = vpop.f32.mrb[0].mxu0
        %2726 = vmatprep.mubr.f32.mxu0 0.0
        %2727 = vmatmul.mubr.f32.gmra.mrb[0].mxu0 %v2554
        %v2728 = vpop.f32.mrb[0].mxu0
        %v2729 = vadd.f32 0.0, %v2728
        %v2730 = vpop.f32.mrb[0].mxu0
        %2731 = vmatprep.mubr.f32.mxu0 0.0
        %2732 = vmatmul.mubr.f32.gmra.mrb[0].mxu0 %v2557
        %v2733 = vpop.f32.mrb[0].mxu0
        %v2734 = vadd.f32 0.0, %v2733
        %v2735 = vpop.f32.mrb[0].mxu0
        %2736 = vmatprep.mubr.f32.mxu0 0.0
        %2737 = vmatmul.mubr.f32.gmra.mrb[0].mxu0 %v2560
        %v2738 = vpop.f32.mrb[0].mxu0
        %v2739 = vadd.f32 0.0, %v2738
        %v2740 = vpop.f32.mrb[0].mxu0
        %2741 = vmatprep.mubr.f32.mxu0 0.0
        %2742 = vmatmul.mubr.f32.gmra.mrb[0].mxu0 %v2563
        %v2743 = vpop.f32.mrb[0].mxu0
        %v2744 = vadd.f32 0.0, %v2743
        %v2745 = vpop.f32.mrb[0].mxu0
        %2746 = vmatprep.mubr.f32.mxu0 0.0
        %2747 = vmatmul.mubr.f32.gmra.mrb[0].mxu0 %v2566
        %v2748 = vpop.f32.mrb[0].mxu0
        %v2749 = vadd.f32 0.0, %v2748
        %v2750 = vpop.f32.mrb[0].mxu0
        %2751 = vmatprep.mubr.f32.mxu0 0.0
        %2752 = vmatmul.mubr.f32.gmra.mrb[0].mxu0 %v2569
        %v2753 = vpop.f32.mrb[0].mxu0
        %v2754 = vadd.f32 0.0, %v2753
        %v2755 = vpop.f32.mrb[0].mxu0
        %2756 = vmatprep.mubr.f32.mxu0 0.0
        %2757 = vmatmul.mubr.f32.gmra.mrb[0].mxu0 %v2572
        %v2758 = vpop.f32.mrb[0].mxu0
        %v2759 = vadd.f32 0.0, %v2758
        %v2760 = vpop.f32.mrb[0].mxu0
        %2761 = vmatprep.mubr.f32.mxu0 0.0
        %2762 = vmatmul.mubr.f32.gmra.mrb[0].mxu0 %v2575
        %v2763 = vpop.f32.mrb[0].mxu0
        %v2764 = vadd.f32 0.0, %v2763
        %v2765 = vpop.f32.mrb[0].mxu0
        %2766 = vmatprep.mubr.f32.mxu0 0.0
        %2767 = vmatmul.mubr.f32.gmra.mrb[0].mxu0 %v2578
        %v2768 = vpop.f32.mrb[0].mxu0
        %v2769 = vadd.f32 0.0, %v2768
        %v2770 = vpop.f32.mrb[0].mxu0
        %2771 = vmatprep.mubr.f32.mxu0 0.0
        %2772 = vmatmul.mubr.f32.gmra.mrb[0].mxu0 %v2581
        %v2773 = vpop.f32.mrb[0].mxu0
        %v2774 = vadd.f32 0.0, %v2773
        %v2775 = vpop.f32.mrb[0].mxu0
        %2776 = vmatprep.mubr.f32.mxu0 0.0
        %2777 = vmatmul.mubr.f32.gmra.mrb[0].mxu0 %v2584
        %v2778 = vpop.f32.mrb[0].mxu0
        %v2779 = vadd.f32 0.0, %v2778
        %v2780 = vpop.f32.mrb[0].mxu0
        %2781 = vmatprep.mubr.f32.mxu0 0.0
        %2782 = vmatmul.mubr.f32.gmra.mrb[0].mxu0 %v2587
        %v2783 = vpop.f32.mrb[0].mxu0
        %v2784 = vadd.f32 0.0, %v2783
        %v2785 = vpop.f32.mrb[0].mxu0
        %2786 = vmatprep.mubr.f32.mxu0 0.0
        %2787 = vmatmul.mubr.f32.gmra.mrb[0].mxu0 %v2590
        %v2788 = vpop.f32.mrb[0].mxu0
        %v2789 = vadd.f32 0.0, %v2788
        %v2790 = vpop.f32.mrb[0].mxu0
        %2791 = vmatprep.mubr.f32.mxu0 0.0
        %2792 = vmatmul.mubr.f32.gmra.mrb[0].mxu0 %v2593
        %v2793 = vpop.f32.mrb[0].mxu0
        %v2794 = vadd.f32 0.0, %v2793
        %v2795 = vpop.f32.mrb[0].mxu0
        %2796 = vmatprep.mubr.f32.mxu0 0.0
        %2797 = vmatmul.mubr.f32.gmra.mrb[0].mxu0 %v2596
        %v2798 = vpop.f32.mrb[0].mxu0
        %v2799 = vadd.f32 0.0, %v2798
        %v2800 = vpop.f32.mrb[0].mxu0
        %2801 = vmatprep.mubr.f32.mxu0 0.0
        %2802 = vmatmul.mubr.f32.gmra.mrb[0].mxu0 %v2599
        %v2803 = vpop.f32.mrb[0].mxu0
        %v2804 = vadd.f32 0.0, %v2803
        %v2805 = vpop.f32.mrb[0].mxu0
        %2806 = vmatprep.mubr.f32.mxu0 0.0
        %2807 = vmatmul.mubr.f32.gmra.mrb[0].mxu0 %v2602
        %v2808 = vpop.f32.mrb[0].mxu0
        %v2809 = vadd.f32 0.0, %v2808
        %v2810 = vpop.f32.mrb[0].mxu0
        %2811 = vmatprep.mubr.f32.mxu0 0.0
        %2812 = vmatmul.mubr.f32.gmra.mrb[0].mxu0 %v2605
        %v2813 = vpop.f32.mrb[0].mxu0
        %v2814 = vadd.f32 0.0, %v2813
        %v2815 = vpop.f32.mrb[0].mxu0
        %2816 = vmatprep.mubr.f32.mxu0 0.0
        %2817 = vmatmul.mubr.f32.gmra.mrb[0].mxu0 %v2608
        %v2818 = vpop.f32.mrb[0].mxu0
        %v2819 = vadd.f32 0.0, %v2818
        %v2820 = vpop.f32.mrb[0].mxu0
        %2821 = vmatprep.mubr.f32.mxu0 0.0
        %2822 = vmatmul.mubr.f32.gmra.mrb[0].mxu0 %v2611
        %v2823 = vpop.f32.mrb[0].mxu0
        %v2824 = vadd.f32 0.0, %v2823
        %v2825 = vpop.f32.mrb[0].mxu0
        %2826 = vmatprep.mubr.f32.mxu0 0.0
        %2827 = vmatmul.mubr.f32.gmra.mrb[0].mxu0 %v2614
        %v2828 = vpop.f32.mrb[0].mxu0
        %v2829 = vadd.f32 0.0, %v2828
        %v2830 = vpop.f32.mrb[0].mxu0
        %2831 = vmatprep.mubr.f32.mxu0 0.0
        %2832 = vmatmul.mubr.f32.gmra.mrb[0].mxu0 %v2617
        %v2833 = vpop.f32.mrb[0].mxu0
        %v2834 = vadd.f32 0.0, %v2833
        %v2835 = vpop.f32.mrb[0].mxu0
        %2836 = vmatprep.mubr.f32.mxu0 0.0
        %2837 = vmatmul.mubr.f32.gmra.mrb[0].mxu0 %v2620
        %v2838 = vpop.f32.mrb[0].mxu0
        %v2839 = vadd.f32 0.0, %v2838
        %v2840 = vpop.f32.mrb[0].mxu0
        %2841 = vmatprep.mubr.f32.mxu0 0.0
        %2842 = vmatmul.mubr.f32.gmra.mrb[0].mxu0 %v2623
        %v2843 = vpop.f32.mrb[0].mxu0
        %v2844 = vadd.f32 0.0, %v2843
        %v2845 = vpop.f32.mrb[0].mxu0
        %2846 = vmatprep.mubr.f32.mxu0 0.0
        %2847 = vmatmul.mubr.f32.gmra.mrb[0].mxu0 %v2626
        %v2848 = vpop.f32.mrb[0].mxu0
        %v2849 = vadd.f32 0.0, %v2848
        %v2850 = vpop.f32.mrb[0].mxu0
        %2851 = vmatprep.mubr.f32.mxu0 0.0
        %2852 = vmatmul.mubr.f32.gmra.mrb[0].mxu0 %v2629
        %v2853 = vpop.f32.mrb[0].mxu0
        %v2854 = vadd.f32 0.0, %v2853
        %v2855 = vpop.f32.mrb[0].mxu0
        %2856 = vmatprep.mubr.f32.mxu0 0.0
        %2857 = vmatmul.mubr.f32.gmra.mrb[0].mxu0 %v2632
        %v2858 = vpop.f32.mrb[0].mxu0
        %v2859 = vadd.f32 0.0, %v2858
        %v2860 = vpop.f32.mrb[0].mxu0
        %2861 = vdwg.mxu0
        %v2862 = vsel %vm2331, %v2704, 0.0
        %v2863 = vsel %vm2331, %v2709, 0.0
        %v2864 = vadd.f32 %v2862, %v2863
        %v2865 = vsel %vm2331, %v2714, 0.0
        %v2866 = vadd.f32 %v2864, %v2865
        %v2867 = vsel %vm2331, %v2719, 0.0
        %v2868 = vadd.f32 %v2866, %v2867
        %v2869 = vsel %vm2331, %v2724, 0.0
        %v2870 = vadd.f32 %v2868, %v2869
        %v2871 = vsel %vm2331, %v2729, 0.0
        %v2872 = vadd.f32 %v2870, %v2871
        %v2873 = vsel %vm2331, %v2734, 0.0
        %v2874 = vadd.f32 %v2872, %v2873
        %v2875 = vsel %vm2331, %v2739, 0.0
        %v2876 = vadd.f32 %v2874, %v2875
        %v2877 = vsel %vm2331, %v2744, 0.0
        %v2878 = vadd.f32 %v2876, %v2877
        %v2879 = vsel %vm2331, %v2749, 0.0
        %v2880 = vadd.f32 %v2878, %v2879
        %v2881 = vsel %vm2331, %v2754, 0.0
        %v2882 = vadd.f32 %v2880, %v2881
        %v2883 = vsel %vm2331, %v2759, 0.0
        %v2884 = vadd.f32 %v2882, %v2883
        %v2885 = vsel %vm2331, %v2764, 0.0
        %v2886 = vadd.f32 %v2884, %v2885
        %v2887 = vsel %vm2331, %v2769, 0.0
        %v2888 = vadd.f32 %v2886, %v2887
        %v2889 = vsel %vm2331, %v2774, 0.0
        %v2890 = vadd.f32 %v2888, %v2889
        %v2891 = vsel %vm2331, %v2779, 0.0
        %v2892 = vadd.f32 %v2890, %v2891
        %v2893 = vsel %vm2331, %v2784, 0.0
        %v2894 = vadd.f32 %v2892, %v2893
        %v2895 = vsel %vm2331, %v2789, 0.0
        %v2896 = vadd.f32 %v2894, %v2895
        %v2897 = vsel %vm2331, %v2794, 0.0
        %v2898 = vadd.f32 %v2896, %v2897
        %v2899 = vsel %vm2331, %v2799, 0.0
        %v2900 = vadd.f32 %v2898, %v2899
        %v2901 = vsel %vm2331, %v2804, 0.0
        %v2902 = vadd.f32 %v2900, %v2901
        %v2903 = vsel %vm2331, %v2809, 0.0
        %v2904 = vadd.f32 %v2902, %v2903
        %v2905 = vsel %vm2331, %v2814, 0.0
        %v2906 = vadd.f32 %v2904, %v2905
        %v2907 = vsel %vm2331, %v2819, 0.0
        %v2908 = vadd.f32 %v2906, %v2907
        %v2909 = vsel %vm2331, %v2824, 0.0
        %v2910 = vadd.f32 %v2908, %v2909
        %v2911 = vsel %vm2331, %v2829, 0.0
        %v2912 = vadd.f32 %v2910, %v2911
        %v2913 = vsel %vm2331, %v2834, 0.0
        %v2914 = vadd.f32 %v2912, %v2913
        %v2915 = vsel %vm2331, %v2839, 0.0
        %v2916 = vadd.f32 %v2914, %v2915
        %v2917 = vsel %vm2331, %v2844, 0.0
        %v2918 = vadd.f32 %v2916, %v2917
        %v2919 = vsel %vm2331, %v2849, 0.0
        %v2920 = vadd.f32 %v2918, %v2919
        %v2921 = vsel %vm2331, %v2854, 0.0
        %v2922 = vadd.f32 %v2920, %v2921
        %v2923 = vsel %vm2331, %v2859, 0.0
        %v2924 = vadd.f32 %v2922, %v2923
        %v2925 = vrot.slane %v2924, 4
        %v2926 = vadd.f32 %v2924, %v2925
        %v2927 = vrot.slane %v2926, 2
        %v2928 = vadd.f32 %v2926, %v2927
        %v2929 = vrot.slane %v2928, 1
        %v2930 = vadd.f32 %v2928, %v2929
        %v2931 = vmul.f32 %v2704, %v2704
        %v2932 = vmul.f32 %v2709, %v2709
        %v2933 = vmul.f32 %v2714, %v2714
        %v2934 = vmul.f32 %v2719, %v2719
        %v2935 = vmul.f32 %v2724, %v2724
        %v2936 = vmul.f32 %v2729, %v2729
        %v2937 = vmul.f32 %v2734, %v2734
        %v2938 = vmul.f32 %v2739, %v2739
        %v2939 = vmul.f32 %v2744, %v2744
        %v2940 = vmul.f32 %v2749, %v2749
        %v2941 = vmul.f32 %v2754, %v2754
        %v2942 = vmul.f32 %v2759, %v2759
        %v2943 = vmul.f32 %v2764, %v2764
        %v2944 = vmul.f32 %v2769, %v2769
        %v2945 = vmul.f32 %v2774, %v2774
        %v2946 = vmul.f32 %v2779, %v2779
        %v2947 = vmul.f32 %v2784, %v2784
        %v2948 = vmul.f32 %v2789, %v2789
        %v2949 = vmul.f32 %v2794, %v2794
        %v2950 = vmul.f32 %v2799, %v2799
        %v2951 = vmul.f32 %v2804, %v2804
        %v2952 = vmul.f32 %v2809, %v2809
        %v2953 = vmul.f32 %v2814, %v2814
        %v2954 = vmul.f32 %v2819, %v2819
        %v2955 = vmul.f32 %v2824, %v2824
        %v2956 = vmul.f32 %v2829, %v2829
        %v2957 = vmul.f32 %v2834, %v2834
        %v2958 = vmul.f32 %v2839, %v2839
        %v2959 = vmul.f32 %v2844, %v2844
        %v2960 = vmul.f32 %v2849, %v2849
        %v2961 = vmul.f32 %v2854, %v2854
        %v2962 = vmul.f32 %v2859, %v2859
        %v2963 = vsel %vm2331, %v2931, 0.0
        %v2964 = vsel %vm2331, %v2932, 0.0
        %v2965 = vadd.f32 %v2963, %v2964
        %v2966 = vsel %vm2331, %v2933, 0.0
        %v2967 = vadd.f32 %v2965, %v2966
        %v2968 = vsel %vm2331, %v2934, 0.0
        %v2969 = vadd.f32 %v2967, %v2968
        %v2970 = vsel %vm2331, %v2935, 0.0
        %v2971 = vadd.f32 %v2969, %v2970
        %v2972 = vsel %vm2331, %v2936, 0.0
        %v2973 = vadd.f32 %v2971, %v2972
        %v2974 = vsel %vm2331, %v2937, 0.0
        %v2975 = vadd.f32 %v2973, %v2974
        %v2976 = vsel %vm2331, %v2938, 0.0
        %v2977 = vadd.f32 %v2975, %v2976
        %v2978 = vsel %vm2331, %v2939, 0.0
        %v2979 = vadd.f32 %v2977, %v2978
        %v2980 = vsel %vm2331, %v2940, 0.0
        %v2981 = vadd.f32 %v2979, %v2980
        %v2982 = vsel %vm2331, %v2941, 0.0
        %v2983 = vadd.f32 %v2981, %v2982
        %v2984 = vsel %vm2331, %v2942, 0.0
        %v2985 = vadd.f32 %v2983, %v2984
        %v2986 = vsel %vm2331, %v2943, 0.0
        %v2987 = vadd.f32 %v2985, %v2986
        %v2988 = vsel %vm2331, %v2944, 0.0
        %v2989 = vadd.f32 %v2987, %v2988
        %v2990 = vsel %vm2331, %v2945, 0.0
        %v2991 = vadd.f32 %v2989, %v2990
        %v2992 = vsel %vm2331, %v2946, 0.0
        %v2993 = vadd.f32 %v2991, %v2992
        %v2994 = vsel %vm2331, %v2947, 0.0
        %v2995 = vadd.f32 %v2993, %v2994
        %v2996 = vsel %vm2331, %v2948, 0.0
        %v2997 = vadd.f32 %v2995, %v2996
        %v2998 = vsel %vm2331, %v2949, 0.0
        %v2999 = vadd.f32 %v2997, %v2998
        %v3000 = vsel %vm2331, %v2950, 0.0
        %v3001 = vadd.f32 %v2999, %v3000
        %v3002 = vsel %vm2331, %v2951, 0.0
        %v3003 = vadd.f32 %v3001, %v3002
        %v3004 = vsel %vm2331, %v2952, 0.0
        %v3005 = vadd.f32 %v3003, %v3004
        %v3006 = vsel %vm2331, %v2953, 0.0
        %v3007 = vadd.f32 %v3005, %v3006
        %v3008 = vsel %vm2331, %v2954, 0.0
        %v3009 = vadd.f32 %v3007, %v3008
        %v3010 = vsel %vm2331, %v2955, 0.0
        %v3011 = vadd.f32 %v3009, %v3010
        %v3012 = vsel %vm2331, %v2956, 0.0
        %v3013 = vadd.f32 %v3011, %v3012
        %v3014 = vsel %vm2331, %v2957, 0.0
        %v3015 = vadd.f32 %v3013, %v3014
        %v3016 = vsel %vm2331, %v2958, 0.0
        %v3017 = vadd.f32 %v3015, %v3016
        %v3018 = vsel %vm2331, %v2959, 0.0
        %v3019 = vadd.f32 %v3017, %v3018
        %v3020 = vsel %vm2331, %v2960, 0.0
        %v3021 = vadd.f32 %v3019, %v3020
        %v3022 = vsel %vm2331, %v2961, 0.0
        %v3023 = vadd.f32 %v3021, %v3022
        %v3024 = vsel %vm2331, %v2962, 0.0
        %v3025 = vadd.f32 %v3023, %v3024
        %v3026 = vrot.slane %v3025, 4
        %v3027 = vadd.f32 %v3025, %v3026
        %v3028 = vrot.slane %v3027, 2
        %v3029 = vadd.f32 %v3027, %v3028
        %v3030 = vrot.slane %v3029, 1
        %v3031 = vadd.f32 %v3029, %v3030
        %3032 = vst.msk [vmem:[%s247] sm:$0xff] %vm2331, %v2704
        %3033 = vst.msk [vmem:[%s247 + $0x8] sm:$0xff] %vm2331, %v2709
        %3034 = vst.msk [vmem:[%s247 + $0x10] sm:$0xff] %vm2331, %v2714
        %3035 = vst.msk [vmem:[%s247 + $0x18] sm:$0xff] %vm2331, %v2719
        %3036 = vst.msk [vmem:[%s247 + $0x20] sm:$0xff] %vm2331, %v2724
        %3037 = vst.msk [vmem:[%s247 + $0x28] sm:$0xff] %vm2331, %v2729
        %3038 = vst.msk [vmem:[%s247 + $0x30] sm:$0xff] %vm2331, %v2734
        %3039 = vst.msk [vmem:[%s247 + $0x38] sm:$0xff] %vm2331, %v2739
        %3040 = vst.msk [vmem:[%s247 + $0x40] sm:$0xff] %vm2331, %v2744
        %3041 = vst.msk [vmem:[%s247 + $0x48] sm:$0xff] %vm2331, %v2749
        %3042 = vst.msk [vmem:[%s247 + $0x50] sm:$0xff] %vm2331, %v2754
        %3043 = vst.msk [vmem:[%s247 + $0x58] sm:$0xff] %vm2331, %v2759
        %3044 = vst.msk [vmem:[%s247 + $0x60] sm:$0xff] %vm2331, %v2764
        %3045 = vst.msk [vmem:[%s247 + $0x68] sm:$0xff] %vm2331, %v2769
        %3046 = vst.msk [vmem:[%s247 + $0x70] sm:$0xff] %vm2331, %v2774
        %3047 = vst.msk [vmem:[%s247 + $0x78] sm:$0xff] %vm2331, %v2779
        %3048 = vst.msk [vmem:[%s247 + $0x80] sm:$0xff] %vm2331, %v2784
        %3049 = vst.msk [vmem:[%s247 + $0x88] sm:$0xff] %vm2331, %v2789
        %3050 = vst.msk [vmem:[%s247 + $0x90] sm:$0xff] %vm2331, %v2794
        %3051 = vst.msk [vmem:[%s247 + $0x98] sm:$0xff] %vm2331, %v2799
        %3052 = vst.msk [vmem:[%s247 + $0xa0] sm:$0xff] %vm2331, %v2804
        %3053 = vst.msk [vmem:[%s247 + $0xa8] sm:$0xff] %vm2331, %v2809
        %3054 = vst.msk [vmem:[%s247 + $0xb0] sm:$0xff] %vm2331, %v2814
        %3055 = vst.msk [vmem:[%s247 + $0xb8] sm:$0xff] %vm2331, %v2819
        %3056 = vst.msk [vmem:[%s247 + $0xc0] sm:$0xff] %vm2331, %v2824
        %3057 = vst.msk [vmem:[%s247 + $0xc8] sm:$0xff] %vm2331, %v2829
        %3058 = vst.msk [vmem:[%s247 + $0xd0] sm:$0xff] %vm2331, %v2834
        %3059 = vst.msk [vmem:[%s247 + $0xd8] sm:$0xff] %vm2331, %v2839
        %3060 = vst.msk [vmem:[%s247 + $0xe0] sm:$0xff] %vm2331, %v2844
        %3061 = vst.msk [vmem:[%s247 + $0xe8] sm:$0xff] %vm2331, %v2849
        %3062 = vst.msk [vmem:[%s247 + $0xf0] sm:$0xff] %vm2331, %v2854
        %3063 = vst.msk [vmem:[%s247 + $0xf8] sm:$0xff] %vm2331, %v2859
        %3064 = vst.msk [vmem:[%s232 + $0x2] sm:$0x1] %vm2534, %v2930
        %3065 = vst.msk [vmem:[%s232 + $0x3] sm:$0x1] %vm2534, %v3031
        %p3066 = scmp.lt.s32.totalorder %s20, 1
        %s3067 = scalar_select %p3066, %s20, 1
        %s3068 = smul.addr %s3067, 32
        %s3069 = smul.addr %s3068, 8
        %s3070 = scalar_lea.vmem %s3, %s3069
        %p3071 = scmp.lt.s32.totalorder %s20, 1
        %s3072 = scalar_select %p3071, %s20, 1
        %s3073 = smul.addr %s3072, 32
        %s3074 = smul.addr %s3073, 8
        %s3075 = scalar_lea.vmem %s4, %s3074
        %s3076 = sand.u32 %s148, 1
        %s3077 = scalar_lea.sflag [#allocation5], %s3076
        %s3078 = sand.u32 %s148, 1
        %s3079 = smul.addr %s3078, 4
        %s3080 = scalar_lea.vmem [#allocation4], %s3079
        // Predicated region
        $region33: #{tpu_custom_call.1} parent=31 // pred_check
          %p3081 = pneg %p106
        $region34: #{tpu_custom_call.1} parent=31 // pred_check_branch
          %3083 = sbr.rel (%p3081) target = $region36
        $region35: #{tpu_custom_call.1} parent=31 // pred_region
          _
        $region36: #{tpu_custom_call.1} parent=31 // pred_fallthru
          _
        // Predicated region
        $region37: #{tpu_custom_call.1} parent=31 // pred_check
          %p3084 = pneg %p132
        $region38: #{tpu_custom_call.1} parent=31 // pred_check_branch
          %3086 = sbr.rel (%p3084) target = $region40
        $region39: #{tpu_custom_call.1} parent=31 // pred_region
          _
        $region40: #{tpu_custom_call.1} parent=31 // pred_fallthru
          _
        // Predicated region
        $region41: #{tpu_custom_call.1} parent=31 // pred_check
          %p3087 = pneg %p158
        $region42: #{tpu_custom_call.1} parent=31 // pred_check_branch
          %3089 = sbr.rel (%p3087) target = $region44
        $region43: #{tpu_custom_call.1} parent=31 // pred_region
          %s3091 = ssub.s32 64, 64
          %3092 = vsyncadd %s3077, %s3091
          %s3093 = smul.addr %s20, 64
          %s3094 = scalar_lea.hbm %s5, %s3093
          %s3096 = sshll.u32 %s3080, 4
          %s3097 = int_to_ptr.vmem [resolvable:$true] %s3096
          %3099 = dma.vmem_to_hbm [thread:$0]  %s3097, 64, %s3094, %s3077
        $region44: #{tpu_custom_call.1} parent=31 // pred_fallthru
          _
      $region32: #{tpu_custom_call.1} parent=5 // pred_fallthru
        _
      %p3100 = scmp.le.s32.totalorder 2, %s15
      // Predicated region
      $region45: #{tpu_custom_call.1} parent=5 // pred_check
        %p3101 = pneg %p3100
      $region46: #{tpu_custom_call.1} parent=5 // pred_check_branch
        %3103 = sbr.rel (%p3101) target = $region48
      $region47: #{tpu_custom_call.1} parent=5 // pred_region
        %s3104 = ssub.s32 %s15, 2
        // Predicated region
        $region49: #{tpu_custom_call.1} parent=47 // pred_check
          %p3105 = pneg %p112
        $region50: #{tpu_custom_call.1} parent=47 // pred_check_branch
          %3107 = sbr.rel (%p3105) target = $region52
        $region51: #{tpu_custom_call.1} parent=47 // pred_region
          %p3108 = scmp.lt.s32.totalorder %s21, 1
          %s3109 = scalar_select %p3108, %s21, 1
          %s3110 = smul.addr %s3109, 32
          %s3111 = smul.addr %s3110, 8
          %s3112 = scalar_lea.vmem %s3, %s3111
        $region52: #{tpu_custom_call.1} parent=47 // pred_fallthru
          _
        // Predicated region
        $region53: #{tpu_custom_call.1} parent=47 // pred_check
          %p3113 = pneg %p138
        $region54: #{tpu_custom_call.1} parent=47 // pred_check_branch
          %3115 = sbr.rel (%p3113) target = $region56
        $region55: #{tpu_custom_call.1} parent=47 // pred_region
          %p3116 = scmp.lt.s32.totalorder %s21, 1
          %s3117 = scalar_select %p3116, %s21, 1
          %s3118 = smul.addr %s3117, 32
          %s3119 = smul.addr %s3118, 8
          %s3120 = scalar_lea.vmem %s4, %s3119
        $region56: #{tpu_custom_call.1} parent=47 // pred_fallthru
          _
        // Predicated region
        $region57: #{tpu_custom_call.1} parent=47 // pred_check
          %p3121 = pneg %p164
        $region58: #{tpu_custom_call.1} parent=47 // pred_check_branch
          %3123 = sbr.rel (%p3121) target = $region60
        $region59: #{tpu_custom_call.1} parent=47 // pred_region
          %s3124 = sand.u32 %s149, 1
          %s3125 = scalar_lea.sflag [#allocation5], %s3124
          %s3126 = sand.u32 %s149, 1
          %s3127 = smul.addr %s3126, 4
          %s3128 = scalar_lea.vmem [#allocation4], %s3127
          %3129 = dma.done %s3125, 64
        $region60: #{tpu_custom_call.1} parent=47 // pred_fallthru
          _
      $region48: #{tpu_custom_call.1} parent=5 // pred_fallthru
        _
    $region6: #{tpu_custom_call.1} parent=1 // loop_footer
      %s19 = sadd.s32 1, %s15
    $region7: #{tpu_custom_call.1} parent=1 // loop_footer_branch
      %14 = sbr.rel target = $region3
    $region8: #{tpu_custom_call.1} parent=1 // loop_exit
      _
    %3130 = vsyncpa [#allocation5], 1
    %s3131 = scalar_lea.sflag [#allocation5], 1
    %3132 = vsyncpa %s3131, 1

</llo_original>
